<compile_context>
chip_gen: v7x
topology: tpu7x:2x2x1
jax: 0.10.0
libtpu: 0.0.40
codegen_flags: <defaults>
</compile_context>

<pallas_src>
import functools

import jax
import jax.numpy as jnp
import numpy as np
from jax.experimental import pallas as pl
from jax.experimental.pallas import tpu as pltpu

_LANE = 128


# ------------------------------ small helpers ------------------------------ #

def _cdiv(a, b):
    return -(-a // b)


def _round_up(x, m):
    return _cdiv(x, m) * m


def _pad_last(a, target):
    return jnp.pad(a, [(0, 0)] * (a.ndim - 1) + [(0, target - a.shape[-1])])


def _hw_plan():
    """Per-generation (rows-per-grid-step cap, scoped VMEM limit)."""
    try:
        vmem = int(pltpu.get_tpu_info().vmem_capacity_bytes)
    except Exception:
        vmem = 64 << 20
    if vmem >= (100 << 20):          # v5e / v6e: 128 MiB VMEM -> bigger tiles
        return 1024, 80 << 20
    return 512, 32 << 20             # v7x: 64 MiB per TensorCore -> modest tiles


def _plan_rows(M, unit, cap_rows):
    """Balanced M tiling: m_tile a multiple of `unit`, nt*m_tile >= M, tile <= cap,
    and >=2 grid steps whenever M is big enough (keeps v7x's second core busy)."""
    cap = max(unit, (cap_rows // unit) * unit)
    nt = _cdiv(M, cap)
    if nt == 1 and M > 2 * unit:
        nt = 2
    mt = _cdiv(_cdiv(M, nt), unit) * unit
    nt = _cdiv(M, mt)
    return mt, nt


def _interior_mask(mp, n, hout, wout, shift):
    """[mp, 1] f32 mask: 1 where padded-layout row (r - shift) is a real interior
    output pixel, 0 on the zero-padding ring / out-of-range rows (static, numpy)."""
    hp, wp = hout + 2, wout + 2
    r = np.arange(mp)
    p = r - shift
    q = np.mod(p, hp * wp)
    i, j = q // wp, q % wp
    ok = (p >= 0) & (p < n * hp * wp) & (i >= 1) & (i <= hout) & (j >= 1) & (j <= wout)
    return jnp.asarray(ok.astype(np.float32)[:, None])


# ----------------------------- Pallas kernels ------------------------------ #

def _matmul_bn_kernel(p_ref, w_ref, b_ref, o_ref, *, relu):
    # (pre-ReLU'd bf16) patches @ scale-folded weights -> + folded-BN bias (-> ReLU).
    y = jnp.dot(p_ref[...], w_ref[...], preferred_element_type=jnp.float32) + b_ref[...]
    if relu:
        y = jnp.maximum(y, 0.0)
    o_ref[...] = y.astype(o_ref.dtype)


def _direct3x3_kernel(x_ref, xh_ref, w_ref, b_ref, m_ref, o_ref, xa_ref, *, offsets, relu):
    # Direct stride-1 3x3 conv on a flat, spatially pre-padded activation: assemble
    # the row tile + halo once in VMEM, then accumulate the 9 tap matmuls from static
    # row-offset slices.  Mask zeroes the padding-ring rows (they double as the next
    # conv's zero padding).
    mt, cin = x_ref.shape
    hb = xh_ref.shape[0]
    xa_ref[pl.ds(0, mt), :] = x_ref[...]
    xa_ref[pl.ds(mt, hb), :] = xh_ref[...]
    acc = jnp.zeros(o_ref.shape, jnp.float32)
    for t, off in enumerate(offsets):
        acc = acc + jnp.dot(xa_ref[pl.ds(off, mt), :],
                            w_ref[pl.ds(t * cin, cin), :],
                            preferred_element_type=jnp.float32)
    y = acc + b_ref[...]
    if relu:
        y = jnp.maximum(y, 0.0)
    o_ref[...] = (y * m_ref[...]).astype(o_ref.dtype)


# --------------------------- gridded conv wrappers -------------------------- #

def _im2col(x_nhwc, kh, kw, stride, pad):
    """im2col gather (pure indexing). Returns ([M, kh*kw*C], Ho, Wo).  Used only for
    strided / 1x1 convs where the expansion is <= 2.25x."""
    N, H, W, C = x_nhwc.shape
    xp = jnp.pad(x_nhwc, ((0, 0), (pad, pad), (pad, pad), (0, 0))) if pad else x_nhwc
    Ho = (H + 2 * pad - kh) // stride + 1
    Wo = (W + 2 * pad - kw) // stride + 1
    cols = []
    for i in range(kh):
        for j in range(kw):
            cols.append(xp[:, i:i + stride * Ho:stride, j:j + stride * Wo:stride, :])
    p = jnp.concatenate(cols, axis=-1)
    return p.reshape(N * Ho * Wo, kh * kw * C), Ho, Wo


def _conv_matmul(x_nhwc_bf16, w_hwio, scale, bias, *, stride, pad, relu_out, out_dtype,
                 cpad, cap_rows, vmem_limit):
    """Conv as one gridded im2col matmul with a folded-BN (+optional ReLU) epilogue."""
    kh, kw, cin, cout = w_hwio.shape
    w2d = _pad_last((w_hwio * scale.reshape(1, 1, 1, cout))       # fold scale in f32
                    .reshape(kh * kw * cin, cout), cpad).astype(jnp.bfloat16)
    b2d = _pad_last(bias.reshape(1, cout).astype(jnp.float32), cpad)
    patches, Ho, Wo = _im2col(x_nhwc_bf16, kh, kw, stride, pad)
    M, K = patches.shape
    mt, nt = _plan_rows(M, 16, cap_rows)
    mp = nt * mt
    if mp != M:
        patches = jnp.pad(patches, ((0, mp - M), (0, 0)))
    cost = pl.CostEstimate(
        flops=2 * mp * K * cpad, transcendentals=0,
        bytes_accessed=int(mp * K * 2 + K * cpad * 2 + cpad * 4
                           + mp * cpad * jnp.dtype(out_dtype).itemsize))
    out = pl.pallas_call(
        functools.partial(_matmul_bn_kernel, relu=relu_out),
        out_shape=jax.ShapeDtypeStruct((mp, cpad), out_dtype),
        grid=(nt,),
        in_specs=[
            pl.BlockSpec((mt, K), lambda i: (i, 0)),        # streamed patch tile
            # TODO(synk): mark the two grid-invariant operands below with
            # pipeline_mode=pl.Buffered(1) (and Buffered(3) on the patch stream) once
            # exercised on this jax version -- saves a weight copy on v7x.
            pl.BlockSpec((K, cpad), lambda i: (0, 0)),      # folded weights (resident)
            pl.BlockSpec((1, cpad), lambda i: (0, 0)),      # folded BN bias (resident)
        ],
        out_specs=pl.BlockSpec((mt, cpad), lambda i: (i, 0)),
        compiler_params=pltpu.CompilerParams(
            dimension_semantics=("parallel",), vmem_limit_bytes=vmem_limit),
        cost_estimate=cost,
    )(patches, w2d, b2d)
    return out[:M], Ho, Wo


def _conv_direct3x3(x_ext, w_hwio, scale, bias, mask, *, wp, mt, hblk, nt,
                    relu_out, out_dtype, cpad, vmem_limit):
    """Stride-1 3x3 conv (pad=1) + folded BN (+optional fused ReLU) without HBM im2col.

    x_ext: [>= nt*mt + hblk, cin] bf16 flat activation, spatially pre-padded and
           row-shifted by the caller so that output row r reads rows r + di*Wp + dj.
    Returns [nt*mt, cpad]; padding-ring rows are zeroed via `mask`.
    """
    rows, cin = x_ext.shape
    mp = nt * mt
    assert x_ext.dtype == jnp.bfloat16
    assert rows >= mp + hblk and mt % hblk == 0 and 2 * wp + 2 <= hblk
    assert mask.shape == (mp, 1)
    kh, kw, wc_in, cout = w_hwio.shape
    assert (kh, kw) == (3, 3) and wc_in == cin
    w2d = _pad_last((w_hwio * scale.reshape(1, 1, 1, cout))       # fold scale in f32
                    .reshape(9 * cin, cout), cpad).astype(jnp.bfloat16)
    b2d = _pad_last(bias.reshape(1, cout).astype(jnp.float32), cpad)
    offsets = tuple(di * wp + dj for di in range(3) for dj in range(3))
    nh = mt // hblk
    cost = pl.CostEstimate(
        flops=2 * mp * 9 * cin * cpad, transcendentals=0,
        bytes_accessed=int((mp + hblk) * cin * 2 + 9 * cin * cpad * 2
                           + mp * 4 + mp * cpad * jnp.dtype(out_dtype).itemsize))
    return pl.pallas_call(
        functools.partial(_direct3x3_kernel, offsets=offsets, relu=relu_out),
        out_shape=jax.ShapeDtypeStruct((mp, cpad), out_dtype),
        grid=(nt,),
        in_specs=[
            pl.BlockSpec((mt, cin), lambda i: (i, 0)),              # streamed row tile
            pl.BlockSpec((hblk, cin), lambda i: ((i + 1) * nh, 0)),  # halo rows (next tile head)
            # TODO(synk): pipeline_mode=pl.Buffered(1) on the grid-invariant operands
            # below would drop their second VMEM buffer (v7x headroom).
            pl.BlockSpec((9 * cin, cpad), lambda i: (0, 0)),        # folded weights (resident)
            pl.BlockSpec((1, cpad), lambda i: (0, 0)),              # folded BN bias (resident)
            pl.BlockSpec((mt, 1), lambda i: (i, 0)),                # interior mask rows
        ],
        out_specs=pl.BlockSpec((mt, cpad), lambda i: (i, 0)),
        scratch_shapes=[pltpu.VMEM((mt + hblk, cin), jnp.bfloat16)],
        compiler_params=pltpu.CompilerParams(
            dimension_semantics=("parallel",), vmem_limit_bytes=vmem_limit),
        cost_estimate=cost,
    )(x_ext, x_ext, w2d, b2d, mask)


# ------------------------------- forward pass ------------------------------- #

def resnet_basicblock_forward(x_nchw, params, stride):
    """Forward of ResNetBasicblock. Input/output NCHW float32."""
    assert stride in (1, 2)
    cap_rows, vmem_limit = _hw_plan()

    # TODO(synk): NCHW<->NHWC transposes, spatial zero-pads and the final
    # un-pad + residual add stay as XLA glue around the kernels.
    x = jnp.transpose(x_nchw, (0, 2, 3, 1)).astype(jnp.float32)     # NCHW -> NHWC
    N, H, W, cin = x.shape
    cout = params["wa"].shape[-1]
    cpad = _round_up(cout, _LANE)
    if stride == 2:
        assert H % 2 == 0 and W % 2 == 0, "stride-2 block requires even H, W"
    Ho, Wo = (H - 1) // stride + 1, (W - 1) // stride + 1

    # ReLU + bf16 cast once (feeds conv_a and the ReLUConvBN downsample).
    xr = jnp.maximum(x, 0.0).astype(jnp.bfloat16)

    # ---- plan conv_b (always a stride-1 3x3 on the (Ho, Wo) grid) ----
    Hp, Wp = Ho + 2, Wo + 2
    Mb = N * Hp * Wp
    halo = 2 * Wp + 2
    hblk = _round_up(halo, 16)
    mt, nt_b = _plan_rows(Mb, hblk, cap_rows)
    mp_b = nt_b * mt
    xb_rows = mp_b + hblk                       # rows conv_b's input array must provide

    # ---- conv_a: ReLUConvBN(inplanes, planes, 3, stride, 1) ----
    if stride == 1:
        # Direct 3x3; output is written in conv_b's shifted, spatially-padded flat
        # layout (zero ring via mask), bf16, ReLU'd -> no HBM repack between convs.
        shift_a = Wp + 1
        nt_a = _cdiv(xb_rows, mt)
        mp_a = nt_a * mt
        head_a = shift_a + Wp + 1               # = halo
        xpad_a = jnp.pad(xr, ((0, 0), (1, 1), (1, 1), (0, 0))).reshape(Mb, cin)
        Xa = jnp.pad(xpad_a, ((head_a, mp_a + hblk - head_a - Mb), (0, 0)))
        mask_a = _interior_mask(mp_a, N, Ho, Wo, shift_a)
        Xb = _conv_direct3x3(Xa, params["wa"], params["scale_a"], params["bias_a"],
                             mask_a, wp=Wp, mt=mt, hblk=hblk, nt=nt_a,
                             relu_out=True, out_dtype=jnp.bfloat16, cpad=cpad,
                             vmem_limit=vmem_limit)
    else:
        # Stride-2 3x3 via im2col matmul (only 2.25x patch expansion after the stride).
        a_flat, _, _ = _conv_matmul(xr, params["wa"], params["scale_a"], params["bias_a"],
                                    stride=2, pad=1, relu_out=True,
                                    out_dtype=jnp.bfloat16, cpad=cpad,
                                    cap_rows=cap_rows, vmem_limit=vmem_limit)
        a_sp = jnp.pad(a_flat.reshape(N, Ho, Wo, cpad),
                       ((0, 0), (1, 1), (1, 1), (0, 0))).reshape(Mb, cpad)
        head_b = Wp + 1
        Xb = jnp.pad(a_sp, ((head_b, xb_rows - head_b - Mb), (0, 0)))

    # ---- conv_b: ReLUConvBN(planes, planes, 3, 1, 1), direct kernel ----
    # Keep the lane-padded channels from conv_a; pad wb's input-channel dim instead.
    wb_k = jnp.pad(params["wb"], ((0, 0), (0, 0), (0, cpad - cout), (0, 0)))
    mask_b = _interior_mask(mp_b, N, Ho, Wo, 0)
    b_out = _conv_direct3x3(Xb, wb_k, params["scale_b"], params["bias_b"], mask_b,
                            wp=Wp, mt=mt, hblk=hblk, nt=nt_b,
                            relu_out=False, out_dtype=jnp.bfloat16, cpad=cpad,
                            vmem_limit=vmem_limit)
    conv_b_nhwc = b_out[:Mb].reshape(N, Hp, Wp, cpad)[:, 1:Ho + 1, 1:Wo + 1, :cout]

    # ---- residual path (XLA add, fused with the final un-pad slice / transpose) ----
    if stride == 2:
        # AvgPool2d(2,2) + 1x1 conv == one 2x2/stride-2 conv with W/4 at every tap
        # (exact for even H, W; no ReLU / BN in this branch).
        w22 = jnp.broadcast_to(params["w_ds"].reshape(1, 1, cin, cout) * 0.25,
                               (2, 2, cin, cout))
        res_flat, _, _ = _conv_matmul(x.astype(jnp.bfloat16), w22,
                                      jnp.ones((cout,), jnp.float32),
                                      jnp.zeros((cout,), jnp.float32),
                                      stride=2, pad=0, relu_out=False,
                                      out_dtype=jnp.float32, cpad=cpad,
                                      cap_rows=cap_rows, vmem_limit=vmem_limit)
        residual = res_flat.reshape(N, Ho, Wo, cpad)[..., :cout]
    elif cin != cout:
        # downsample = ReLUConvBN(inplanes, planes, 1, 1, 0): 1x1 conv, no expansion.
        res_flat, _, _ = _conv_matmul(xr, params["w_ds"], params["scale_ds"],
                                      params["bias_ds"], stride=1, pad=0,
                                      relu_out=False, out_dtype=jnp.float32, cpad=cpad,
                                      cap_rows=cap_rows, vmem_limit=vmem_limit)
        residual = res_flat.reshape(N, Ho, Wo, cpad)[..., :cout]
    else:
        residual = x                                    # identity residual (f32)

    out = residual + conv_b_nhwc.astype(jnp.float32)
    return jnp.transpose(out, (0, 3, 1, 2))             # NHWC -> NCHW


# ------------------------------ params / reference -------------------------- #

def init_params(key, inplanes, planes, stride):
    """Deterministic init (random conv weights, BN at fresh PyTorch defaults, folded)."""
    eps = 1e-5
    k = jax.random.split(key, 3)
    scale = jnp.full((planes,), 1.0 / jnp.sqrt(1.0 + eps), jnp.float32)
    params = {
        "wa": 0.1 * jax.random.normal(k[0], (3, 3, inplanes, planes), jnp.float32),
        "wb": 0.1 * jax.random.normal(k[1], (3, 3, planes, planes), jnp.float32),
        "scale_a": scale, "bias_a": jnp.zeros((planes,), jnp.float32),
        "scale_b": scale, "bias_b": jnp.zeros((planes,), jnp.float32),
    }
    if stride == 2:
        params["w_ds"] = 0.1 * jax.random.normal(k[2], (1, 1, inplanes, planes), jnp.float32)
    elif inplanes != planes:
        params["w_ds"] = 0.1 * jax.random.normal(k[2], (1, 1, inplanes, planes), jnp.float32)
        params["scale_ds"] = scale
        params["bias_ds"] = jnp.zeros((planes,), jnp.float32)
    return params


def _reference_forward(x_nchw, params, stride):
    """Pure-JAX f32 reference mirroring the PyTorch module (self-check only)."""
    dn = ("NHWC", "HWIO", "NHWC")
    hi = jax.lax.Precision.HIGHEST

    def conv(h, w, s, p):
        return jax.lax.conv_general_dilated(h, w, (s, s), [(p, p), (p, p)],
                                            dimension_numbers=dn, precision=hi)

    def relu_conv_bn(h, w, scale, bias, s, p):
        return conv(jnp.maximum(h, 0.0), w, s, p) * scale + bias

    x = jnp.transpose(x_nchw, (0, 2, 3, 1)).astype(jnp.float32)
    a = relu_conv_bn(x, params["wa"], params["scale_a"], params["bias_a"], stride, 1)
    b = relu_conv_bn(a, params["wb"], params["scale_b"], params["bias_b"], 1, 1)
    if stride == 2:
        N, H, W, C = x.shape
        pooled = x.reshape(N, H // 2, 2, W // 2, 2, C).mean(axis=(2, 4))
        res = conv(pooled, params["w_ds"], 1, 0)
    elif "scale_ds" in params:
        res = relu_conv_bn(x, params["w_ds"], params["scale_ds"], params["bias_ds"], 1, 0)
    else:
        res = x
    return jnp.transpose(res + b, (0, 3, 1, 2))


if __name__ == "__main__":
    key = jax.random.PRNGKey(0)
    k1, k2, k3, k4 = jax.random.split(key, 4)
    fwd = jax.jit(resnet_basicblock_forward, static_argnames=("stride",))

    # Case 1: stride-2 block (im2col conv_a, fused AvgPool+1x1 downsample, direct conv_b).
    x2 = jax.random.normal(k1, (2, 4, 16, 16), jnp.float32)          # NCHW
    p2 = init_params(k2, 4, 8, 2)
    out2 = fwd(x2, p2, stride=2)
    jax.block_until_ready(out2)
    assert out2.shape == (2, 8, 8, 8)
    ref2 = _reference_forward(x2, p2, 2)
    assert float(jnp.max(jnp.abs(out2 - ref2))) < 1e-1               # bf16 path vs f32 ref

    # Case 2: stride-1 identity block (chained direct 3x3 convs, no HBM im2col at all).
    x1 = jax.random.normal(k3, (2, 8, 16, 16), jnp.float32)
    p1 = init_params(k4, 8, 8, 1)
    out1 = fwd(x1, p1, stride=1)
    jax.block_until_ready(out1)
    assert out1.shape == (2, 8, 16, 16)
    ref1 = _reference_forward(x1, p1, 1)
    assert float(jnp.max(jnp.abs(out1 - ref1))) < 1e-1

    print("KERNEL_OK")
</pallas_src>

<mosaic_0001>
module attributes {stable_mosaic.version = 11 : i64} {
  func.func @_matmul_bn_kernel(%arg0: i32, %arg1: memref<64x36xbf16, #tpu.memory_space<vmem>>, %arg2: memref<36x128xbf16, #tpu.memory_space<vmem>>, %arg3: memref<1x128xf32, #tpu.memory_space<vmem>>, %arg4: memref<64x128xbf16, #tpu.memory_space<vmem>>) attributes {dimension_semantics = [#tpu.dimension_semantics<parallel>], iteration_bounds = array<i64: 2>, scalar_prefetch = 0 : i64, scratch_operands = 0 : i64, tpu.core_type = #tpu.core_type<tc>, window_params = [{transform_indices = @transform_0, window_bounds = array<i64: 64, 36>}, {pipeline_mode = #tpu.pipeline_mode<synchronous>, transform_indices = @transform_1, window_bounds = array<i64: 36, 128>}, {pipeline_mode = #tpu.pipeline_mode<synchronous>, transform_indices = @transform_2, window_bounds = array<i64: 1, 128>}, {transform_indices = @transform_3, window_bounds = array<i64: 64, 128>}]} {
    %c0 = arith.constant 0 : index
    %c0_0 = arith.constant 0 : index
    %0 = vector.load %arg1[%c0, %c0_0] : memref<64x36xbf16, #tpu.memory_space<vmem>>, vector<64x36xbf16>
    %c0_1 = arith.constant 0 : index
    %c0_2 = arith.constant 0 : index
    %1 = vector.load %arg2[%c0_1, %c0_2] : memref<36x128xbf16, #tpu.memory_space<vmem>>, vector<36x128xbf16>
    %cst = arith.constant dense<0.000000e+00> : vector<64x128xf32>
    %2 = tpu.matmul %0, %1, %cst {dimension_numbers = #tpu.dot_dimension_numbers<[1], [0], [0], [1], [0, 0, 1, 1], [], []>} : vector<64x36xbf16>, vector<36x128xbf16>, vector<64x128xf32> -> vector<64x128xf32>
    %c0_3 = arith.constant 0 : index
    %c0_4 = arith.constant 0 : index
    %3 = vector.load %arg3[%c0_3, %c0_4] : memref<1x128xf32, #tpu.memory_space<vmem>>, vector<1x128xf32>
    %4 = vector.broadcast %3 : vector<1x128xf32> to vector<64x128xf32>
    %5 = arith.addf %2, %4 : vector<64x128xf32>
    %cst_5 = arith.constant 0.000000e+00 : f32
    %6 = vector.broadcast %cst_5 : f32 to vector<64x128xf32>
    %7 = arith.maximumf %5, %6 : vector<64x128xf32>
    %8 = arith.truncf %7 : vector<64x128xf32> to vector<64x128xbf16>
    %c0_6 = arith.constant 0 : index
    %c0_7 = arith.constant 0 : index
    %9 = vector.load %arg4[%c0_6, %c0_7] : memref<64x128xbf16, #tpu.memory_space<vmem>>, vector<64x128xbf16>
    tpu.vector_store %arg4[%c0_6, %c0_7], %8 {strides = array<i32>} : memref<64x128xbf16, #tpu.memory_space<vmem>>, vector<64x128xbf16>,
    return
  }
  func.func @transform_0(%arg0: i32) -> (i32, i32) {
    %c0_i32 = arith.constant 0 : i32
    %c0_i32_0 = arith.constant 0 : i32
    return %arg0, %c0_i32 : i32, i32
  }
  func.func @transform_1(%arg0: i32) -> (i32, i32) {
    %c0_i32 = arith.constant 0 : i32
    %c0_i32_0 = arith.constant 0 : i32
    %c0_i32_1 = arith.constant 0 : i32
    return %c0_i32, %c0_i32_0 : i32, i32
  }
  func.func @transform_2(%arg0: i32) -> (i32, i32) {
    %c0_i32 = arith.constant 0 : i32
    %c0_i32_0 = arith.constant 0 : i32
    %c0_i32_1 = arith.constant 0 : i32
    return %c0_i32, %c0_i32_0 : i32, i32
  }
  func.func @transform_3(%arg0: i32) -> (i32, i32) {
    %c0_i32 = arith.constant 0 : i32
    %c0_i32_0 = arith.constant 0 : i32
    return %arg0, %c0_i32 : i32, i32
  }
}

module attributes {stable_mosaic.version = 11 : i64} {
  func.func @_direct3x3_kernel(%arg0: i32, %arg1: memref<128x128xbf16, #tpu.memory_space<vmem>>, %arg2: memref<32x128xbf16, #tpu.memory_space<vmem>>, %arg3: memref<1152x128xbf16, #tpu.memory_space<vmem>>, %arg4: memref<1x128xf32, #tpu.memory_space<vmem>>, %arg5: memref<128x1xf32, #tpu.memory_space<vmem>>, %arg6: memref<128x128xbf16, #tpu.memory_space<vmem>>, %arg7: memref<160x128xbf16, #tpu.memory_space<vmem>>) attributes {dimension_semantics = [#tpu.dimension_semantics<parallel>], iteration_bounds = array<i64: 2>, scalar_prefetch = 0 : i64, scratch_operands = 1 : i64, tpu.core_type = #tpu.core_type<tc>, window_params = [{transform_indices = @transform_0, window_bounds = array<i64: 128, 128>}, {transform_indices = @transform_1, window_bounds = array<i64: 32, 128>}, {pipeline_mode = #tpu.pipeline_mode<synchronous>, transform_indices = @transform_2, window_bounds = array<i64: 1152, 128>}, {pipeline_mode = #tpu.pipeline_mode<synchronous>, transform_indices = @transform_3, window_bounds = array<i64: 1, 128>}, {transform_indices = @transform_4, window_bounds = array<i64: 128, 1>}, {transform_indices = @transform_5, window_bounds = array<i64: 128, 128>}]} {
    %c0 = arith.constant 0 : index
    %c0_0 = arith.constant 0 : index
    %0 = vector.load %arg1[%c0, %c0_0] : memref<128x128xbf16, #tpu.memory_space<vmem>>, vector<128x128xbf16>
    %c0_1 = arith.constant 0 : index
    %c0_2 = arith.constant 0 : index
    %1 = vector.load %arg7[%c0_1, %c0_2] : memref<160x128xbf16, #tpu.memory_space<vmem>>, vector<128x128xbf16>
    tpu.vector_store %arg7[%c0_1, %c0_2], %0 {strides = array<i32>} : memref<160x128xbf16, #tpu.memory_space<vmem>>, vector<128x128xbf16>,
    %c0_3 = arith.constant 0 : index
    %c0_4 = arith.constant 0 : index
    %2 = vector.load %arg2[%c0_3, %c0_4] : memref<32x128xbf16, #tpu.memory_space<vmem>>, vector<32x128xbf16>
    %c128 = arith.constant 128 : index
    %c0_5 = arith.constant 0 : index
    %3 = vector.load %arg7[%c128, %c0_5] : memref<160x128xbf16, #tpu.memory_space<vmem>>, vector<32x128xbf16>
    tpu.vector_store %arg7[%c128, %c0_5], %2 {strides = array<i32>} : memref<160x128xbf16, #tpu.memory_space<vmem>>, vector<32x128xbf16>,
    %cst = arith.constant 0.000000e+00 : f32
    %4 = vector.broadcast %cst : f32 to vector<128x128xf32>
    %c0_6 = arith.constant 0 : index
    %c0_7 = arith.constant 0 : index
    %5 = vector.load %arg7[%c0_6, %c0_7] : memref<160x128xbf16, #tpu.memory_space<vmem>>, vector<128x128xbf16>
    %c0_8 = arith.constant 0 : index
    %c0_9 = arith.constant 0 : index
    %6 = vector.load %arg3[%c0_8, %c0_9] : memref<1152x128xbf16, #tpu.memory_space<vmem>>, vector<128x128xbf16>
    %cst_10 = arith.constant dense<0.000000e+00> : vector<128x128xf32>
    %7 = tpu.matmul %5, %6, %cst_10 {dimension_numbers = #tpu.dot_dimension_numbers<[1], [0], [0], [1], [0, 0, 1, 1], [], []>} : vector<128x128xbf16>, vector<128x128xbf16>, vector<128x128xf32> -> vector<128x128xf32>
    %8 = arith.addf %4, %7 : vector<128x128xf32>
    %c1 = arith.constant 1 : index
    %c0_11 = arith.constant 0 : index
    %9 = vector.load %arg7[%c1, %c0_11] : memref<160x128xbf16, #tpu.memory_space<vmem>>, vector<128x128xbf16>
    %c128_12 = arith.constant 128 : index
    %c0_13 = arith.constant 0 : index
    %10 = vector.load %arg3[%c128_12, %c0_13] : memref<1152x128xbf16, #tpu.memory_space<vmem>>, vector<128x128xbf16>
    %cst_14 = arith.constant dense<0.000000e+00> : vector<128x128xf32>
    %11 = tpu.matmul %9, %10, %cst_14 {dimension_numbers = #tpu.dot_dimension_numbers<[1], [0], [0], [1], [0, 0, 1, 1], [], []>} : vector<128x128xbf16>, vector<128x128xbf16>, vector<128x128xf32> -> vector<128x128xf32>
    %12 = arith.addf %8, %11 : vector<128x128xf32>
    %c2 = arith.constant 2 : index
    %c0_15 = arith.constant 0 : index
    %13 = vector.load %arg7[%c2, %c0_15] : memref<160x128xbf16, #tpu.memory_space<vmem>>, vector<128x128xbf16>
    %c256 = arith.constant 256 : index
    %c0_16 = arith.constant 0 : index
    %14 = vector.load %arg3[%c256, %c0_16] : memref<1152x128xbf16, #tpu.memory_space<vmem>>, vector<128x128xbf16>
    %cst_17 = arith.constant dense<0.000000e+00> : vector<128x128xf32>
    %15 = tpu.matmul %13, %14, %cst_17 {dimension_numbers = #tpu.dot_dimension_numbers<[1], [0], [0], [1], [0, 0, 1, 1], [], []>} : vector<128x128xbf16>, vector<128x128xbf16>, vector<128x128xf32> -> vector<128x128xf32>
    %16 = arith.addf %12, %15 : vector<128x128xf32>
    %c10 = arith.constant 10 : index
    %c0_18 = arith.constant 0 : index
    %17 = vector.load %arg7[%c10, %c0_18] : memref<160x128xbf16, #tpu.memory_space<vmem>>, vector<128x128xbf16>
    %c384 = arith.constant 384 : index
    %c0_19 = arith.constant 0 : index
    %18 = vector.load %arg3[%c384, %c0_19] : memref<1152x128xbf16, #tpu.memory_space<vmem>>, vector<128x128xbf16>
    %cst_20 = arith.constant dense<0.000000e+00> : vector<128x128xf32>
    %19 = tpu.matmul %17, %18, %cst_20 {dimension_numbers = #tpu.dot_dimension_numbers<[1], [0], [0], [1], [0, 0, 1, 1], [], []>} : vector<128x128xbf16>, vector<128x128xbf16>, vector<128x128xf32> -> vector<128x128xf32>
    %20 = arith.addf %16, %19 : vector<128x128xf32>
    %c11 = arith.constant 11 : index
    %c0_21 = arith.constant 0 : index
    %21 = vector.load %arg7[%c11, %c0_21] : memref<160x128xbf16, #tpu.memory_space<vmem>>, vector<128x128xbf16>
    %c512 = arith.constant 512 : index
    %c0_22 = arith.constant 0 : index
    %22 = vector.load %arg3[%c512, %c0_22] : memref<1152x128xbf16, #tpu.memory_space<vmem>>, vector<128x128xbf16>
    %cst_23 = arith.constant dense<0.000000e+00> : vector<128x128xf32>
    %23 = tpu.matmul %21, %22, %cst_23 {dimension_numbers = #tpu.dot_dimension_numbers<[1], [0], [0], [1], [0, 0, 1, 1], [], []>} : vector<128x128xbf16>, vector<128x128xbf16>, vector<128x128xf32> -> vector<128x128xf32>
    %24 = arith.addf %20, %23 : vector<128x128xf32>
    %c12 = arith.constant 12 : index
    %c0_24 = arith.constant 0 : index
    %25 = vector.load %arg7[%c12, %c0_24] : memref<160x128xbf16, #tpu.memory_space<vmem>>, vector<128x128xbf16>
    %c640 = arith.constant 640 : index
    %c0_25 = arith.constant 0 : index
    %26 = vector.load %arg3[%c640, %c0_25] : memref<1152x128xbf16, #tpu.memory_space<vmem>>, vector<128x128xbf16>
    %cst_26 = arith.constant dense<0.000000e+00> : vector<128x128xf32>
    %27 = tpu.matmul %25, %26, %cst_26 {dimension_numbers = #tpu.dot_dimension_numbers<[1], [0], [0], [1], [0, 0, 1, 1], [], []>} : vector<128x128xbf16>, vector<128x128xbf16>, vector<128x128xf32> -> vector<128x128xf32>
    %28 = arith.addf %24, %27 : vector<128x128xf32>
    %c20 = arith.constant 20 : index
    %c0_27 = arith.constant 0 : index
    %29 = vector.load %arg7[%c20, %c0_27] : memref<160x128xbf16, #tpu.memory_space<vmem>>, vector<128x128xbf16>
    %c768 = arith.constant 768 : index
    %c0_28 = arith.constant 0 : index
    %30 = vector.load %arg3[%c768, %c0_28] : memref<1152x128xbf16, #tpu.memory_space<vmem>>, vector<128x128xbf16>
    %cst_29 = arith.constant dense<0.000000e+00> : vector<128x128xf32>
    %31 = tpu.matmul %29, %30, %cst_29 {dimension_numbers = #tpu.dot_dimension_numbers<[1], [0], [0], [1], [0, 0, 1, 1], [], []>} : vector<128x128xbf16>, vector<128x128xbf16>, vector<128x128xf32> -> vector<128x128xf32>
    %32 = arith.addf %28, %31 : vector<128x128xf32>
    %c21 = arith.constant 21 : index
    %c0_30 = arith.constant 0 : index
    %33 = vector.load %arg7[%c21, %c0_30] : memref<160x128xbf16, #tpu.memory_space<vmem>>, vector<128x128xbf16>
    %c896 = arith.constant 896 : index
    %c0_31 = arith.constant 0 : index
    %34 = vector.load %arg3[%c896, %c0_31] : memref<1152x128xbf16, #tpu.memory_space<vmem>>, vector<128x128xbf16>
    %cst_32 = arith.constant dense<0.000000e+00> : vector<128x128xf32>
    %35 = tpu.matmul %33, %34, %cst_32 {dimension_numbers = #tpu.dot_dimension_numbers<[1], [0], [0], [1], [0, 0, 1, 1], [], []>} : vector<128x128xbf16>, vector<128x128xbf16>, vector<128x128xf32> -> vector<128x128xf32>
    %36 = arith.addf %32, %35 : vector<128x128xf32>
    %c22 = arith.constant 22 : index
    %c0_33 = arith.constant 0 : index
    %37 = vector.load %arg7[%c22, %c0_33] : memref<160x128xbf16, #tpu.memory_space<vmem>>, vector<128x128xbf16>
    %c1024 = arith.constant 1024 : index
    %c0_34 = arith.constant 0 : index
    %38 = vector.load %arg3[%c1024, %c0_34] : memref<1152x128xbf16, #tpu.memory_space<vmem>>, vector<128x128xbf16>
    %cst_35 = arith.constant dense<0.000000e+00> : vector<128x128xf32>
    %39 = tpu.matmul %37, %38, %cst_35 {dimension_numbers = #tpu.dot_dimension_numbers<[1], [0], [0], [1], [0, 0, 1, 1], [], []>} : vector<128x128xbf16>, vector<128x128xbf16>, vector<128x128xf32> -> vector<128x128xf32>
    %40 = arith.addf %36, %39 : vector<128x128xf32>
    %c0_36 = arith.constant 0 : index
    %c0_37 = arith.constant 0 : index
    %41 = vector.load %arg4[%c0_36, %c0_37] : memref<1x128xf32, #tpu.memory_space<vmem>>, vector<1x128xf32>
    %42 = vector.broadcast %41 : vector<1x128xf32> to vector<128x128xf32>
    %43 = arith.addf %40, %42 : vector<128x128xf32>
    %c0_38 = arith.constant 0 : index
    %c0_39 = arith.constant 0 : index
    %44 = vector.load %arg5[%c0_38, %c0_39] : memref<128x1xf32, #tpu.memory_space<vmem>>, vector<128x1xf32>
    %45 = vector.broadcast %44 : vector<128x1xf32> to vector<128x128xf32>
    %46 = arith.mulf %43, %45 : vector<128x128xf32>
    %47 = arith.truncf %46 : vector<128x128xf32> to vector<128x128xbf16>
    %c0_40 = arith.constant 0 : index
    %c0_41 = arith.constant 0 : index
    %48 = vector.load %arg6[%c0_40, %c0_41] : memref<128x128xbf16, #tpu.memory_space<vmem>>, vector<128x128xbf16>
    tpu.vector_store %arg6[%c0_40, %c0_41], %47 {strides = array<i32>} : memref<128x128xbf16, #tpu.memory_space<vmem>>, vector<128x128xbf16>,
    return
  }
  func.func @transform_0(%arg0: i32) -> (i32, i32) {
    %c0_i32 = arith.constant 0 : i32
    %c0_i32_0 = arith.constant 0 : i32
    return %arg0, %c0_i32 : i32, i32
  }
  func.func @transform_1(%arg0: i32) -> (i32, i32) {
    %c1_i32 = arith.constant 1 : i32
    %0 = arith.addi %arg0, %c1_i32 : i32
    %c4_i32 = arith.constant 4 : i32
    %1 = arith.muli %0, %c4_i32 : i32
    %c0_i32 = arith.constant 0 : i32
    %c0_i32_0 = arith.constant 0 : i32
    return %1, %c0_i32 : i32, i32
  }
  func.func @transform_2(%arg0: i32) -> (i32, i32) {
    %c0_i32 = arith.constant 0 : i32
    %c0_i32_0 = arith.constant 0 : i32
    %c0_i32_1 = arith.constant 0 : i32
    return %c0_i32, %c0_i32_0 : i32, i32
  }
  func.func @transform_3(%arg0: i32) -> (i32, i32) {
    %c0_i32 = arith.constant 0 : i32
    %c0_i32_0 = arith.constant 0 : i32
    %c0_i32_1 = arith.constant 0 : i32
    return %c0_i32, %c0_i32_0 : i32, i32
  }
  func.func @transform_4(%arg0: i32) -> (i32, i32) {
    %c0_i32 = arith.constant 0 : i32
    %c0_i32_0 = arith.constant 0 : i32
    return %arg0, %c0_i32 : i32, i32
  }
  func.func @transform_5(%arg0: i32) -> (i32, i32) {
    %c0_i32 = arith.constant 0 : i32
    %c0_i32_0 = arith.constant 0 : i32
    return %arg0, %c0_i32 : i32, i32
  }
}

module attributes {stable_mosaic.version = 11 : i64} {
  func.func @_matmul_bn_kernel(%arg0: i32, %arg1: memref<64x16xbf16, #tpu.memory_space<vmem>>, %arg2: memref<16x128xbf16, #tpu.memory_space<vmem>>, %arg3: memref<1x128xf32, #tpu.memory_space<vmem>>, %arg4: memref<64x128xf32, #tpu.memory_space<vmem>>) attributes {dimension_semantics = [#tpu.dimension_semantics<parallel>], iteration_bounds = array<i64: 2>, scalar_prefetch = 0 : i64, scratch_operands = 0 : i64, tpu.core_type = #tpu.core_type<tc>, window_params = [{transform_indices = @transform_0, window_bounds = array<i64: 64, 16>}, {pipeline_mode = #tpu.pipeline_mode<synchronous>, transform_indices = @transform_1, window_bounds = array<i64: 16, 128>}, {pipeline_mode = #tpu.pipeline_mode<synchronous>, transform_indices = @transform_2, window_bounds = array<i64: 1, 128>}, {transform_indices = @transform_3, window_bounds = array<i64: 64, 128>}]} {
    %c0 = arith.constant 0 : index
    %c0_0 = arith.constant 0 : index
    %0 = vector.load %arg1[%c0, %c0_0] : memref<64x16xbf16, #tpu.memory_space<vmem>>, vector<64x16xbf16>
    %c0_1 = arith.constant 0 : index
    %c0_2 = arith.constant 0 : index
    %1 = vector.load %arg2[%c0_1, %c0_2] : memref<16x128xbf16, #tpu.memory_space<vmem>>, vector<16x128xbf16>
    %cst = arith.constant dense<0.000000e+00> : vector<64x128xf32>
    %2 = tpu.matmul %0, %1, %cst {dimension_numbers = #tpu.dot_dimension_numbers<[1], [0], [0], [1], [0, 0, 1, 1], [], []>} : vector<64x16xbf16>, vector<16x128xbf16>, vector<64x128xf32> -> vector<64x128xf32>
    %c0_3 = arith.constant 0 : index
    %c0_4 = arith.constant 0 : index
    %3 = vector.load %arg3[%c0_3, %c0_4] : memref<1x128xf32, #tpu.memory_space<vmem>>, vector<1x128xf32>
    %4 = vector.broadcast %3 : vector<1x128xf32> to vector<64x128xf32>
    %5 = arith.addf %2, %4 : vector<64x128xf32>
    %c0_5 = arith.constant 0 : index
    %c0_6 = arith.constant 0 : index
    %6 = vector.load %arg4[%c0_5, %c0_6] : memref<64x128xf32, #tpu.memory_space<vmem>>, vector<64x128xf32>
    tpu.vector_store %arg4[%c0_5, %c0_6], %5 {strides = array<i32>} : memref<64x128xf32, #tpu.memory_space<vmem>>, vector<64x128xf32>,
    return
  }
  func.func @transform_0(%arg0: i32) -> (i32, i32) {
    %c0_i32 = arith.constant 0 : i32
    %c0_i32_0 = arith.constant 0 : i32
    return %arg0, %c0_i32 : i32, i32
  }
  func.func @transform_1(%arg0: i32) -> (i32, i32) {
    %c0_i32 = arith.constant 0 : i32
    %c0_i32_0 = arith.constant 0 : i32
    %c0_i32_1 = arith.constant 0 : i32
    return %c0_i32, %c0_i32_0 : i32, i32
  }
  func.func @transform_2(%arg0: i32) -> (i32, i32) {
    %c0_i32 = arith.constant 0 : i32
    %c0_i32_0 = arith.constant 0 : i32
    %c0_i32_1 = arith.constant 0 : i32
    return %c0_i32, %c0_i32_0 : i32, i32
  }
  func.func @transform_3(%arg0: i32) -> (i32, i32) {
    %c0_i32 = arith.constant 0 : i32
    %c0_i32_0 = arith.constant 0 : i32
    return %arg0, %c0_i32 : i32, i32
  }
}

</mosaic_0001>

<llo_original>
// kernel: resnet_basicblock_forward.3
$region0: #{resnet_basicblock_forward.3}
  #allocation0 [shape = 'u32[]', space=smem, size = 0x4, offset = 0x4, fixed_abs, tag = 'smem constant byte address 0x4 - core index']
  #allocation1 [shape = 'u32[144,128]{1,0:T(1,128)}', space=vmem, size = 0x12000, scoped, tag = 'internal scratch']
  %s0 = inlined_call_operand.vmem [shape: bf16[128,36], index: 0, kind: input, shape index: {}]
  %s1 = inlined_call_operand.vmem [shape: bf16[36,128], index: 1, kind: input, shape index: {}]
  %s2 = inlined_call_operand.vmem [shape: f32[1,128], index: 2, kind: input, shape index: {}]
  %s3 = inlined_call_operand.vmem [shape: bf16[128,128], index: 3, kind: output, shape index: {}]
  %s4 = sld [smem:[#allocation0]]
  $region45: #{resnet_basicblock_forward.3} parent=0
    _
  %s6 = ssub.s32 1, %s4
  %s7 = scalar_select 0, %s6, %s4
  loop: start=0, step=1, limit=4
  $region2: #{resnet_basicblock_forward.3} parent=0 // loop_pre_header
    _
  $region3: #{resnet_basicblock_forward.3} parent=0 // loop_header
    %s9 = sphi 0, %s13
    %p10 = scmp.ge.s32.totalorder %s9, 4
    %s19 = sphi 0, %s21
    %s22 = sphi 0, %s19
    %s23 = sphi 0, %s22
    %s39 = sphi 0, %s23
    %s43 = sphi 0, %s43
    %s45 = sphi 0, %s43
    %s46 = sphi 0, %s45
    %s60 = sphi 0, %s46
    %s64 = sphi 0, %s64
    %s66 = sphi 0, %s64
    %s67 = sphi 0, %s66
    %s81 = sphi 0, %s67
    %s87 = sphi 0, %s89
    %s90 = sphi 0, %s87
    %s91 = sphi 0, %s90
    %s107 = sphi 0, %s91
  $region4: #{resnet_basicblock_forward.3} parent=0 // loop_header_branch
    %12 = sbr.rel (%p10) target = $region8
  $region5: #{resnet_basicblock_forward.3} parent=0 // loop_body
    %s14 = ssub.s32 %s9, 1
    %s15 = ssub.s32 %s9, 2
    %s16 = sadd.s32 %s9, 1
    %s17 = ssub.s32 %s9, %s16
    %p18 = scmp.eq.s32.totalorder %s17, 0
    %s20 = sadd.s32 %s19, 1
    %s21 = scalar_select %p18, %s19, %s20
    %p24 = pneg %p18
    %p25 = scmp.eq.s32.totalorder %s9, 1
    %p26 = por %p24, %p25
    %p27 = scmp.ne.s32.totalorder %s19, %s22
    %p28 = scmp.eq.s32.totalorder %s9, 0
    %p29 = por %p27, %p28
    %p30 = scmp.ne.s32.totalorder %s19, %s22
    %p31 = scmp.eq.s32.totalorder %s14, 1
    %p32 = por %p30, %p31
    %p33 = scmp.ne.s32.totalorder %s22, %s23
    %p34 = scmp.eq.s32.totalorder %s14, 0
    %p35 = por %p33, %p34
    %p36 = scmp.ne.s32.totalorder %s22, %s23
    %p37 = scmp.eq.s32.totalorder %s15, 1
    %p38 = por %p36, %p37
    %p40 = scmp.ne.s32.totalorder %s23, %s39
    %p41 = scmp.eq.s32.totalorder %s15, 0
    %p42 = por %p40, %p41
    %s44 = sadd.s32 %s43, 1
    %p47 = scmp.eq.s32.totalorder %s9, 1
    %p48 = scmp.ne.s32.totalorder %s43, %s45
    %p49 = scmp.eq.s32.totalorder %s9, 0
    %p50 = por %p48, %p49
    %p51 = scmp.ne.s32.totalorder %s43, %s45
    %p52 = scmp.eq.s32.totalorder %s14, 1
    %p53 = por %p51, %p52
    %p54 = scmp.ne.s32.totalorder %s45, %s46
    %p55 = scmp.eq.s32.totalorder %s14, 0
    %p56 = por %p54, %p55
    %p57 = scmp.ne.s32.totalorder %s45, %s46
    %p58 = scmp.eq.s32.totalorder %s15, 1
    %p59 = por %p57, %p58
    %p61 = scmp.ne.s32.totalorder %s46, %s60
    %p62 = scmp.eq.s32.totalorder %s15, 0
    %p63 = por %p61, %p62
    %s65 = sadd.s32 %s64, 1
    %p68 = scmp.eq.s32.totalorder %s9, 1
    %p69 = scmp.ne.s32.totalorder %s64, %s66
    %p70 = scmp.eq.s32.totalorder %s9, 0
    %p71 = por %p69, %p70
    %p72 = scmp.ne.s32.totalorder %s64, %s66
    %p73 = scmp.eq.s32.totalorder %s14, 1
    %p74 = por %p72, %p73
    %p75 = scmp.ne.s32.totalorder %s66, %s67
    %p76 = scmp.eq.s32.totalorder %s14, 0
    %p77 = por %p75, %p76
    %p78 = scmp.ne.s32.totalorder %s66, %s67
    %p79 = scmp.eq.s32.totalorder %s15, 1
    %p80 = por %p78, %p79
    %p82 = scmp.ne.s32.totalorder %s67, %s81
    %p83 = scmp.eq.s32.totalorder %s15, 0
    %p84 = por %p82, %p83
    %s85 = ssub.s32 %s9, %s16
    %p86 = scmp.eq.s32.totalorder %s85, 0
    %s88 = sadd.s32 %s87, 1
    %s89 = scalar_select %p86, %s87, %s88
    %p92 = pneg %p86
    %p93 = scmp.eq.s32.totalorder %s9, 1
    %p94 = por %p92, %p93
    %p95 = scmp.ne.s32.totalorder %s87, %s90
    %p96 = scmp.eq.s32.totalorder %s9, 0
    %p97 = por %p95, %p96
    %p98 = scmp.ne.s32.totalorder %s87, %s90
    %p99 = scmp.eq.s32.totalorder %s14, 1
    %p100 = por %p98, %p99
    %p101 = scmp.ne.s32.totalorder %s90, %s91
    %p102 = scmp.eq.s32.totalorder %s14, 0
    %p103 = por %p101, %p102
    %p104 = scmp.ne.s32.totalorder %s90, %s91
    %p105 = scmp.eq.s32.totalorder %s15, 1
    %p106 = por %p104, %p105
    %p108 = scmp.ne.s32.totalorder %s91, %s107
    %p109 = scmp.eq.s32.totalorder %s15, 0
    %p110 = por %p108, %p109
    %p111 = scmp.le.s32.totalorder 1, %s9
    %p112 = scmp.lt.s32.totalorder %s9, 3
    %p113 = pnand %p111, %p112
    %p114 = pneg %p113
    // Predicated region
    $region9: #{resnet_basicblock_forward.3} parent=5 // pred_check
      _
    $region10: #{resnet_basicblock_forward.3} parent=5 // pred_check_branch
      %116 = sbr.rel (%p113) target = $region12
    $region11: #{resnet_basicblock_forward.3} parent=5 // pred_region
      %s117 = ssub.s32 %s9, 1
      // Predicated region
      $region13: #{resnet_basicblock_forward.3} parent=11 // pred_check
        %p118 = pneg %p56
      $region14: #{resnet_basicblock_forward.3} parent=11 // pred_check_branch
        %120 = sbr.rel (%p118) target = $region16
      $region15: #{resnet_basicblock_forward.3} parent=11 // pred_region
        _
      $region16: #{resnet_basicblock_forward.3} parent=11 // pred_fallthru
        _
      // Predicated region
      $region17: #{resnet_basicblock_forward.3} parent=11 // pred_check
        %p121 = pneg %p77
      $region18: #{resnet_basicblock_forward.3} parent=11 // pred_check_branch
        %123 = sbr.rel (%p121) target = $region20
      $region19: #{resnet_basicblock_forward.3} parent=11 // pred_region
        _
      $region20: #{resnet_basicblock_forward.3} parent=11 // pred_fallthru
        _
    $region12: #{resnet_basicblock_forward.3} parent=5 // pred_fallthru
      _
    %p124 = scmp.lt.s32.totalorder %s9, 2
    // Predicated region
    $region21: #{resnet_basicblock_forward.3} parent=5 // pred_check
      %p125 = pneg %p124
    $region22: #{resnet_basicblock_forward.3} parent=5 // pred_check_branch
      %127 = sbr.rel (%p125) target = $region24
    $region23: #{resnet_basicblock_forward.3} parent=5 // pred_region
      // Predicated region
      $region25: #{resnet_basicblock_forward.3} parent=23 // pred_check
        %p128 = pneg %p29
      $region26: #{resnet_basicblock_forward.3} parent=23 // pred_check_branch
        %130 = sbr.rel (%p128) target = $region28
      $region27: #{resnet_basicblock_forward.3} parent=23 // pred_region
        %s131 = smul.u32 8, %s9
        %p132 = scmp.lt.s32.totalorder %s131, 15
        %s133 = scalar_select %p132, %s131, 15
        %s134 = smul.addr %s133, 4
        %s135 = scalar_lea.vmem %s0, %s134
        %s136 = smul.u32 8, %s9
      $region28: #{resnet_basicblock_forward.3} parent=23 // pred_fallthru
        _
    $region24: #{resnet_basicblock_forward.3} parent=5 // pred_fallthru
      _
    %p137 = scmp.le.s32.totalorder 1, %s9
    %p138 = scmp.lt.s32.totalorder %s9, 3
    %p139 = pnand %p137, %p138
    %p140 = pneg %p139
    // Predicated region
    $region29: #{resnet_basicblock_forward.3} parent=5 // pred_check
      _
    $region30: #{resnet_basicblock_forward.3} parent=5 // pred_check_branch
      %142 = sbr.rel (%p139) target = $region32
    $region31: #{resnet_basicblock_forward.3} parent=5 // pred_region
      %s143 = ssub.s32 %s9, 1
      %s144 = smul.u32 8, %s14
      %p145 = scmp.lt.s32.totalorder %s144, 15
      %s146 = scalar_select %p145, %s144, 15
      %s147 = smul.addr %s146, 4
      %s148 = scalar_lea.vmem %s0, %s147
      %p149 = pneg %p35
      %p150 = pneg %p32
      %p151 = pneg %p56
      %p152 = pneg %p53
      %p153 = pneg %p77
      %p154 = pneg %p74
      %p155 = pneg %p103
      %p156 = pneg %p100
      %s157 = smul.u32 8, %s14
      %p158 = scmp.lt.s32.totalorder %s157, 15
      %s159 = scalar_select %p158, %s157, 15
      %s160 = smul.addr %s159, 4
      %s161 = scalar_lea.vmem %s3, %s160
      %s162 = smul.u32 8, %s14
      %p163 = scmp.lt.s32.totalorder %s162, 15
      %s164 = scalar_select %p163, %s162, 15
      %s165 = smul.addr %s164, 4
      %s166 = scalar_lea.vmem %s0, %s165
      %s167 = smul.u32 8, %s14
      %s168 = smul.u32 8, %s14
      %p169 = scmp.lt.s32.totalorder %s168, 15
      %s170 = scalar_select %p169, %s168, 15
      %s171 = smul.addr %s170, 4
      %s172 = scalar_lea.vmem %s3, %s171
      %s173 = smul.u32 8, %s14
      %v175 = vld [vmem:[%s166] sm:$0xf]
      %v176 = vld [vmem:[%s166 + $0x4] sm:$0xf]
      %v177 = vld [vmem:[%s166 + $0x8] sm:$0xf]
      %v178 = vld [vmem:[%s166 + $0xc] sm:$0xf]
      %v179 = vld [vmem:[%s166 + $0x10] sm:$0xf]
      %v180 = vld [vmem:[%s166 + $0x14] sm:$0xf]
      %v181 = vld [vmem:[%s166 + $0x18] sm:$0xf]
      %v182 = vld [vmem:[%s166 + $0x1c] sm:$0xf]
      %v183 = vld [vmem:[%s1] sm:$0xf]
      %v184 = vld [vmem:[%s1 + $0x4] sm:$0xf]
      %v185 = vld [vmem:[%s1 + $0x8] sm:$0xf]
      %v186 = vld [vmem:[%s1 + $0xc] sm:$0xf]
      %v187 = vld [vmem:[%s1 + $0x10] sm:$0x3]
      %v188 = vld [vmem:[%s2] sm:$0x1]
      %v190 = vlaneseq
      %v191 = vshrl.u32 %v190, 7
      %v192 = vsub.s32 0, %v191
      %v193 = vrot.slane %v188, %v192
      %v203 = vunpack.c.l.b16 %v175
      %v204 = vunpack.c.l.b16 %v176
      %v205 = vunpack.c.l.b16 %v177
      %v206 = vunpack.c.l.b16 %v178
      %v207 = vunpack.c.l.b16 %v179
      %v208 = vunpack.c.l.b16 %v180
      %v209 = vunpack.c.l.b16 %v181
      %v210 = vunpack.c.l.b16 %v182
      %v211 = vpack.c.b16 %v204, %v203
      %v212 = vpack.c.b16 %v206, %v205
      %v213 = vpack.c.b16 %v208, %v207
      %v214 = vpack.c.b16 %v210, %v209
      %v220 = vunpack.c.l.b16 %v183
      %v221 = vunpack.c.l.b16 %v184
      %v222 = vunpack.c.l.b16 %v185
      %v223 = vunpack.c.l.b16 %v186
      %v224 = vunpack.c.l.b16 %v187
      %v225 = vpack.c.b16 %v221, %v220
      %v226 = vpack.c.b16 %v223, %v222
      %v227 = vpack.c.b16 %v224, %v224
      %vm230 = vcmask 293888
      %v232 = vsel %vm230, %v211, 0
      %v235 = vsel %vm230, %v212, 0
      %v238 = vsel %vm230, %v213, 0
      %v241 = vsel %vm230, %v214, 0
      %vm243 = vcmask 1041408
      %v245 = vsel %vm243, %v227, 0
      %247 = vmatprep.subr.bf16.mxu0 0
      %248 = vmatpush1.bf16.msra.mxu0 %v225
      %249 = vmatprep.subr.bf16.mxu0 0
      %250 = vmatpush1.bf16.msra.mxu0 %v226
      %251 = vmatprep.subr.bf16.mxu0 0
      %252 = vmatpush1.bf16.msra.mxu0 %v245
      %253 = vmatprep.subr.bf16.mxu0 0
      %254 = vmatpush1.bf16.msra.mxu0 0
      %255 = vmatprep.subr.bf16.mxu0 0
      %256 = vmatpush1.bf16.msra.mxu0 0
      %257 = vmatprep.subr.bf16.mxu0 0
      %258 = vmatpush1.bf16.msra.mxu0 0
      %259 = vmatprep.subr.bf16.mxu0 0
      %260 = vmatpush1.bf16.msra.mxu0 0
      %261 = vmatprep.subr.bf16.mxu0 0
      %262 = vmatpush1.bf16.msra.mxu0 0
      %263 = vmatprep.subr.bf16.mxu0 0
      %264 = vmatpush1.bf16.msra.mxu0 0
      %265 = vmatprep.subr.bf16.mxu0 0
      %266 = vmatpush1.bf16.msra.mxu0 0
      %267 = vmatprep.subr.bf16.mxu0 0
      %268 = vmatpush1.bf16.msra.mxu0 0
      %269 = vmatprep.subr.bf16.mxu0 0
      %270 = vmatpush1.bf16.msra.mxu0 0
      %271 = vmatprep.subr.bf16.mxu0 0
      %272 = vmatpush1.bf16.msra.mxu0 0
      %273 = vmatprep.subr.bf16.mxu0 0
      %274 = vmatpush1.bf16.msra.mxu0 0
      %275 = vmatprep.subr.bf16.mxu0 0
      %276 = vmatpush1.bf16.msra.mxu0 0
      %277 = vmatprep.subr.bf16.mxu0 0
      %278 = vmatpush1.bf16.msra.mxu0 0
      %279 = vmatprep.mubr.bf16.mxu0 0
      %280 = vmatmul.mubr.bf16.gmra.mrb[0].mxu0 %v232
      %v281 = vpop.f32.mrb[0].mxu0
      %v282 = vadd.f32 %v193, %v281
      %v283 = vpop.f32.mrb[0].mxu0
      %v284 = vpop.f32.mrb[0].mxu0
      %v285 = vadd.f32 %v193, %v284
      %v286 = vpop.f32.mrb[0].mxu0
      %287 = vmatprep.mubr.bf16.mxu0 0
      %288 = vmatmul.mubr.bf16.gmra.mrb[0].mxu0 %v235
      %v289 = vpop.f32.mrb[0].mxu0
      %v290 = vadd.f32 %v193, %v289
      %v291 = vpop.f32.mrb[0].mxu0
      %v292 = vpop.f32.mrb[0].mxu0
      %v293 = vadd.f32 %v193, %v292
      %v294 = vpop.f32.mrb[0].mxu0
      %295 = vmatprep.mubr.bf16.mxu0 0
      %296 = vmatmul.mubr.bf16.gmra.mrb[0].mxu0 %v238
      %v297 = vpop.f32.mrb[0].mxu0
      %v298 = vadd.f32 %v193, %v297
      %v299 = vpop.f32.mrb[0].mxu0
      %v300 = vpop.f32.mrb[0].mxu0
      %v301 = vadd.f32 %v193, %v300
      %v302 = vpop.f32.mrb[0].mxu0
      %303 = vmatprep.mubr.bf16.mxu0 0
      %304 = vmatmul.mubr.bf16.gmra.mrb[0].mxu0 %v241
      %v305 = vpop.f32.mrb[0].mxu0
      %v306 = vadd.f32 %v193, %v305
      %v307 = vpop.f32.mrb[0].mxu0
      %v308 = vpop.f32.mrb[0].mxu0
      %v309 = vadd.f32 %v193, %v308
      %v310 = vpop.f32.mrb[0].mxu0
      %311 = vdwg.mxu0
      %v312 = vmax.f32 %v282, 0.0
      %v313 = vmax.f32 %v285, 0.0
      %v314 = vmax.f32 %v290, 0.0
      %v315 = vmax.f32 %v293, 0.0
      %v316 = vmax.f32 %v298, 0.0
      %v317 = vmax.f32 %v301, 0.0
      %v318 = vmax.f32 %v306, 0.0
      %v319 = vmax.f32 %v309, 0.0
      %v320 = vpack.c.bf16 %v313, %v312
      %v321 = vpack.c.bf16 %v315, %v314
      %v322 = vpack.c.bf16 %v317, %v316
      %v323 = vpack.c.bf16 %v319, %v318
      %v328 = vunpack.c.l.b16 %v320
      %v329 = vunpack.c.h.b16 %v320
      %v330 = vunpack.c.l.b16 %v321
      %v331 = vunpack.c.h.b16 %v321
      %v332 = vunpack.c.l.b16 %v322
      %v333 = vunpack.c.h.b16 %v322
      %v334 = vunpack.c.l.b16 %v323
      %v335 = vunpack.c.h.b16 %v323
      %v336 = vpack.c.b16 %v328, %v328
      %v337 = vpack.c.b16 %v329, %v329
      %v338 = vpack.c.b16 %v330, %v330
      %v339 = vpack.c.b16 %v331, %v331
      %v340 = vpack.c.b16 %v332, %v332
      %v341 = vpack.c.b16 %v333, %v333
      %v342 = vpack.c.b16 %v334, %v334
      %v343 = vpack.c.b16 %v335, %v335
      %352 = vst [vmem:[%s172] sm:$0xf] %v336
      %353 = vst [vmem:[%s172 + $0x4] sm:$0xf] %v337
      %354 = vst [vmem:[%s172 + $0x8] sm:$0xf] %v338
      %355 = vst [vmem:[%s172 + $0xc] sm:$0xf] %v339
      %356 = vst [vmem:[%s172 + $0x10] sm:$0xf] %v340
      %357 = vst [vmem:[%s172 + $0x14] sm:$0xf] %v341
      %358 = vst [vmem:[%s172 + $0x18] sm:$0xf] %v342
      %359 = vst [vmem:[%s172 + $0x1c] sm:$0xf] %v343
      %s360 = smul.u32 8, %s14
      %p361 = scmp.lt.s32.totalorder %s360, 15
      %s362 = scalar_select %p361, %s360, 15
      %s363 = smul.addr %s362, 4
      %s364 = scalar_lea.vmem %s3, %s363
      // Predicated region
      $region33: #{resnet_basicblock_forward.3} parent=31 // pred_check
        %p365 = pneg %p100
      $region34: #{resnet_basicblock_forward.3} parent=31 // pred_check_branch
        %367 = sbr.rel (%p365) target = $region36
      $region35: #{resnet_basicblock_forward.3} parent=31 // pred_region
        %s368 = smul.u32 8, %s14
      $region36: #{resnet_basicblock_forward.3} parent=31 // pred_fallthru
        _
    $region32: #{resnet_basicblock_forward.3} parent=5 // pred_fallthru
      _
    %p369 = scmp.le.s32.totalorder 2, %s9
    // Predicated region
    $region37: #{resnet_basicblock_forward.3} parent=5 // pred_check
      %p370 = pneg %p369
    $region38: #{resnet_basicblock_forward.3} parent=5 // pred_check_branch
      %372 = sbr.rel (%p370) target = $region40
    $region39: #{resnet_basicblock_forward.3} parent=5 // pred_region
      %s373 = ssub.s32 %s9, 2
      // Predicated region
      $region41: #{resnet_basicblock_forward.3} parent=39 // pred_check
        %p374 = pneg %p106
      $region42: #{resnet_basicblock_forward.3} parent=39 // pred_check_branch
        %376 = sbr.rel (%p374) target = $region44
      $region43: #{resnet_basicblock_forward.3} parent=39 // pred_region
        %s377 = smul.u32 8, %s15
        %p378 = scmp.lt.s32.totalorder %s377, 15
        %s379 = scalar_select %p378, %s377, 15
        %s380 = smul.addr %s379, 4
        %s381 = scalar_lea.vmem %s3, %s380
      $region44: #{resnet_basicblock_forward.3} parent=39 // pred_fallthru
        _
    $region40: #{resnet_basicblock_forward.3} parent=5 // pred_fallthru
      _
  $region6: #{resnet_basicblock_forward.3} parent=0 // loop_footer
    %s13 = sadd.s32 1, %s9
  $region7: #{resnet_basicblock_forward.3} parent=0 // loop_footer_branch
    %8 = sbr.rel target = $region3
  $region8: #{resnet_basicblock_forward.3} parent=0 // loop_exit
    _

// kernel: resnet_basicblock_forward.5
$region0: #{resnet_basicblock_forward.5}
  #allocation0 [shape = 'u32[]', space=smem, size = 0x4, offset = 0x4, fixed_abs, tag = 'smem constant byte address 0x4 - core index']
  #allocation1 [shape = 'u32[144,128]{1,0:T(1,128)}', space=vmem, size = 0x12000, scoped, tag = 'internal scratch']
  %s0 = inlined_call_operand.vmem [shape: bf16[128,16], index: 0, kind: input, shape index: {}]
  %s1 = inlined_call_operand.vmem [shape: bf16[16,128], index: 1, kind: input, shape index: {}]
  %s2 = inlined_call_operand.vmem [shape: f32[1,128], index: 2, kind: input, shape index: {}]
  %s3 = inlined_call_operand.vmem [shape: f32[128,128], index: 3, kind: output, shape index: {}]
  %s4 = sld [smem:[#allocation0]]
  $region45: #{resnet_basicblock_forward.5} parent=0
    _
  %s6 = ssub.s32 1, %s4
  %s7 = scalar_select 0, %s6, %s4
  loop: start=0, step=1, limit=4
  $region2: #{resnet_basicblock_forward.5} parent=0 // loop_pre_header
    _
  $region3: #{resnet_basicblock_forward.5} parent=0 // loop_header
    %s9 = sphi 0, %s13
    %p10 = scmp.ge.s32.totalorder %s9, 4
    %s19 = sphi 0, %s21
    %s22 = sphi 0, %s19
    %s23 = sphi 0, %s22
    %s39 = sphi 0, %s23
    %s43 = sphi 0, %s43
    %s45 = sphi 0, %s43
    %s46 = sphi 0, %s45
    %s60 = sphi 0, %s46
    %s64 = sphi 0, %s64
    %s66 = sphi 0, %s64
    %s67 = sphi 0, %s66
    %s81 = sphi 0, %s67
    %s87 = sphi 0, %s89
    %s90 = sphi 0, %s87
    %s91 = sphi 0, %s90
    %s107 = sphi 0, %s91
  $region4: #{resnet_basicblock_forward.5} parent=0 // loop_header_branch
    %12 = sbr.rel (%p10) target = $region8
  $region5: #{resnet_basicblock_forward.5} parent=0 // loop_body
    %s14 = ssub.s32 %s9, 1
    %s15 = ssub.s32 %s9, 2
    %s16 = sadd.s32 %s9, 1
    %s17 = ssub.s32 %s9, %s16
    %p18 = scmp.eq.s32.totalorder %s17, 0
    %s20 = sadd.s32 %s19, 1
    %s21 = scalar_select %p18, %s19, %s20
    %p24 = pneg %p18
    %p25 = scmp.eq.s32.totalorder %s9, 1
    %p26 = por %p24, %p25
    %p27 = scmp.ne.s32.totalorder %s19, %s22
    %p28 = scmp.eq.s32.totalorder %s9, 0
    %p29 = por %p27, %p28
    %p30 = scmp.ne.s32.totalorder %s19, %s22
    %p31 = scmp.eq.s32.totalorder %s14, 1
    %p32 = por %p30, %p31
    %p33 = scmp.ne.s32.totalorder %s22, %s23
    %p34 = scmp.eq.s32.totalorder %s14, 0
    %p35 = por %p33, %p34
    %p36 = scmp.ne.s32.totalorder %s22, %s23
    %p37 = scmp.eq.s32.totalorder %s15, 1
    %p38 = por %p36, %p37
    %p40 = scmp.ne.s32.totalorder %s23, %s39
    %p41 = scmp.eq.s32.totalorder %s15, 0
    %p42 = por %p40, %p41
    %s44 = sadd.s32 %s43, 1
    %p47 = scmp.eq.s32.totalorder %s9, 1
    %p48 = scmp.ne.s32.totalorder %s43, %s45
    %p49 = scmp.eq.s32.totalorder %s9, 0
    %p50 = por %p48, %p49
    %p51 = scmp.ne.s32.totalorder %s43, %s45
    %p52 = scmp.eq.s32.totalorder %s14, 1
    %p53 = por %p51, %p52
    %p54 = scmp.ne.s32.totalorder %s45, %s46
    %p55 = scmp.eq.s32.totalorder %s14, 0
    %p56 = por %p54, %p55
    %p57 = scmp.ne.s32.totalorder %s45, %s46
    %p58 = scmp.eq.s32.totalorder %s15, 1
    %p59 = por %p57, %p58
    %p61 = scmp.ne.s32.totalorder %s46, %s60
    %p62 = scmp.eq.s32.totalorder %s15, 0
    %p63 = por %p61, %p62
    %s65 = sadd.s32 %s64, 1
    %p68 = scmp.eq.s32.totalorder %s9, 1
    %p69 = scmp.ne.s32.totalorder %s64, %s66
    %p70 = scmp.eq.s32.totalorder %s9, 0
    %p71 = por %p69, %p70
    %p72 = scmp.ne.s32.totalorder %s64, %s66
    %p73 = scmp.eq.s32.totalorder %s14, 1
    %p74 = por %p72, %p73
    %p75 = scmp.ne.s32.totalorder %s66, %s67
    %p76 = scmp.eq.s32.totalorder %s14, 0
    %p77 = por %p75, %p76
    %p78 = scmp.ne.s32.totalorder %s66, %s67
    %p79 = scmp.eq.s32.totalorder %s15, 1
    %p80 = por %p78, %p79
    %p82 = scmp.ne.s32.totalorder %s67, %s81
    %p83 = scmp.eq.s32.totalorder %s15, 0
    %p84 = por %p82, %p83
    %s85 = ssub.s32 %s9, %s16
    %p86 = scmp.eq.s32.totalorder %s85, 0
    %s88 = sadd.s32 %s87, 1
    %s89 = scalar_select %p86, %s87, %s88
    %p92 = pneg %p86
    %p93 = scmp.eq.s32.totalorder %s9, 1
    %p94 = por %p92, %p93
    %p95 = scmp.ne.s32.totalorder %s87, %s90
    %p96 = scmp.eq.s32.totalorder %s9, 0
    %p97 = por %p95, %p96
    %p98 = scmp.ne.s32.totalorder %s87, %s90
    %p99 = scmp.eq.s32.totalorder %s14, 1
    %p100 = por %p98, %p99
    %p101 = scmp.ne.s32.totalorder %s90, %s91
    %p102 = scmp.eq.s32.totalorder %s14, 0
    %p103 = por %p101, %p102
    %p104 = scmp.ne.s32.totalorder %s90, %s91
    %p105 = scmp.eq.s32.totalorder %s15, 1
    %p106 = por %p104, %p105
    %p108 = scmp.ne.s32.totalorder %s91, %s107
    %p109 = scmp.eq.s32.totalorder %s15, 0
    %p110 = por %p108, %p109
    %p111 = scmp.le.s32.totalorder 1, %s9
    %p112 = scmp.lt.s32.totalorder %s9, 3
    %p113 = pnand %p111, %p112
    %p114 = pneg %p113
    // Predicated region
    $region9: #{resnet_basicblock_forward.5} parent=5 // pred_check
      _
    $region10: #{resnet_basicblock_forward.5} parent=5 // pred_check_branch
      %116 = sbr.rel (%p113) target = $region12
    $region11: #{resnet_basicblock_forward.5} parent=5 // pred_region
      %s117 = ssub.s32 %s9, 1
      // Predicated region
      $region13: #{resnet_basicblock_forward.5} parent=11 // pred_check
        %p118 = pneg %p56
      $region14: #{resnet_basicblock_forward.5} parent=11 // pred_check_branch
        %120 = sbr.rel (%p118) target = $region16
      $region15: #{resnet_basicblock_forward.5} parent=11 // pred_region
        _
      $region16: #{resnet_basicblock_forward.5} parent=11 // pred_fallthru
        _
      // Predicated region
      $region17: #{resnet_basicblock_forward.5} parent=11 // pred_check
        %p121 = pneg %p77
      $region18: #{resnet_basicblock_forward.5} parent=11 // pred_check_branch
        %123 = sbr.rel (%p121) target = $region20
      $region19: #{resnet_basicblock_forward.5} parent=11 // pred_region
        _
      $region20: #{resnet_basicblock_forward.5} parent=11 // pred_fallthru
        _
    $region12: #{resnet_basicblock_forward.5} parent=5 // pred_fallthru
      _
    %p124 = scmp.lt.s32.totalorder %s9, 2
    // Predicated region
    $region21: #{resnet_basicblock_forward.5} parent=5 // pred_check
      %p125 = pneg %p124
    $region22: #{resnet_basicblock_forward.5} parent=5 // pred_check_branch
      %127 = sbr.rel (%p125) target = $region24
    $region23: #{resnet_basicblock_forward.5} parent=5 // pred_region
      // Predicated region
      $region25: #{resnet_basicblock_forward.5} parent=23 // pred_check
        %p128 = pneg %p29
      $region26: #{resnet_basicblock_forward.5} parent=23 // pred_check_branch
        %130 = sbr.rel (%p128) target = $region28
      $region27: #{resnet_basicblock_forward.5} parent=23 // pred_region
        %s131 = smul.u32 8, %s9
        %p132 = scmp.lt.s32.totalorder %s131, 15
        %s133 = scalar_select %p132, %s131, 15
        %s134 = smul.addr %s133, 4
        %s135 = scalar_lea.vmem %s0, %s134
        %s136 = smul.u32 8, %s9
      $region28: #{resnet_basicblock_forward.5} parent=23 // pred_fallthru
        _
    $region24: #{resnet_basicblock_forward.5} parent=5 // pred_fallthru
      _
    %p137 = scmp.le.s32.totalorder 1, %s9
    %p138 = scmp.lt.s32.totalorder %s9, 3
    %p139 = pnand %p137, %p138
    %p140 = pneg %p139
    // Predicated region
    $region29: #{resnet_basicblock_forward.5} parent=5 // pred_check
      _
    $region30: #{resnet_basicblock_forward.5} parent=5 // pred_check_branch
      %142 = sbr.rel (%p139) target = $region32
    $region31: #{resnet_basicblock_forward.5} parent=5 // pred_region
      %s143 = ssub.s32 %s9, 1
      %s144 = smul.u32 8, %s14
      %p145 = scmp.lt.s32.totalorder %s144, 15
      %s146 = scalar_select %p145, %s144, 15
      %s147 = smul.addr %s146, 4
      %s148 = scalar_lea.vmem %s0, %s147
      %p149 = pneg %p35
      %p150 = pneg %p32
      %p151 = pneg %p56
      %p152 = pneg %p53
      %p153 = pneg %p77
      %p154 = pneg %p74
      %p155 = pneg %p103
      %p156 = pneg %p100
      %s157 = smul.u32 8, %s14
      %p158 = scmp.lt.s32.totalorder %s157, 15
      %s159 = scalar_select %p158, %s157, 15
      %s160 = smul.addr %s159, 8
      %s161 = scalar_lea.vmem %s3, %s160
      %s162 = smul.u32 8, %s14
      %p163 = scmp.lt.s32.totalorder %s162, 15
      %s164 = scalar_select %p163, %s162, 15
      %s165 = smul.addr %s164, 4
      %s166 = scalar_lea.vmem %s0, %s165
      %s167 = smul.u32 8, %s14
      %s168 = smul.u32 8, %s14
      %p169 = scmp.lt.s32.totalorder %s168, 15
      %s170 = scalar_select %p169, %s168, 15
      %s171 = smul.addr %s170, 8
      %s172 = scalar_lea.vmem %s3, %s171
      %s173 = smul.u32 8, %s14
      %v175 = vld [vmem:[%s166] sm:$0xf]
      %v176 = vld [vmem:[%s166 + $0x4] sm:$0xf]
      %v177 = vld [vmem:[%s166 + $0x8] sm:$0xf]
      %v178 = vld [vmem:[%s166 + $0xc] sm:$0xf]
      %v179 = vld [vmem:[%s166 + $0x10] sm:$0xf]
      %v180 = vld [vmem:[%s166 + $0x14] sm:$0xf]
      %v181 = vld [vmem:[%s166 + $0x18] sm:$0xf]
      %v182 = vld [vmem:[%s166 + $0x1c] sm:$0xf]
      %v183 = vld [vmem:[%s1] sm:$0xf]
      %v184 = vld [vmem:[%s1 + $0x4] sm:$0xf]
      %v185 = vld [vmem:[%s2] sm:$0x1]
      %v187 = vlaneseq
      %v188 = vshrl.u32 %v187, 7
      %v189 = vsub.s32 0, %v188
      %v190 = vrot.slane %v185, %v189
      %v200 = vunpack.c.l.b16 %v175
      %v201 = vunpack.c.l.b16 %v176
      %v202 = vunpack.c.l.b16 %v177
      %v203 = vunpack.c.l.b16 %v178
      %v204 = vunpack.c.l.b16 %v179
      %v205 = vunpack.c.l.b16 %v180
      %v206 = vunpack.c.l.b16 %v181
      %v207 = vunpack.c.l.b16 %v182
      %v208 = vpack.c.b16 %v201, %v200
      %v209 = vpack.c.b16 %v203, %v202
      %v210 = vpack.c.b16 %v205, %v204
      %v211 = vpack.c.b16 %v207, %v206
      %v214 = vunpack.c.l.b16 %v183
      %v215 = vunpack.c.l.b16 %v184
      %v216 = vpack.c.b16 %v215, %v214
      %vm218 = vcmask 130048
      %v220 = vsel %vm218, %v208, 0
      %v223 = vsel %vm218, %v209, 0
      %v226 = vsel %vm218, %v210, 0
      %v229 = vsel %vm218, %v211, 0
      %231 = vmatprep.subr.bf16.mxu0 0
      %232 = vmatpush1.bf16.msra.mxu0 %v216
      %233 = vmatprep.subr.bf16.mxu0 0
      %234 = vmatpush1.bf16.msra.mxu0 0
      %235 = vmatprep.subr.bf16.mxu0 0
      %236 = vmatpush1.bf16.msra.mxu0 0
      %237 = vmatprep.subr.bf16.mxu0 0
      %238 = vmatpush1.bf16.msra.mxu0 0
      %239 = vmatprep.subr.bf16.mxu0 0
      %240 = vmatpush1.bf16.msra.mxu0 0
      %241 = vmatprep.subr.bf16.mxu0 0
      %242 = vmatpush1.bf16.msra.mxu0 0
      %243 = vmatprep.subr.bf16.mxu0 0
      %244 = vmatpush1.bf16.msra.mxu0 0
      %245 = vmatprep.subr.bf16.mxu0 0
      %246 = vmatpush1.bf16.msra.mxu0 0
      %247 = vmatprep.subr.bf16.mxu0 0
      %248 = vmatpush1.bf16.msra.mxu0 0
      %249 = vmatprep.subr.bf16.mxu0 0
      %250 = vmatpush1.bf16.msra.mxu0 0
      %251 = vmatprep.subr.bf16.mxu0 0
      %252 = vmatpush1.bf16.msra.mxu0 0
      %253 = vmatprep.subr.bf16.mxu0 0
      %254 = vmatpush1.bf16.msra.mxu0 0
      %255 = vmatprep.subr.bf16.mxu0 0
      %256 = vmatpush1.bf16.msra.mxu0 0
      %257 = vmatprep.subr.bf16.mxu0 0
      %258 = vmatpush1.bf16.msra.mxu0 0
      %259 = vmatprep.subr.bf16.mxu0 0
      %260 = vmatpush1.bf16.msra.mxu0 0
      %261 = vmatprep.subr.bf16.mxu0 0
      %262 = vmatpush1.bf16.msra.mxu0 0
      %263 = vmatprep.mubr.bf16.mxu0 0
      %264 = vmatmul.mubr.bf16.gmra.mrb[0].mxu0 %v220
      %v265 = vpop.f32.mrb[0].mxu0
      %v266 = vadd.f32 %v190, %v265
      %v267 = vpop.f32.mrb[0].mxu0
      %v268 = vpop.f32.mrb[0].mxu0
      %v269 = vadd.f32 %v190, %v268
      %v270 = vpop.f32.mrb[0].mxu0
      %271 = vmatprep.mubr.bf16.mxu0 0
      %272 = vmatmul.mubr.bf16.gmra.mrb[0].mxu0 %v223
      %v273 = vpop.f32.mrb[0].mxu0
      %v274 = vadd.f32 %v190, %v273
      %v275 = vpop.f32.mrb[0].mxu0
      %v276 = vpop.f32.mrb[0].mxu0
      %v277 = vadd.f32 %v190, %v276
      %v278 = vpop.f32.mrb[0].mxu0
      %279 = vmatprep.mubr.bf16.mxu0 0
      %280 = vmatmul.mubr.bf16.gmra.mrb[0].mxu0 %v226
      %v281 = vpop.f32.mrb[0].mxu0
      %v282 = vadd.f32 %v190, %v281
      %v283 = vpop.f32.mrb[0].mxu0
      %v284 = vpop.f32.mrb[0].mxu0
      %v285 = vadd.f32 %v190, %v284
      %v286 = vpop.f32.mrb[0].mxu0
      %287 = vmatprep.mubr.bf16.mxu0 0
      %288 = vmatmul.mubr.bf16.gmra.mrb[0].mxu0 %v229
      %v289 = vpop.f32.mrb[0].mxu0
      %v290 = vadd.f32 %v190, %v289
      %v291 = vpop.f32.mrb[0].mxu0
      %v292 = vpop.f32.mrb[0].mxu0
      %v293 = vadd.f32 %v190, %v292
      %v294 = vpop.f32.mrb[0].mxu0
      %295 = vdwg.mxu0
      %296 = vst [vmem:[%s172] sm:$0xff] %v266
      %297 = vst [vmem:[%s172 + $0x8] sm:$0xff] %v269
      %298 = vst [vmem:[%s172 + $0x10] sm:$0xff] %v274
      %299 = vst [vmem:[%s172 + $0x18] sm:$0xff] %v277
      %300 = vst [vmem:[%s172 + $0x20] sm:$0xff] %v282
      %301 = vst [vmem:[%s172 + $0x28] sm:$0xff] %v285
      %302 = vst [vmem:[%s172 + $0x30] sm:$0xff] %v290
      %303 = vst [vmem:[%s172 + $0x38] sm:$0xff] %v293
      %s304 = smul.u32 8, %s14
      %p305 = scmp.lt.s32.totalorder %s304, 15
      %s306 = scalar_select %p305, %s304, 15
      %s307 = smul.addr %s306, 8
      %s308 = scalar_lea.vmem %s3, %s307
      // Predicated region
      $region33: #{resnet_basicblock_forward.5} parent=31 // pred_check
        %p309 = pneg %p100
      $region34: #{resnet_basicblock_forward.5} parent=31 // pred_check_branch
        %311 = sbr.rel (%p309) target = $region36
      $region35: #{resnet_basicblock_forward.5} parent=31 // pred_region
        %s312 = smul.u32 8, %s14
      $region36: #{resnet_basicblock_forward.5} parent=31 // pred_fallthru
        _
    $region32: #{resnet_basicblock_forward.5} parent=5 // pred_fallthru
      _
    %p313 = scmp.le.s32.totalorder 2, %s9
    // Predicated region
    $region37: #{resnet_basicblock_forward.5} parent=5 // pred_check
      %p314 = pneg %p313
    $region38: #{resnet_basicblock_forward.5} parent=5 // pred_check_branch
      %316 = sbr.rel (%p314) target = $region40
    $region39: #{resnet_basicblock_forward.5} parent=5 // pred_region
      %s317 = ssub.s32 %s9, 2
      // Predicated region
      $region41: #{resnet_basicblock_forward.5} parent=39 // pred_check
        %p318 = pneg %p106
      $region42: #{resnet_basicblock_forward.5} parent=39 // pred_check_branch
        %320 = sbr.rel (%p318) target = $region44
      $region43: #{resnet_basicblock_forward.5} parent=39 // pred_region
        %s321 = smul.u32 8, %s15
        %p322 = scmp.lt.s32.totalorder %s321, 15
        %s323 = scalar_select %p322, %s321, 15
        %s324 = smul.addr %s323, 8
        %s325 = scalar_lea.vmem %s3, %s324
      $region44: #{resnet_basicblock_forward.5} parent=39 // pred_fallthru
        _
    $region40: #{resnet_basicblock_forward.5} parent=5 // pred_fallthru
      _
  $region6: #{resnet_basicblock_forward.5} parent=0 // loop_footer
    %s13 = sadd.s32 1, %s9
  $region7: #{resnet_basicblock_forward.5} parent=0 // loop_footer_branch
    %8 = sbr.rel target = $region3
  $region8: #{resnet_basicblock_forward.5} parent=0 // loop_exit
    _

// kernel: resnet_basicblock_forward.4
$region0: #{resnet_basicblock_forward.4}
  #allocation0 [shape = 'u32[]', space=smem, size = 0x4, offset = 0x4, fixed_abs, tag = 'smem constant byte address 0x4 - core index']
  #allocation1 [shape = 'u32[144,128]{1,0:T(1,128)}', space=vmem, size = 0x12000, scoped, tag = 'internal scratch']
  #allocation2 [shape = 'bf16[160,128]{1,0:T(16,128)(2,1)}', space=vmem, size = 0xa000, scoped, tag = 'scratch operand']
  %s0 = inlined_call_operand.vmem [shape: bf16[288,128], index: 0, kind: input, shape index: {}, may-alias: {0,1}]
  %s1 = inlined_call_operand.vmem [shape: bf16[288,128], index: 1, kind: input, shape index: {}, may-alias: {0,1}]
  %s2 = inlined_call_operand.vmem [shape: bf16[1152,128], index: 2, kind: input, shape index: {}]
  %s3 = inlined_call_operand.vmem [shape: f32[1,128], index: 3, kind: input, shape index: {}]
  %s4 = inlined_call_operand.vmem [shape: f32[256,1], index: 4, kind: input, shape index: {}]
  %s5 = inlined_call_operand.vmem [shape: bf16[256,128], index: 5, kind: output, shape index: {}]
  %s6 = sld [smem:[#allocation0]]
  $region53: #{resnet_basicblock_forward.4} parent=0
    _
  %s8 = ssub.s32 1, %s6
  %s9 = scalar_select 0, %s8, %s6
  loop: start=0, step=1, limit=4
  $region2: #{resnet_basicblock_forward.4} parent=0 // loop_pre_header
    _
  $region3: #{resnet_basicblock_forward.4} parent=0 // loop_header
    %s11 = sphi 0, %s15
    %p12 = scmp.ge.s32.totalorder %s11, 4
    %s21 = sphi 0, %s23
    %s24 = sphi 0, %s21
    %s25 = sphi 0, %s24
    %s41 = sphi 0, %s25
    %s51 = sphi 0, %s53
    %s54 = sphi 0, %s51
    %s55 = sphi 0, %s54
    %s71 = sphi 0, %s55
    %s75 = sphi 0, %s75
    %s77 = sphi 0, %s75
    %s78 = sphi 0, %s77
    %s92 = sphi 0, %s78
    %s96 = sphi 0, %s96
    %s98 = sphi 0, %s96
    %s99 = sphi 0, %s98
    %s113 = sphi 0, %s99
    %s119 = sphi 0, %s121
    %s122 = sphi 0, %s119
    %s123 = sphi 0, %s122
    %s139 = sphi 0, %s123
    %s145 = sphi 0, %s147
    %s148 = sphi 0, %s145
    %s149 = sphi 0, %s148
    %s165 = sphi 0, %s149
  $region4: #{resnet_basicblock_forward.4} parent=0 // loop_header_branch
    %14 = sbr.rel (%p12) target = $region8
  $region5: #{resnet_basicblock_forward.4} parent=0 // loop_body
    %s16 = ssub.s32 %s11, 1
    %s17 = ssub.s32 %s11, 2
    %s18 = sadd.s32 %s11, 1
    %s19 = ssub.s32 %s11, %s18
    %p20 = scmp.eq.s32.totalorder %s19, 0
    %s22 = sadd.s32 %s21, 1
    %s23 = scalar_select %p20, %s21, %s22
    %p26 = pneg %p20
    %p27 = scmp.eq.s32.totalorder %s11, 1
    %p28 = por %p26, %p27
    %p29 = scmp.ne.s32.totalorder %s21, %s24
    %p30 = scmp.eq.s32.totalorder %s11, 0
    %p31 = por %p29, %p30
    %p32 = scmp.ne.s32.totalorder %s21, %s24
    %p33 = scmp.eq.s32.totalorder %s16, 1
    %p34 = por %p32, %p33
    %p35 = scmp.ne.s32.totalorder %s24, %s25
    %p36 = scmp.eq.s32.totalorder %s16, 0
    %p37 = por %p35, %p36
    %p38 = scmp.ne.s32.totalorder %s24, %s25
    %p39 = scmp.eq.s32.totalorder %s17, 1
    %p40 = por %p38, %p39
    %p42 = scmp.ne.s32.totalorder %s25, %s41
    %p43 = scmp.eq.s32.totalorder %s17, 0
    %p44 = por %p42, %p43
    %s45 = sadd.s32 %s11, 1
    %s46 = smul.u32 %s45, 4
    %s47 = sadd.s32 %s18, 1
    %s48 = smul.u32 %s47, 4
    %s49 = ssub.s32 %s46, %s48
    %p50 = scmp.eq.s32.totalorder %s49, 0
    %s52 = sadd.s32 %s51, 1
    %s53 = scalar_select %p50, %s51, %s52
    %p56 = pneg %p50
    %p57 = scmp.eq.s32.totalorder %s11, 1
    %p58 = por %p56, %p57
    %p59 = scmp.ne.s32.totalorder %s51, %s54
    %p60 = scmp.eq.s32.totalorder %s11, 0
    %p61 = por %p59, %p60
    %p62 = scmp.ne.s32.totalorder %s51, %s54
    %p63 = scmp.eq.s32.totalorder %s16, 1
    %p64 = por %p62, %p63
    %p65 = scmp.ne.s32.totalorder %s54, %s55
    %p66 = scmp.eq.s32.totalorder %s16, 0
    %p67 = por %p65, %p66
    %p68 = scmp.ne.s32.totalorder %s54, %s55
    %p69 = scmp.eq.s32.totalorder %s17, 1
    %p70 = por %p68, %p69
    %p72 = scmp.ne.s32.totalorder %s55, %s71
    %p73 = scmp.eq.s32.totalorder %s17, 0
    %p74 = por %p72, %p73
    %s76 = sadd.s32 %s75, 1
    %p79 = scmp.eq.s32.totalorder %s11, 1
    %p80 = scmp.ne.s32.totalorder %s75, %s77
    %p81 = scmp.eq.s32.totalorder %s11, 0
    %p82 = por %p80, %p81
    %p83 = scmp.ne.s32.totalorder %s75, %s77
    %p84 = scmp.eq.s32.totalorder %s16, 1
    %p85 = por %p83, %p84
    %p86 = scmp.ne.s32.totalorder %s77, %s78
    %p87 = scmp.eq.s32.totalorder %s16, 0
    %p88 = por %p86, %p87
    %p89 = scmp.ne.s32.totalorder %s77, %s78
    %p90 = scmp.eq.s32.totalorder %s17, 1
    %p91 = por %p89, %p90
    %p93 = scmp.ne.s32.totalorder %s78, %s92
    %p94 = scmp.eq.s32.totalorder %s17, 0
    %p95 = por %p93, %p94
    %s97 = sadd.s32 %s96, 1
    %p100 = scmp.eq.s32.totalorder %s11, 1
    %p101 = scmp.ne.s32.totalorder %s96, %s98
    %p102 = scmp.eq.s32.totalorder %s11, 0
    %p103 = por %p101, %p102
    %p104 = scmp.ne.s32.totalorder %s96, %s98
    %p105 = scmp.eq.s32.totalorder %s16, 1
    %p106 = por %p104, %p105
    %p107 = scmp.ne.s32.totalorder %s98, %s99
    %p108 = scmp.eq.s32.totalorder %s16, 0
    %p109 = por %p107, %p108
    %p110 = scmp.ne.s32.totalorder %s98, %s99
    %p111 = scmp.eq.s32.totalorder %s17, 1
    %p112 = por %p110, %p111
    %p114 = scmp.ne.s32.totalorder %s99, %s113
    %p115 = scmp.eq.s32.totalorder %s17, 0
    %p116 = por %p114, %p115
    %s117 = ssub.s32 %s11, %s18
    %p118 = scmp.eq.s32.totalorder %s117, 0
    %s120 = sadd.s32 %s119, 1
    %s121 = scalar_select %p118, %s119, %s120
    %p124 = pneg %p118
    %p125 = scmp.eq.s32.totalorder %s11, 1
    %p126 = por %p124, %p125
    %p127 = scmp.ne.s32.totalorder %s119, %s122
    %p128 = scmp.eq.s32.totalorder %s11, 0
    %p129 = por %p127, %p128
    %p130 = scmp.ne.s32.totalorder %s119, %s122
    %p131 = scmp.eq.s32.totalorder %s16, 1
    %p132 = por %p130, %p131
    %p133 = scmp.ne.s32.totalorder %s122, %s123
    %p134 = scmp.eq.s32.totalorder %s16, 0
    %p135 = por %p133, %p134
    %p136 = scmp.ne.s32.totalorder %s122, %s123
    %p137 = scmp.eq.s32.totalorder %s17, 1
    %p138 = por %p136, %p137
    %p140 = scmp.ne.s32.totalorder %s123, %s139
    %p141 = scmp.eq.s32.totalorder %s17, 0
    %p142 = por %p140, %p141
    %s143 = ssub.s32 %s11, %s18
    %p144 = scmp.eq.s32.totalorder %s143, 0
    %s146 = sadd.s32 %s145, 1
    %s147 = scalar_select %p144, %s145, %s146
    %p150 = pneg %p144
    %p151 = scmp.eq.s32.totalorder %s11, 1
    %p152 = por %p150, %p151
    %p153 = scmp.ne.s32.totalorder %s145, %s148
    %p154 = scmp.eq.s32.totalorder %s11, 0
    %p155 = por %p153, %p154
    %p156 = scmp.ne.s32.totalorder %s145, %s148
    %p157 = scmp.eq.s32.totalorder %s16, 1
    %p158 = por %p156, %p157
    %p159 = scmp.ne.s32.totalorder %s148, %s149
    %p160 = scmp.eq.s32.totalorder %s16, 0
    %p161 = por %p159, %p160
    %p162 = scmp.ne.s32.totalorder %s148, %s149
    %p163 = scmp.eq.s32.totalorder %s17, 1
    %p164 = por %p162, %p163
    %p166 = scmp.ne.s32.totalorder %s149, %s165
    %p167 = scmp.eq.s32.totalorder %s17, 0
    %p168 = por %p166, %p167
    %p169 = scmp.le.s32.totalorder 1, %s11
    %p170 = scmp.lt.s32.totalorder %s11, 3
    %p171 = pnand %p169, %p170
    %p172 = pneg %p171
    // Predicated region
    $region9: #{resnet_basicblock_forward.4} parent=5 // pred_check
      _
    $region10: #{resnet_basicblock_forward.4} parent=5 // pred_check_branch
      %174 = sbr.rel (%p171) target = $region12
    $region11: #{resnet_basicblock_forward.4} parent=5 // pred_region
      %s175 = ssub.s32 %s11, 1
      // Predicated region
      $region13: #{resnet_basicblock_forward.4} parent=11 // pred_check
        %p176 = pneg %p88
      $region14: #{resnet_basicblock_forward.4} parent=11 // pred_check_branch
        %178 = sbr.rel (%p176) target = $region16
      $region15: #{resnet_basicblock_forward.4} parent=11 // pred_region
        _
      $region16: #{resnet_basicblock_forward.4} parent=11 // pred_fallthru
        _
      // Predicated region
      $region17: #{resnet_basicblock_forward.4} parent=11 // pred_check
        %p179 = pneg %p109
      $region18: #{resnet_basicblock_forward.4} parent=11 // pred_check_branch
        %181 = sbr.rel (%p179) target = $region20
      $region19: #{resnet_basicblock_forward.4} parent=11 // pred_region
        _
      $region20: #{resnet_basicblock_forward.4} parent=11 // pred_fallthru
        _
    $region12: #{resnet_basicblock_forward.4} parent=5 // pred_fallthru
      _
    %p182 = scmp.lt.s32.totalorder %s11, 2
    // Predicated region
    $region21: #{resnet_basicblock_forward.4} parent=5 // pred_check
      %p183 = pneg %p182
    $region22: #{resnet_basicblock_forward.4} parent=5 // pred_check_branch
      %185 = sbr.rel (%p183) target = $region24
    $region23: #{resnet_basicblock_forward.4} parent=5 // pred_region
      // Predicated region
      $region25: #{resnet_basicblock_forward.4} parent=23 // pred_check
        %p186 = pneg %p31
      $region26: #{resnet_basicblock_forward.4} parent=23 // pred_check_branch
        %188 = sbr.rel (%p186) target = $region28
      $region27: #{resnet_basicblock_forward.4} parent=23 // pred_region
        %s189 = smul.u32 16, %s11
        %s190 = ssub.s32 36, %s189
        %p191 = scmp.lt.s32.totalorder %s190, 16
        %s192 = scalar_select %p191, %s190, 16
        %s193 = smul.u32 64, %s192
        %p194 = scmp.lt.s32.totalorder %s189, 35
        %s195 = scalar_select %p194, %s189, 35
        %s196 = smul.addr %s195, 4
        %s197 = scalar_lea.vmem %s0, %s196
        %s198 = smul.u32 16, %s11
        %s199 = ssub.s32 36, %s198
        %p200 = scmp.lt.s32.totalorder %s199, 16
        %s201 = scalar_select %p200, %s199, 16
        %s202 = smul.u32 64, %s201
      $region28: #{resnet_basicblock_forward.4} parent=23 // pred_fallthru
        _
      // Predicated region
      $region29: #{resnet_basicblock_forward.4} parent=23 // pred_check
        %p203 = pneg %p61
      $region30: #{resnet_basicblock_forward.4} parent=23 // pred_check_branch
        %205 = sbr.rel (%p203) target = $region32
      $region31: #{resnet_basicblock_forward.4} parent=23 // pred_region
        %s206 = sadd.s32 %s11, 1
        %s207 = smul.u32 %s206, 4
        %s208 = smul.u32 4, %s207
        %p209 = scmp.lt.s32.totalorder %s208, 35
        %s210 = scalar_select %p209, %s208, 35
        %s211 = smul.addr %s210, 4
        %s212 = scalar_lea.vmem %s1, %s211
        %s213 = sadd.s32 %s11, 1
        %s214 = smul.u32 %s213, 4
        %s215 = smul.u32 4, %s214
      $region32: #{resnet_basicblock_forward.4} parent=23 // pred_fallthru
        _
      // Predicated region
      $region33: #{resnet_basicblock_forward.4} parent=23 // pred_check
        %p216 = pneg %p129
      $region34: #{resnet_basicblock_forward.4} parent=23 // pred_check_branch
        %218 = sbr.rel (%p216) target = $region36
      $region35: #{resnet_basicblock_forward.4} parent=23 // pred_region
        %s219 = smul.u32 16, %s11
        %p220 = scmp.lt.s32.totalorder %s219, 31
        %s221 = scalar_select %p220, %s219, 31
        %s222 = smul.addr %s221, 8
        %s223 = scalar_lea.vmem %s4, %s222
        %s224 = smul.u32 16, %s11
      $region36: #{resnet_basicblock_forward.4} parent=23 // pred_fallthru
        _
    $region24: #{resnet_basicblock_forward.4} parent=5 // pred_fallthru
      _
    %p225 = scmp.le.s32.totalorder 1, %s11
    %p226 = scmp.lt.s32.totalorder %s11, 3
    %p227 = pnand %p225, %p226
    %p228 = pneg %p227
    // Predicated region
    $region37: #{resnet_basicblock_forward.4} parent=5 // pred_check
      _
    $region38: #{resnet_basicblock_forward.4} parent=5 // pred_check_branch
      %230 = sbr.rel (%p227) target = $region40
    $region39: #{resnet_basicblock_forward.4} parent=5 // pred_region
      %s231 = ssub.s32 %s11, 1
      %s232 = smul.u32 16, %s16
      %s233 = ssub.s32 36, %s232
      %p234 = scmp.lt.s32.totalorder %s233, 16
      %s235 = scalar_select %p234, %s233, 16
      %s236 = smul.u32 64, %s235
      %p237 = scmp.lt.s32.totalorder %s232, 35
      %s238 = scalar_select %p237, %s232, 35
      %s239 = smul.addr %s238, 4
      %s240 = scalar_lea.vmem %s0, %s239
      %p241 = pneg %p37
      %p242 = pneg %p34
      %s243 = sadd.s32 %s16, 1
      %s244 = smul.u32 %s243, 4
      %s245 = smul.u32 4, %s244
      %p246 = scmp.lt.s32.totalorder %s245, 35
      %s247 = scalar_select %p246, %s245, 35
      %s248 = smul.addr %s247, 4
      %s249 = scalar_lea.vmem %s1, %s248
      %p250 = pneg %p67
      %p251 = pneg %p64
      %p252 = pneg %p88
      %p253 = pneg %p85
      %p254 = pneg %p109
      %p255 = pneg %p106
      %s256 = smul.u32 16, %s16
      %p257 = scmp.lt.s32.totalorder %s256, 31
      %s258 = scalar_select %p257, %s256, 31
      %s259 = smul.addr %s258, 8
      %s260 = scalar_lea.vmem %s4, %s259
      %p261 = pneg %p135
      %p262 = pneg %p132
      %p263 = pneg %p161
      %p264 = pneg %p158
      %s265 = smul.u32 16, %s16
      %p266 = scmp.lt.s32.totalorder %s265, 31
      %s267 = scalar_select %p266, %s265, 31
      %s268 = smul.addr %s267, 4
      %s269 = scalar_lea.vmem %s5, %s268
      %s270 = smul.u32 16, %s16
      %s271 = ssub.s32 36, %s270
      %p272 = scmp.lt.s32.totalorder %s271, 16
      %s273 = scalar_select %p272, %s271, 16
      %s274 = smul.u32 64, %s273
      %p275 = scmp.lt.s32.totalorder %s270, 35
      %s276 = scalar_select %p275, %s270, 35
      %s277 = smul.addr %s276, 4
      %s278 = scalar_lea.vmem %s0, %s277
      %s279 = smul.u32 16, %s16
      %s280 = ssub.s32 36, %s279
      %p281 = scmp.lt.s32.totalorder %s280, 16
      %s282 = scalar_select %p281, %s280, 16
      %s283 = smul.u32 64, %s282
      %s284 = sadd.s32 %s16, 1
      %s285 = smul.u32 %s284, 4
      %s286 = smul.u32 4, %s285
      %p287 = scmp.lt.s32.totalorder %s286, 35
      %s288 = scalar_select %p287, %s286, 35
      %s289 = smul.addr %s288, 4
      %s290 = scalar_lea.vmem %s1, %s289
      %s291 = sadd.s32 %s16, 1
      %s292 = smul.u32 %s291, 4
      %s293 = smul.u32 4, %s292
      %s294 = smul.u32 16, %s16
      %p295 = scmp.lt.s32.totalorder %s294, 31
      %s296 = scalar_select %p295, %s294, 31
      %s297 = smul.addr %s296, 8
      %s298 = scalar_lea.vmem %s4, %s297
      %s299 = smul.u32 16, %s16
      %s300 = smul.u32 16, %s16
      %p301 = scmp.lt.s32.totalorder %s300, 31
      %s302 = scalar_select %p301, %s300, 31
      %s303 = smul.addr %s302, 4
      %s304 = scalar_lea.vmem %s5, %s303
      %s305 = smul.u32 16, %s16
      %v307 = vld [vmem:[%s278] sm:$0xf]
      %v308 = vld [vmem:[%s278 + $0x4] sm:$0xf]
      %v309 = vld [vmem:[%s278 + $0x8] sm:$0xf]
      %v310 = vld [vmem:[%s278 + $0xc] sm:$0xf]
      %v311 = vld [vmem:[%s278 + $0x10] sm:$0xf]
      %v312 = vld [vmem:[%s278 + $0x14] sm:$0xf]
      %v313 = vld [vmem:[%s278 + $0x18] sm:$0xf]
      %v314 = vld [vmem:[%s278 + $0x1c] sm:$0xf]
      %v315 = vld [vmem:[%s278 + $0x20] sm:$0xf]
      %v316 = vld [vmem:[%s278 + $0x24] sm:$0xf]
      %v317 = vld [vmem:[%s278 + $0x28] sm:$0xf]
      %v318 = vld [vmem:[%s278 + $0x2c] sm:$0xf]
      %v319 = vld [vmem:[%s278 + $0x30] sm:$0xf]
      %v320 = vld [vmem:[%s278 + $0x34] sm:$0xf]
      %v321 = vld [vmem:[%s278 + $0x38] sm:$0xf]
      %v322 = vld [vmem:[%s278 + $0x3c] sm:$0xf]
      %v339 = vunpack.c.l.b16 %v307
      %v340 = vunpack.c.l.b16 %v308
      %v341 = vunpack.c.l.b16 %v309
      %v342 = vunpack.c.l.b16 %v310
      %v343 = vunpack.c.l.b16 %v311
      %v344 = vunpack.c.l.b16 %v312
      %v345 = vunpack.c.l.b16 %v313
      %v346 = vunpack.c.l.b16 %v314
      %v347 = vunpack.c.l.b16 %v315
      %v348 = vunpack.c.l.b16 %v316
      %v349 = vunpack.c.l.b16 %v317
      %v350 = vunpack.c.l.b16 %v318
      %v351 = vunpack.c.l.b16 %v319
      %v352 = vunpack.c.l.b16 %v320
      %v353 = vunpack.c.l.b16 %v321
      %v354 = vunpack.c.l.b16 %v322
      %v355 = vpack.c.b16 %v340, %v339
      %v356 = vpack.c.b16 %v342, %v341
      %v357 = vpack.c.b16 %v344, %v343
      %v358 = vpack.c.b16 %v346, %v345
      %v359 = vpack.c.b16 %v348, %v347
      %v360 = vpack.c.b16 %v350, %v349
      %v361 = vpack.c.b16 %v352, %v351
      %v362 = vpack.c.b16 %v354, %v353
      %371 = vst [vmem:[#allocation2] sm:$0xff] %v355
      %372 = vst [vmem:[#allocation2 + $0x8] sm:$0xff] %v356
      %373 = vst [vmem:[#allocation2 + $0x10] sm:$0xff] %v357
      %374 = vst [vmem:[#allocation2 + $0x18] sm:$0xff] %v358
      %375 = vst [vmem:[#allocation2 + $0x20] sm:$0xff] %v359
      %376 = vst [vmem:[#allocation2 + $0x28] sm:$0xff] %v360
      %377 = vst [vmem:[#allocation2 + $0x30] sm:$0xff] %v361
      %378 = vst [vmem:[#allocation2 + $0x38] sm:$0xff] %v362
      %v379 = vld [vmem:[%s290] sm:$0xf]
      %v380 = vld [vmem:[%s290 + $0x4] sm:$0xf]
      %v381 = vld [vmem:[%s290 + $0x8] sm:$0xf]
      %v382 = vld [vmem:[%s290 + $0xc] sm:$0xf]
      %v387 = vunpack.c.l.b16 %v379
      %v388 = vunpack.c.l.b16 %v380
      %v389 = vunpack.c.l.b16 %v381
      %v390 = vunpack.c.l.b16 %v382
      %v391 = vpack.c.b16 %v388, %v387
      %v392 = vpack.c.b16 %v390, %v389
      %395 = vst [vmem:[#allocation2 + $0x40] sm:$0xff] %v391
      %396 = vst [vmem:[#allocation2 + $0x48] sm:$0xff] %v392
      %v397 = vld [vmem:[#allocation2] sm:$0xff]
      %v398 = vld [vmem:[#allocation2 + $0x8] sm:$0xff]
      %v399 = vld [vmem:[#allocation2 + $0x10] sm:$0xff]
      %v400 = vld [vmem:[#allocation2 + $0x18] sm:$0xff]
      %v401 = vld [vmem:[#allocation2 + $0x20] sm:$0xff]
      %v402 = vld [vmem:[#allocation2 + $0x28] sm:$0xff]
      %v403 = vld [vmem:[#allocation2 + $0x30] sm:$0xff]
      %v404 = vld [vmem:[#allocation2 + $0x38] sm:$0xff]
      %v405 = vld [vmem:[%s2] sm:$0xf]
      %v406 = vld [vmem:[%s2 + $0x4] sm:$0xf]
      %v407 = vld [vmem:[%s2 + $0x8] sm:$0xf]
      %v408 = vld [vmem:[%s2 + $0xc] sm:$0xf]
      %v409 = vld [vmem:[%s2 + $0x10] sm:$0xf]
      %v410 = vld [vmem:[%s2 + $0x14] sm:$0xf]
      %v411 = vld [vmem:[%s2 + $0x18] sm:$0xf]
      %v412 = vld [vmem:[%s2 + $0x1c] sm:$0xf]
      %v413 = vld [vmem:[%s2 + $0x20] sm:$0xf]
      %v414 = vld [vmem:[%s2 + $0x24] sm:$0xf]
      %v415 = vld [vmem:[%s2 + $0x28] sm:$0xf]
      %v416 = vld [vmem:[%s2 + $0x2c] sm:$0xf]
      %v417 = vld [vmem:[%s2 + $0x30] sm:$0xf]
      %v418 = vld [vmem:[%s2 + $0x34] sm:$0xf]
      %v419 = vld [vmem:[%s2 + $0x38] sm:$0xf]
      %v420 = vld [vmem:[%s2 + $0x3c] sm:$0xf]
      %v421 = vld [vmem:[#allocation2 + $0x40] sm:$0x1]
      %v422 = vld [vmem:[%s2 + $0x40] sm:$0xf]
      %v423 = vld [vmem:[%s2 + $0x44] sm:$0xf]
      %v424 = vld [vmem:[%s2 + $0x48] sm:$0xf]
      %v425 = vld [vmem:[%s2 + $0x4c] sm:$0xf]
      %v426 = vld [vmem:[%s2 + $0x50] sm:$0xf]
      %v427 = vld [vmem:[%s2 + $0x54] sm:$0xf]
      %v428 = vld [vmem:[%s2 + $0x58] sm:$0xf]
      %v429 = vld [vmem:[%s2 + $0x5c] sm:$0xf]
      %v430 = vld [vmem:[%s2 + $0x60] sm:$0xf]
      %v431 = vld [vmem:[%s2 + $0x64] sm:$0xf]
      %v432 = vld [vmem:[%s2 + $0x68] sm:$0xf]
      %v433 = vld [vmem:[%s2 + $0x6c] sm:$0xf]
      %v434 = vld [vmem:[%s2 + $0x70] sm:$0xf]
      %v435 = vld [vmem:[%s2 + $0x74] sm:$0xf]
      %v436 = vld [vmem:[%s2 + $0x78] sm:$0xf]
      %v437 = vld [vmem:[%s2 + $0x7c] sm:$0xf]
      %vm438 = vsmask.f32 7424
      %v440 = vshrl.u32 %v397, 16
      %v442 = vshll.u32 %v397, 16
      %v444 = vrot.slane %v442, 1
      %v445 = vor.u32 %v440, %v444
      %v447 = vshll.u32 %v398, 16
      %v449 = vrot.slane %v447, 1
      %v450 = vsel %vm438, %v445, %v449
      %v451 = vshrl.u32 %v398, 16
      %v453 = vor.u32 %v451, %v449
      %v455 = vshll.u32 %v399, 16
      %v457 = vrot.slane %v455, 1
      %v458 = vsel %vm438, %v453, %v457
      %v459 = vshrl.u32 %v399, 16
      %v461 = vor.u32 %v459, %v457
      %v463 = vshll.u32 %v400, 16
      %v465 = vrot.slane %v463, 1
      %v466 = vsel %vm438, %v461, %v465
      %v467 = vshrl.u32 %v400, 16
      %v469 = vor.u32 %v467, %v465
      %v471 = vshll.u32 %v401, 16
      %v473 = vrot.slane %v471, 1
      %v474 = vsel %vm438, %v469, %v473
      %v475 = vshrl.u32 %v401, 16
      %v477 = vor.u32 %v475, %v473
      %v479 = vshll.u32 %v402, 16
      %v481 = vrot.slane %v479, 1
      %v482 = vsel %vm438, %v477, %v481
      %v483 = vshrl.u32 %v402, 16
      %v485 = vor.u32 %v483, %v481
      %v487 = vshll.u32 %v403, 16
      %v489 = vrot.slane %v487, 1
      %v490 = vsel %vm438, %v485, %v489
      %v491 = vshrl.u32 %v403, 16
      %v493 = vor.u32 %v491, %v489
      %v495 = vshll.u32 %v404, 16
      %v497 = vrot.slane %v495, 1
      %v498 = vsel %vm438, %v493, %v497
      %v499 = vshrl.u32 %v404, 16
      %v501 = vor.u32 %v499, %v497
      %v503 = vshll.u32 %v421, 16
      %v505 = vrot.slane %v503, 1
      %v506 = vsel %vm438, %v501, %v505
      %v531 = vunpack.c.l.b16 %v422
      %v532 = vunpack.c.l.b16 %v423
      %v533 = vunpack.c.l.b16 %v424
      %v534 = vunpack.c.l.b16 %v425
      %v535 = vunpack.c.l.b16 %v426
      %v536 = vunpack.c.l.b16 %v427
      %v537 = vunpack.c.l.b16 %v428
      %v538 = vunpack.c.l.b16 %v429
      %v539 = vunpack.c.l.b16 %v430
      %v540 = vunpack.c.l.b16 %v431
      %v541 = vunpack.c.l.b16 %v432
      %v542 = vunpack.c.l.b16 %v433
      %v543 = vunpack.c.l.b16 %v434
      %v544 = vunpack.c.l.b16 %v435
      %v545 = vunpack.c.l.b16 %v436
      %v546 = vunpack.c.l.b16 %v437
      %v547 = vpack.c.b16 %v532, %v531
      %v548 = vpack.c.b16 %v534, %v533
      %v549 = vpack.c.b16 %v536, %v535
      %v550 = vpack.c.b16 %v538, %v537
      %v551 = vpack.c.b16 %v540, %v539
      %v552 = vpack.c.b16 %v542, %v541
      %v553 = vpack.c.b16 %v544, %v543
      %v554 = vpack.c.b16 %v546, %v545
      %563 = vmatprep.subr.bf16.mxu0 0
      %564 = vmatpush1.bf16.msra.mxu0 %v547
      %565 = vmatprep.subr.bf16.mxu0 0
      %566 = vmatpush1.bf16.msra.mxu0 %v548
      %567 = vmatprep.subr.bf16.mxu0 0
      %568 = vmatpush1.bf16.msra.mxu0 %v549
      %569 = vmatprep.subr.bf16.mxu0 0
      %570 = vmatpush1.bf16.msra.mxu0 %v550
      %571 = vmatprep.subr.bf16.mxu0 0
      %572 = vmatpush1.bf16.msra.mxu0 %v551
      %573 = vmatprep.subr.bf16.mxu0 0
      %574 = vmatpush1.bf16.msra.mxu0 %v552
      %575 = vmatprep.subr.bf16.mxu0 0
      %576 = vmatpush1.bf16.msra.mxu0 %v553
      %577 = vmatprep.subr.bf16.mxu0 0
      %578 = vmatpush1.bf16.msra.mxu0 %v554
      %579 = vmatprep.subr.bf16.mxu0 0
      %580 = vmatpush1.bf16.msra.mxu0 0
      %581 = vmatprep.subr.bf16.mxu0 0
      %582 = vmatpush1.bf16.msra.mxu0 0
      %583 = vmatprep.subr.bf16.mxu0 0
      %584 = vmatpush1.bf16.msra.mxu0 0
      %585 = vmatprep.subr.bf16.mxu0 0
      %586 = vmatpush1.bf16.msra.mxu0 0
      %587 = vmatprep.subr.bf16.mxu0 0
      %588 = vmatpush1.bf16.msra.mxu0 0
      %589 = vmatprep.subr.bf16.mxu0 0
      %590 = vmatpush1.bf16.msra.mxu0 0
      %591 = vmatprep.subr.bf16.mxu0 0
      %592 = vmatpush1.bf16.msra.mxu0 0
      %593 = vmatprep.subr.bf16.mxu0 0
      %594 = vmatpush1.bf16.msra.mxu0 0
      %595 = vmatprep.mubr.bf16.mxu0 0
      %596 = vmatmul.mubr.bf16.gmra.mrb[0].mxu0 %v450
      %v597 = vpop.f32.mrb[0].mxu0
      %v598 = vadd.f32 0.0, %v597
      %v599 = vpop.f32.mrb[0].mxu0
      %v600 = vpop.f32.mrb[0].mxu0
      %v601 = vadd.f32 0.0, %v600
      %v602 = vpop.f32.mrb[0].mxu0
      %603 = vmatprep.mubr.bf16.mxu0 0
      %604 = vmatmul.mubr.bf16.gmra.mrb[0].mxu0 %v458
      %v605 = vpop.f32.mrb[0].mxu0
      %v606 = vadd.f32 0.0, %v605
      %v607 = vpop.f32.mrb[0].mxu0
      %v608 = vpop.f32.mrb[0].mxu0
      %v609 = vadd.f32 0.0, %v608
      %v610 = vpop.f32.mrb[0].mxu0
      %611 = vmatprep.mubr.bf16.mxu0 0
      %612 = vmatmul.mubr.bf16.gmra.mrb[0].mxu0 %v466
      %v613 = vpop.f32.mrb[0].mxu0
      %v614 = vadd.f32 0.0, %v613
      %v615 = vpop.f32.mrb[0].mxu0
      %v616 = vpop.f32.mrb[0].mxu0
      %v617 = vadd.f32 0.0, %v616
      %v618 = vpop.f32.mrb[0].mxu0
      %619 = vmatprep.mubr.bf16.mxu0 0
      %620 = vmatmul.mubr.bf16.gmra.mrb[0].mxu0 %v474
      %v621 = vpop.f32.mrb[0].mxu0
      %v622 = vadd.f32 0.0, %v621
      %v623 = vpop.f32.mrb[0].mxu0
      %v624 = vpop.f32.mrb[0].mxu0
      %v625 = vadd.f32 0.0, %v624
      %v626 = vpop.f32.mrb[0].mxu0
      %627 = vmatprep.mubr.bf16.mxu0 0
      %628 = vmatmul.mubr.bf16.gmra.mrb[0].mxu0 %v482
      %v629 = vpop.f32.mrb[0].mxu0
      %v630 = vadd.f32 0.0, %v629
      %v631 = vpop.f32.mrb[0].mxu0
      %v632 = vpop.f32.mrb[0].mxu0
      %v633 = vadd.f32 0.0, %v632
      %v634 = vpop.f32.mrb[0].mxu0
      %635 = vmatprep.mubr.bf16.mxu0 0
      %636 = vmatmul.mubr.bf16.gmra.mrb[0].mxu0 %v490
      %v637 = vpop.f32.mrb[0].mxu0
      %v638 = vadd.f32 0.0, %v637
      %v639 = vpop.f32.mrb[0].mxu0
      %v640 = vpop.f32.mrb[0].mxu0
      %v641 = vadd.f32 0.0, %v640
      %v642 = vpop.f32.mrb[0].mxu0
      %643 = vmatprep.mubr.bf16.mxu0 0
      %644 = vmatmul.mubr.bf16.gmra.mrb[0].mxu0 %v498
      %v645 = vpop.f32.mrb[0].mxu0
      %v646 = vadd.f32 0.0, %v645
      %v647 = vpop.f32.mrb[0].mxu0
      %v648 = vpop.f32.mrb[0].mxu0
      %v649 = vadd.f32 0.0, %v648
      %v650 = vpop.f32.mrb[0].mxu0
      %651 = vmatprep.mubr.bf16.mxu0 0
      %652 = vmatmul.mubr.bf16.gmra.mrb[0].mxu0 %v506
      %v653 = vpop.f32.mrb[0].mxu0
      %v654 = vadd.f32 0.0, %v653
      %v655 = vpop.f32.mrb[0].mxu0
      %v656 = vpop.f32.mrb[0].mxu0
      %v657 = vadd.f32 0.0, %v656
      %v658 = vpop.f32.mrb[0].mxu0
      %659 = vdwg.mxu0
      %v676 = vunpack.c.l.b16 %v405
      %v677 = vunpack.c.l.b16 %v406
      %v678 = vunpack.c.l.b16 %v407
      %v679 = vunpack.c.l.b16 %v408
      %v680 = vunpack.c.l.b16 %v409
      %v681 = vunpack.c.l.b16 %v410
      %v682 = vunpack.c.l.b16 %v411
      %v683 = vunpack.c.l.b16 %v412
      %v684 = vunpack.c.l.b16 %v413
      %v685 = vunpack.c.l.b16 %v414
      %v686 = vunpack.c.l.b16 %v415
      %v687 = vunpack.c.l.b16 %v416
      %v688 = vunpack.c.l.b16 %v417
      %v689 = vunpack.c.l.b16 %v418
      %v690 = vunpack.c.l.b16 %v419
      %v691 = vunpack.c.l.b16 %v420
      %v692 = vpack.c.b16 %v677, %v676
      %v693 = vpack.c.b16 %v679, %v678
      %v694 = vpack.c.b16 %v681, %v680
      %v695 = vpack.c.b16 %v683, %v682
      %v696 = vpack.c.b16 %v685, %v684
      %v697 = vpack.c.b16 %v687, %v686
      %v698 = vpack.c.b16 %v689, %v688
      %v699 = vpack.c.b16 %v691, %v690
      %708 = vmatprep.subr.bf16.mxu0 0
      %709 = vmatpush1.bf16.msra.mxu0 %v692
      %710 = vmatprep.subr.bf16.mxu0 0
      %711 = vmatpush1.bf16.msra.mxu0 %v693
      %712 = vmatprep.subr.bf16.mxu0 0
      %713 = vmatpush1.bf16.msra.mxu0 %v694
      %714 = vmatprep.subr.bf16.mxu0 0
      %715 = vmatpush1.bf16.msra.mxu0 %v695
      %716 = vmatprep.subr.bf16.mxu0 0
      %717 = vmatpush1.bf16.msra.mxu0 %v696
      %718 = vmatprep.subr.bf16.mxu0 0
      %719 = vmatpush1.bf16.msra.mxu0 %v697
      %720 = vmatprep.subr.bf16.mxu0 0
      %721 = vmatpush1.bf16.msra.mxu0 %v698
      %722 = vmatprep.subr.bf16.mxu0 0
      %723 = vmatpush1.bf16.msra.mxu0 %v699
      %724 = vmatprep.subr.bf16.mxu0 0
      %725 = vmatpush1.bf16.msra.mxu0 0
      %726 = vmatprep.subr.bf16.mxu0 0
      %727 = vmatpush1.bf16.msra.mxu0 0
      %728 = vmatprep.subr.bf16.mxu0 0
      %729 = vmatpush1.bf16.msra.mxu0 0
      %730 = vmatprep.subr.bf16.mxu0 0
      %731 = vmatpush1.bf16.msra.mxu0 0
      %732 = vmatprep.subr.bf16.mxu0 0
      %733 = vmatpush1.bf16.msra.mxu0 0
      %734 = vmatprep.subr.bf16.mxu0 0
      %735 = vmatpush1.bf16.msra.mxu0 0
      %736 = vmatprep.subr.bf16.mxu0 0
      %737 = vmatpush1.bf16.msra.mxu0 0
      %738 = vmatprep.subr.bf16.mxu0 0
      %739 = vmatpush1.bf16.msra.mxu0 0
      %740 = vmatprep.mubr.bf16.mxu0 0
      %741 = vmatmul.mubr.bf16.gmra.mrb[0].mxu0 %v397
      %v742 = vpop.f32.mrb[0].mxu0
      %v743 = vadd.f32 %v598, %v742
      %v744 = vpop.f32.mrb[0].mxu0
      %v745 = vpop.f32.mrb[0].mxu0
      %v746 = vadd.f32 %v601, %v745
      %v747 = vpop.f32.mrb[0].mxu0
      %748 = vmatprep.mubr.bf16.mxu0 0
      %749 = vmatmul.mubr.bf16.gmra.mrb[0].mxu0 %v398
      %v750 = vpop.f32.mrb[0].mxu0
      %v751 = vadd.f32 %v606, %v750
      %v752 = vpop.f32.mrb[0].mxu0
      %v753 = vpop.f32.mrb[0].mxu0
      %v754 = vadd.f32 %v609, %v753
      %v755 = vpop.f32.mrb[0].mxu0
      %756 = vmatprep.mubr.bf16.mxu0 0
      %757 = vmatmul.mubr.bf16.gmra.mrb[0].mxu0 %v399
      %v758 = vpop.f32.mrb[0].mxu0
      %v759 = vadd.f32 %v614, %v758
      %v760 = vpop.f32.mrb[0].mxu0
      %v761 = vpop.f32.mrb[0].mxu0
      %v762 = vadd.f32 %v617, %v761
      %v763 = vpop.f32.mrb[0].mxu0
      %764 = vmatprep.mubr.bf16.mxu0 0
      %765 = vmatmul.mubr.bf16.gmra.mrb[0].mxu0 %v400
      %v766 = vpop.f32.mrb[0].mxu0
      %v767 = vadd.f32 %v622, %v766
      %v768 = vpop.f32.mrb[0].mxu0
      %v769 = vpop.f32.mrb[0].mxu0
      %v770 = vadd.f32 %v625, %v769
      %v771 = vpop.f32.mrb[0].mxu0
      %772 = vmatprep.mubr.bf16.mxu0 0
      %773 = vmatmul.mubr.bf16.gmra.mrb[0].mxu0 %v401
      %v774 = vpop.f32.mrb[0].mxu0
      %v775 = vadd.f32 %v630, %v774
      %v776 = vpop.f32.mrb[0].mxu0
      %v777 = vpop.f32.mrb[0].mxu0
      %v778 = vadd.f32 %v633, %v777
      %v779 = vpop.f32.mrb[0].mxu0
      %780 = vmatprep.mubr.bf16.mxu0 0
      %781 = vmatmul.mubr.bf16.gmra.mrb[0].mxu0 %v402
      %v782 = vpop.f32.mrb[0].mxu0
      %v783 = vadd.f32 %v638, %v782
      %v784 = vpop.f32.mrb[0].mxu0
      %v785 = vpop.f32.mrb[0].mxu0
      %v786 = vadd.f32 %v641, %v785
      %v787 = vpop.f32.mrb[0].mxu0
      %788 = vmatprep.mubr.bf16.mxu0 0
      %789 = vmatmul.mubr.bf16.gmra.mrb[0].mxu0 %v403
      %v790 = vpop.f32.mrb[0].mxu0
      %v791 = vadd.f32 %v646, %v790
      %v792 = vpop.f32.mrb[0].mxu0
      %v793 = vpop.f32.mrb[0].mxu0
      %v794 = vadd.f32 %v649, %v793
      %v795 = vpop.f32.mrb[0].mxu0
      %796 = vmatprep.mubr.bf16.mxu0 0
      %797 = vmatmul.mubr.bf16.gmra.mrb[0].mxu0 %v404
      %v798 = vpop.f32.mrb[0].mxu0
      %v799 = vadd.f32 %v654, %v798
      %v800 = vpop.f32.mrb[0].mxu0
      %v801 = vpop.f32.mrb[0].mxu0
      %v802 = vadd.f32 %v657, %v801
      %v803 = vpop.f32.mrb[0].mxu0
      %804 = vdwg.mxu0
      %v805 = vld [vmem:[#allocation2] sm:$0xfe]
      %v806 = vld [vmem:[%s2 + $0x80] sm:$0xf]
      %v807 = vld [vmem:[%s2 + $0x84] sm:$0xf]
      %v808 = vld [vmem:[%s2 + $0x88] sm:$0xf]
      %v809 = vld [vmem:[%s2 + $0x8c] sm:$0xf]
      %v810 = vld [vmem:[%s2 + $0x90] sm:$0xf]
      %v811 = vld [vmem:[%s2 + $0x94] sm:$0xf]
      %v812 = vld [vmem:[%s2 + $0x98] sm:$0xf]
      %v813 = vld [vmem:[%s2 + $0x9c] sm:$0xf]
      %v814 = vld [vmem:[%s2 + $0xa0] sm:$0xf]
      %v815 = vld [vmem:[%s2 + $0xa4] sm:$0xf]
      %v816 = vld [vmem:[%s2 + $0xa8] sm:$0xf]
      %v817 = vld [vmem:[%s2 + $0xac] sm:$0xf]
      %v818 = vld [vmem:[%s2 + $0xb0] sm:$0xf]
      %v819 = vld [vmem:[%s2 + $0xb4] sm:$0xf]
      %v820 = vld [vmem:[%s2 + $0xb8] sm:$0xf]
      %v821 = vld [vmem:[%s2 + $0xbc] sm:$0xf]
      %vm831 = vcmask 1046528
      %v832 = vrot.slane %v805, 1
      %v833 = vrot.slane %v398, 1
      %v834 = vsel %vm831, %v832, %v833
      %v835 = vrot.slane %v399, 1
      %v836 = vsel %vm831, %v833, %v835
      %v837 = vrot.slane %v400, 1
      %v838 = vsel %vm831, %v835, %v837
      %v839 = vrot.slane %v401, 1
      %v840 = vsel %vm831, %v837, %v839
      %v841 = vrot.slane %v402, 1
      %v842 = vsel %vm831, %v839, %v841
      %v843 = vrot.slane %v403, 1
      %v844 = vsel %vm831, %v841, %v843
      %v845 = vrot.slane %v404, 1
      %v846 = vsel %vm831, %v843, %v845
      %v847 = vrot.slane %v421, 1
      %v848 = vsel %vm831, %v845, %v847
      %v873 = vunpack.c.l.b16 %v806
      %v874 = vunpack.c.l.b16 %v807
      %v875 = vunpack.c.l.b16 %v808
      %v876 = vunpack.c.l.b16 %v809
      %v877 = vunpack.c.l.b16 %v810
      %v878 = vunpack.c.l.b16 %v811
      %v879 = vunpack.c.l.b16 %v812
      %v880 = vunpack.c.l.b16 %v813
      %v881 = vunpack.c.l.b16 %v814
      %v882 = vunpack.c.l.b16 %v815
      %v883 = vunpack.c.l.b16 %v816
      %v884 = vunpack.c.l.b16 %v817
      %v885 = vunpack.c.l.b16 %v818
      %v886 = vunpack.c.l.b16 %v819
      %v887 = vunpack.c.l.b16 %v820
      %v888 = vunpack.c.l.b16 %v821
      %v889 = vpack.c.b16 %v874, %v873
      %v890 = vpack.c.b16 %v876, %v875
      %v891 = vpack.c.b16 %v878, %v877
      %v892 = vpack.c.b16 %v880, %v879
      %v893 = vpack.c.b16 %v882, %v881
      %v894 = vpack.c.b16 %v884, %v883
      %v895 = vpack.c.b16 %v886, %v885
      %v896 = vpack.c.b16 %v888, %v887
      %905 = vmatprep.subr.bf16.mxu0 0
      %906 = vmatpush1.bf16.msra.mxu0 %v889
      %907 = vmatprep.subr.bf16.mxu0 0
      %908 = vmatpush1.bf16.msra.mxu0 %v890
      %909 = vmatprep.subr.bf16.mxu0 0
      %910 = vmatpush1.bf16.msra.mxu0 %v891
      %911 = vmatprep.subr.bf16.mxu0 0
      %912 = vmatpush1.bf16.msra.mxu0 %v892
      %913 = vmatprep.subr.bf16.mxu0 0
      %914 = vmatpush1.bf16.msra.mxu0 %v893
      %915 = vmatprep.subr.bf16.mxu0 0
      %916 = vmatpush1.bf16.msra.mxu0 %v894
      %917 = vmatprep.subr.bf16.mxu0 0
      %918 = vmatpush1.bf16.msra.mxu0 %v895
      %919 = vmatprep.subr.bf16.mxu0 0
      %920 = vmatpush1.bf16.msra.mxu0 %v896
      %921 = vmatprep.subr.bf16.mxu0 0
      %922 = vmatpush1.bf16.msra.mxu0 0
      %923 = vmatprep.subr.bf16.mxu0 0
      %924 = vmatpush1.bf16.msra.mxu0 0
      %925 = vmatprep.subr.bf16.mxu0 0
      %926 = vmatpush1.bf16.msra.mxu0 0
      %927 = vmatprep.subr.bf16.mxu0 0
      %928 = vmatpush1.bf16.msra.mxu0 0
      %929 = vmatprep.subr.bf16.mxu0 0
      %930 = vmatpush1.bf16.msra.mxu0 0
      %931 = vmatprep.subr.bf16.mxu0 0
      %932 = vmatpush1.bf16.msra.mxu0 0
      %933 = vmatprep.subr.bf16.mxu0 0
      %934 = vmatpush1.bf16.msra.mxu0 0
      %935 = vmatprep.subr.bf16.mxu0 0
      %936 = vmatpush1.bf16.msra.mxu0 0
      %937 = vmatprep.mubr.bf16.mxu0 0
      %938 = vmatmul.mubr.bf16.gmra.mrb[0].mxu0 %v834
      %v939 = vpop.f32.mrb[0].mxu0
      %v940 = vadd.f32 0.0, %v939
      %v941 = vpop.f32.mrb[0].mxu0
      %v942 = vpop.f32.mrb[0].mxu0
      %v943 = vadd.f32 0.0, %v942
      %v944 = vpop.f32.mrb[0].mxu0
      %945 = vmatprep.mubr.bf16.mxu0 0
      %946 = vmatmul.mubr.bf16.gmra.mrb[0].mxu0 %v836
      %v947 = vpop.f32.mrb[0].mxu0
      %v948 = vadd.f32 0.0, %v947
      %v949 = vpop.f32.mrb[0].mxu0
      %v950 = vpop.f32.mrb[0].mxu0
      %v951 = vadd.f32 0.0, %v950
      %v952 = vpop.f32.mrb[0].mxu0
      %953 = vmatprep.mubr.bf16.mxu0 0
      %954 = vmatmul.mubr.bf16.gmra.mrb[0].mxu0 %v838
      %v955 = vpop.f32.mrb[0].mxu0
      %v956 = vadd.f32 0.0, %v955
      %v957 = vpop.f32.mrb[0].mxu0
      %v958 = vpop.f32.mrb[0].mxu0
      %v959 = vadd.f32 0.0, %v958
      %v960 = vpop.f32.mrb[0].mxu0
      %961 = vmatprep.mubr.bf16.mxu0 0
      %962 = vmatmul.mubr.bf16.gmra.mrb[0].mxu0 %v840
      %v963 = vpop.f32.mrb[0].mxu0
      %v964 = vadd.f32 0.0, %v963
      %v965 = vpop.f32.mrb[0].mxu0
      %v966 = vpop.f32.mrb[0].mxu0
      %v967 = vadd.f32 0.0, %v966
      %v968 = vpop.f32.mrb[0].mxu0
      %969 = vmatprep.mubr.bf16.mxu0 0
      %970 = vmatmul.mubr.bf16.gmra.mrb[0].mxu0 %v842
      %v971 = vpop.f32.mrb[0].mxu0
      %v972 = vadd.f32 0.0, %v971
      %v973 = vpop.f32.mrb[0].mxu0
      %v974 = vpop.f32.mrb[0].mxu0
      %v975 = vadd.f32 0.0, %v974
      %v976 = vpop.f32.mrb[0].mxu0
      %977 = vmatprep.mubr.bf16.mxu0 0
      %978 = vmatmul.mubr.bf16.gmra.mrb[0].mxu0 %v844
      %v979 = vpop.f32.mrb[0].mxu0
      %v980 = vadd.f32 0.0, %v979
      %v981 = vpop.f32.mrb[0].mxu0
      %v982 = vpop.f32.mrb[0].mxu0
      %v983 = vadd.f32 0.0, %v982
      %v984 = vpop.f32.mrb[0].mxu0
      %985 = vmatprep.mubr.bf16.mxu0 0
      %986 = vmatmul.mubr.bf16.gmra.mrb[0].mxu0 %v846
      %v987 = vpop.f32.mrb[0].mxu0
      %v988 = vadd.f32 0.0, %v987
      %v989 = vpop.f32.mrb[0].mxu0
      %v990 = vpop.f32.mrb[0].mxu0
      %v991 = vadd.f32 0.0, %v990
      %v992 = vpop.f32.mrb[0].mxu0
      %993 = vmatprep.mubr.bf16.mxu0 0
      %994 = vmatmul.mubr.bf16.gmra.mrb[0].mxu0 %v848
      %v995 = vpop.f32.mrb[0].mxu0
      %v996 = vadd.f32 0.0, %v995
      %v997 = vpop.f32.mrb[0].mxu0
      %v998 = vpop.f32.mrb[0].mxu0
      %v999 = vadd.f32 0.0, %v998
      %v1000 = vpop.f32.mrb[0].mxu0
      %1001 = vdwg.mxu0
      %v1002 = vadd.f32 %v743, %v940
      %v1003 = vadd.f32 %v746, %v943
      %v1004 = vadd.f32 %v751, %v948
      %v1005 = vadd.f32 %v754, %v951
      %v1006 = vadd.f32 %v759, %v956
      %v1007 = vadd.f32 %v762, %v959
      %v1008 = vadd.f32 %v767, %v964
      %v1009 = vadd.f32 %v770, %v967
      %v1010 = vadd.f32 %v775, %v972
      %v1011 = vadd.f32 %v778, %v975
      %v1012 = vadd.f32 %v783, %v980
      %v1013 = vadd.f32 %v786, %v983
      %v1014 = vadd.f32 %v791, %v988
      %v1015 = vadd.f32 %v794, %v991
      %v1016 = vadd.f32 %v799, %v996
      %v1017 = vadd.f32 %v802, %v999
      %v1018 = vld [vmem:[#allocation2] sm:$0xe0]
      %v1019 = vld [vmem:[#allocation2 + $0x40] sm:$0x1f]
      %v1020 = vld [vmem:[%s2 + $0xc0] sm:$0xf]
      %v1021 = vld [vmem:[%s2 + $0xc4] sm:$0xf]
      %v1022 = vld [vmem:[%s2 + $0xc8] sm:$0xf]
      %v1023 = vld [vmem:[%s2 + $0xcc] sm:$0xf]
      %v1024 = vld [vmem:[%s2 + $0xd0] sm:$0xf]
      %v1025 = vld [vmem:[%s2 + $0xd4] sm:$0xf]
      %v1026 = vld [vmem:[%s2 + $0xd8] sm:$0xf]
      %v1027 = vld [vmem:[%s2 + $0xdc] sm:$0xf]
      %v1028 = vld [vmem:[%s2 + $0xe0] sm:$0xf]
      %v1029 = vld [vmem:[%s2 + $0xe4] sm:$0xf]
      %v1030 = vld [vmem:[%s2 + $0xe8] sm:$0xf]
      %v1031 = vld [vmem:[%s2 + $0xec] sm:$0xf]
      %v1032 = vld [vmem:[%s2 + $0xf0] sm:$0xf]
      %v1033 = vld [vmem:[%s2 + $0xf4] sm:$0xf]
      %v1034 = vld [vmem:[%s2 + $0xf8] sm:$0xf]
      %v1035 = vld [vmem:[%s2 + $0xfc] sm:$0xf]
      %vm1038 = vcmask 1042432
      %v1039 = vrot.slane %v1018, 5
      %v1040 = vrot.slane %v398, 5
      %v1041 = vsel %vm1038, %v1039, %v1040
      %v1042 = vrot.slane %v399, 5
      %v1043 = vsel %vm1038, %v1040, %v1042
      %v1044 = vrot.slane %v400, 5
      %v1045 = vsel %vm1038, %v1042, %v1044
      %v1046 = vrot.slane %v401, 5
      %v1047 = vsel %vm1038, %v1044, %v1046
      %v1048 = vrot.slane %v402, 5
      %v1049 = vsel %vm1038, %v1046, %v1048
      %v1050 = vrot.slane %v403, 5
      %v1051 = vsel %vm1038, %v1048, %v1050
      %v1052 = vrot.slane %v404, 5
      %v1053 = vsel %vm1038, %v1050, %v1052
      %v1054 = vrot.slane %v1019, 5
      %v1055 = vsel %vm1038, %v1052, %v1054
      %v1080 = vunpack.c.l.b16 %v1020
      %v1081 = vunpack.c.l.b16 %v1021
      %v1082 = vunpack.c.l.b16 %v1022
      %v1083 = vunpack.c.l.b16 %v1023
      %v1084 = vunpack.c.l.b16 %v1024
      %v1085 = vunpack.c.l.b16 %v1025
      %v1086 = vunpack.c.l.b16 %v1026
      %v1087 = vunpack.c.l.b16 %v1027
      %v1088 = vunpack.c.l.b16 %v1028
      %v1089 = vunpack.c.l.b16 %v1029
      %v1090 = vunpack.c.l.b16 %v1030
      %v1091 = vunpack.c.l.b16 %v1031
      %v1092 = vunpack.c.l.b16 %v1032
      %v1093 = vunpack.c.l.b16 %v1033
      %v1094 = vunpack.c.l.b16 %v1034
      %v1095 = vunpack.c.l.b16 %v1035
      %v1096 = vpack.c.b16 %v1081, %v1080
      %v1097 = vpack.c.b16 %v1083, %v1082
      %v1098 = vpack.c.b16 %v1085, %v1084
      %v1099 = vpack.c.b16 %v1087, %v1086
      %v1100 = vpack.c.b16 %v1089, %v1088
      %v1101 = vpack.c.b16 %v1091, %v1090
      %v1102 = vpack.c.b16 %v1093, %v1092
      %v1103 = vpack.c.b16 %v1095, %v1094
      %1112 = vmatprep.subr.bf16.mxu0 0
      %1113 = vmatpush1.bf16.msra.mxu0 %v1096
      %1114 = vmatprep.subr.bf16.mxu0 0
      %1115 = vmatpush1.bf16.msra.mxu0 %v1097
      %1116 = vmatprep.subr.bf16.mxu0 0
      %1117 = vmatpush1.bf16.msra.mxu0 %v1098
      %1118 = vmatprep.subr.bf16.mxu0 0
      %1119 = vmatpush1.bf16.msra.mxu0 %v1099
      %1120 = vmatprep.subr.bf16.mxu0 0
      %1121 = vmatpush1.bf16.msra.mxu0 %v1100
      %1122 = vmatprep.subr.bf16.mxu0 0
      %1123 = vmatpush1.bf16.msra.mxu0 %v1101
      %1124 = vmatprep.subr.bf16.mxu0 0
      %1125 = vmatpush1.bf16.msra.mxu0 %v1102
      %1126 = vmatprep.subr.bf16.mxu0 0
      %1127 = vmatpush1.bf16.msra.mxu0 %v1103
      %1128 = vmatprep.subr.bf16.mxu0 0
      %1129 = vmatpush1.bf16.msra.mxu0 0
      %1130 = vmatprep.subr.bf16.mxu0 0
      %1131 = vmatpush1.bf16.msra.mxu0 0
      %1132 = vmatprep.subr.bf16.mxu0 0
      %1133 = vmatpush1.bf16.msra.mxu0 0
      %1134 = vmatprep.subr.bf16.mxu0 0
      %1135 = vmatpush1.bf16.msra.mxu0 0
      %1136 = vmatprep.subr.bf16.mxu0 0
      %1137 = vmatpush1.bf16.msra.mxu0 0
      %1138 = vmatprep.subr.bf16.mxu0 0
      %1139 = vmatpush1.bf16.msra.mxu0 0
      %1140 = vmatprep.subr.bf16.mxu0 0
      %1141 = vmatpush1.bf16.msra.mxu0 0
      %1142 = vmatprep.subr.bf16.mxu0 0
      %1143 = vmatpush1.bf16.msra.mxu0 0
      %1144 = vmatprep.mubr.bf16.mxu0 0
      %1145 = vmatmul.mubr.bf16.gmra.mrb[0].mxu0 %v1041
      %v1146 = vpop.f32.mrb[0].mxu0
      %v1147 = vadd.f32 0.0, %v1146
      %v1148 = vpop.f32.mrb[0].mxu0
      %v1149 = vpop.f32.mrb[0].mxu0
      %v1150 = vadd.f32 0.0, %v1149
      %v1151 = vpop.f32.mrb[0].mxu0
      %1152 = vmatprep.mubr.bf16.mxu0 0
      %1153 = vmatmul.mubr.bf16.gmra.mrb[0].mxu0 %v1043
      %v1154 = vpop.f32.mrb[0].mxu0
      %v1155 = vadd.f32 0.0, %v1154
      %v1156 = vpop.f32.mrb[0].mxu0
      %v1157 = vpop.f32.mrb[0].mxu0
      %v1158 = vadd.f32 0.0, %v1157
      %v1159 = vpop.f32.mrb[0].mxu0
      %1160 = vmatprep.mubr.bf16.mxu0 0
      %1161 = vmatmul.mubr.bf16.gmra.mrb[0].mxu0 %v1045
      %v1162 = vpop.f32.mrb[0].mxu0
      %v1163 = vadd.f32 0.0, %v1162
      %v1164 = vpop.f32.mrb[0].mxu0
      %v1165 = vpop.f32.mrb[0].mxu0
      %v1166 = vadd.f32 0.0, %v1165
      %v1167 = vpop.f32.mrb[0].mxu0
      %1168 = vmatprep.mubr.bf16.mxu0 0
      %1169 = vmatmul.mubr.bf16.gmra.mrb[0].mxu0 %v1047
      %v1170 = vpop.f32.mrb[0].mxu0
      %v1171 = vadd.f32 0.0, %v1170
      %v1172 = vpop.f32.mrb[0].mxu0
      %v1173 = vpop.f32.mrb[0].mxu0
      %v1174 = vadd.f32 0.0, %v1173
      %v1175 = vpop.f32.mrb[0].mxu0
      %1176 = vmatprep.mubr.bf16.mxu0 0
      %1177 = vmatmul.mubr.bf16.gmra.mrb[0].mxu0 %v1049
      %v1178 = vpop.f32.mrb[0].mxu0
      %v1179 = vadd.f32 0.0, %v1178
      %v1180 = vpop.f32.mrb[0].mxu0
      %v1181 = vpop.f32.mrb[0].mxu0
      %v1182 = vadd.f32 0.0, %v1181
      %v1183 = vpop.f32.mrb[0].mxu0
      %1184 = vmatprep.mubr.bf16.mxu0 0
      %1185 = vmatmul.mubr.bf16.gmra.mrb[0].mxu0 %v1051
      %v1186 = vpop.f32.mrb[0].mxu0
      %v1187 = vadd.f32 0.0, %v1186
      %v1188 = vpop.f32.mrb[0].mxu0
      %v1189 = vpop.f32.mrb[0].mxu0
      %v1190 = vadd.f32 0.0, %v1189
      %v1191 = vpop.f32.mrb[0].mxu0
      %1192 = vmatprep.mubr.bf16.mxu0 0
      %1193 = vmatmul.mubr.bf16.gmra.mrb[0].mxu0 %v1053
      %v1194 = vpop.f32.mrb[0].mxu0
      %v1195 = vadd.f32 0.0, %v1194
      %v1196 = vpop.f32.mrb[0].mxu0
      %v1197 = vpop.f32.mrb[0].mxu0
      %v1198 = vadd.f32 0.0, %v1197
      %v1199 = vpop.f32.mrb[0].mxu0
      %1200 = vmatprep.mubr.bf16.mxu0 0
      %1201 = vmatmul.mubr.bf16.gmra.mrb[0].mxu0 %v1055
      %v1202 = vpop.f32.mrb[0].mxu0
      %v1203 = vadd.f32 0.0, %v1202
      %v1204 = vpop.f32.mrb[0].mxu0
      %v1205 = vpop.f32.mrb[0].mxu0
      %v1206 = vadd.f32 0.0, %v1205
      %v1207 = vpop.f32.mrb[0].mxu0
      %1208 = vdwg.mxu0
      %v1209 = vadd.f32 %v1002, %v1147
      %v1210 = vadd.f32 %v1003, %v1150
      %v1211 = vadd.f32 %v1004, %v1155
      %v1212 = vadd.f32 %v1005, %v1158
      %v1213 = vadd.f32 %v1006, %v1163
      %v1214 = vadd.f32 %v1007, %v1166
      %v1215 = vadd.f32 %v1008, %v1171
      %v1216 = vadd.f32 %v1009, %v1174
      %v1217 = vadd.f32 %v1010, %v1179
      %v1218 = vadd.f32 %v1011, %v1182
      %v1219 = vadd.f32 %v1012, %v1187
      %v1220 = vadd.f32 %v1013, %v1190
      %v1221 = vadd.f32 %v1014, %v1195
      %v1222 = vadd.f32 %v1015, %v1198
      %v1223 = vadd.f32 %v1016, %v1203
      %v1224 = vadd.f32 %v1017, %v1206
      %v1225 = vld [vmem:[#allocation2 + $0x40] sm:$0x3f]
      %v1226 = vld [vmem:[%s2 + $0x100] sm:$0xf]
      %v1227 = vld [vmem:[%s2 + $0x104] sm:$0xf]
      %v1228 = vld [vmem:[%s2 + $0x108] sm:$0xf]
      %v1229 = vld [vmem:[%s2 + $0x10c] sm:$0xf]
      %v1230 = vld [vmem:[%s2 + $0x110] sm:$0xf]
      %v1231 = vld [vmem:[%s2 + $0x114] sm:$0xf]
      %v1232 = vld [vmem:[%s2 + $0x118] sm:$0xf]
      %v1233 = vld [vmem:[%s2 + $0x11c] sm:$0xf]
      %v1234 = vld [vmem:[%s2 + $0x120] sm:$0xf]
      %v1235 = vld [vmem:[%s2 + $0x124] sm:$0xf]
      %v1236 = vld [vmem:[%s2 + $0x128] sm:$0xf]
      %v1237 = vld [vmem:[%s2 + $0x12c] sm:$0xf]
      %v1238 = vld [vmem:[%s2 + $0x130] sm:$0xf]
      %v1239 = vld [vmem:[%s2 + $0x134] sm:$0xf]
      %v1240 = vld [vmem:[%s2 + $0x138] sm:$0xf]
      %v1241 = vld [vmem:[%s2 + $0x13c] sm:$0xf]
      %vm1242 = vsmask.f32 2304
      %v1244 = vshrl.u32 %v1018, 16
      %v1246 = vrot.slane %v1244, 5
      %v1247 = vshll.u32 %v1018, 16
      %v1249 = vrot.slane %v1247, 6
      %v1250 = vor.u32 %v1246, %v1249
      %v1251 = vrot.slane %v451, 5
      %v1252 = vrot.slane %v447, 6
      %v1253 = vor.u32 %v1251, %v1252
      %v1254 = vsel %vm1242, %v1250, %v1253
      %v1255 = vrot.slane %v459, 5
      %v1256 = vrot.slane %v455, 6
      %v1257 = vor.u32 %v1255, %v1256
      %v1258 = vsel %vm1242, %v1253, %v1257
      %v1259 = vrot.slane %v467, 5
      %v1260 = vrot.slane %v463, 6
      %v1261 = vor.u32 %v1259, %v1260
      %v1262 = vsel %vm1242, %v1257, %v1261
      %v1263 = vrot.slane %v475, 5
      %v1264 = vrot.slane %v471, 6
      %v1265 = vor.u32 %v1263, %v1264
      %v1266 = vsel %vm1242, %v1261, %v1265
      %v1267 = vrot.slane %v483, 5
      %v1268 = vrot.slane %v479, 6
      %v1269 = vor.u32 %v1267, %v1268
      %v1270 = vsel %vm1242, %v1265, %v1269
      %v1271 = vrot.slane %v491, 5
      %v1272 = vrot.slane %v487, 6
      %v1273 = vor.u32 %v1271, %v1272
      %v1274 = vsel %vm1242, %v1269, %v1273
      %v1275 = vrot.slane %v499, 5
      %v1276 = vrot.slane %v495, 6
      %v1277 = vor.u32 %v1275, %v1276
      %v1278 = vsel %vm1242, %v1273, %v1277
      %v1280 = vshrl.u32 %v1225, 16
      %v1282 = vrot.slane %v1280, 5
      %v1283 = vshll.u32 %v1225, 16
      %v1285 = vrot.slane %v1283, 6
      %v1286 = vor.u32 %v1282, %v1285
      %v1287 = vsel %vm1242, %v1277, %v1286
      %v1312 = vunpack.c.l.b16 %v1226
      %v1313 = vunpack.c.l.b16 %v1227
      %v1314 = vunpack.c.l.b16 %v1228
      %v1315 = vunpack.c.l.b16 %v1229
      %v1316 = vunpack.c.l.b16 %v1230
      %v1317 = vunpack.c.l.b16 %v1231
      %v1318 = vunpack.c.l.b16 %v1232
      %v1319 = vunpack.c.l.b16 %v1233
      %v1320 = vunpack.c.l.b16 %v1234
      %v1321 = vunpack.c.l.b16 %v1235
      %v1322 = vunpack.c.l.b16 %v1236
      %v1323 = vunpack.c.l.b16 %v1237
      %v1324 = vunpack.c.l.b16 %v1238
      %v1325 = vunpack.c.l.b16 %v1239
      %v1326 = vunpack.c.l.b16 %v1240
      %v1327 = vunpack.c.l.b16 %v1241
      %v1328 = vpack.c.b16 %v1313, %v1312
      %v1329 = vpack.c.b16 %v1315, %v1314
      %v1330 = vpack.c.b16 %v1317, %v1316
      %v1331 = vpack.c.b16 %v1319, %v1318
      %v1332 = vpack.c.b16 %v1321, %v1320
      %v1333 = vpack.c.b16 %v1323, %v1322
      %v1334 = vpack.c.b16 %v1325, %v1324
      %v1335 = vpack.c.b16 %v1327, %v1326
      %1344 = vmatprep.subr.bf16.mxu0 0
      %1345 = vmatpush1.bf16.msra.mxu0 %v1328
      %1346 = vmatprep.subr.bf16.mxu0 0
      %1347 = vmatpush1.bf16.msra.mxu0 %v1329
      %1348 = vmatprep.subr.bf16.mxu0 0
      %1349 = vmatpush1.bf16.msra.mxu0 %v1330
      %1350 = vmatprep.subr.bf16.mxu0 0
      %1351 = vmatpush1.bf16.msra.mxu0 %v1331
      %1352 = vmatprep.subr.bf16.mxu0 0
      %1353 = vmatpush1.bf16.msra.mxu0 %v1332
      %1354 = vmatprep.subr.bf16.mxu0 0
      %1355 = vmatpush1.bf16.msra.mxu0 %v1333
      %1356 = vmatprep.subr.bf16.mxu0 0
      %1357 = vmatpush1.bf16.msra.mxu0 %v1334
      %1358 = vmatprep.subr.bf16.mxu0 0
      %1359 = vmatpush1.bf16.msra.mxu0 %v1335
      %1360 = vmatprep.subr.bf16.mxu0 0
      %1361 = vmatpush1.bf16.msra.mxu0 0
      %1362 = vmatprep.subr.bf16.mxu0 0
      %1363 = vmatpush1.bf16.msra.mxu0 0
      %1364 = vmatprep.subr.bf16.mxu0 0
      %1365 = vmatpush1.bf16.msra.mxu0 0
      %1366 = vmatprep.subr.bf16.mxu0 0
      %1367 = vmatpush1.bf16.msra.mxu0 0
      %1368 = vmatprep.subr.bf16.mxu0 0
      %1369 = vmatpush1.bf16.msra.mxu0 0
      %1370 = vmatprep.subr.bf16.mxu0 0
      %1371 = vmatpush1.bf16.msra.mxu0 0
      %1372 = vmatprep.subr.bf16.mxu0 0
      %1373 = vmatpush1.bf16.msra.mxu0 0
      %1374 = vmatprep.subr.bf16.mxu0 0
      %1375 = vmatpush1.bf16.msra.mxu0 0
      %1376 = vmatprep.mubr.bf16.mxu0 0
      %1377 = vmatmul.mubr.bf16.gmra.mrb[0].mxu0 %v1254
      %v1378 = vpop.f32.mrb[0].mxu0
      %v1379 = vadd.f32 0.0, %v1378
      %v1380 = vpop.f32.mrb[0].mxu0
      %v1381 = vpop.f32.mrb[0].mxu0
      %v1382 = vadd.f32 0.0, %v1381
      %v1383 = vpop.f32.mrb[0].mxu0
      %1384 = vmatprep.mubr.bf16.mxu0 0
      %1385 = vmatmul.mubr.bf16.gmra.mrb[0].mxu0 %v1258
      %v1386 = vpop.f32.mrb[0].mxu0
      %v1387 = vadd.f32 0.0, %v1386
      %v1388 = vpop.f32.mrb[0].mxu0
      %v1389 = vpop.f32.mrb[0].mxu0
      %v1390 = vadd.f32 0.0, %v1389
      %v1391 = vpop.f32.mrb[0].mxu0
      %1392 = vmatprep.mubr.bf16.mxu0 0
      %1393 = vmatmul.mubr.bf16.gmra.mrb[0].mxu0 %v1262
      %v1394 = vpop.f32.mrb[0].mxu0
      %v1395 = vadd.f32 0.0, %v1394
      %v1396 = vpop.f32.mrb[0].mxu0
      %v1397 = vpop.f32.mrb[0].mxu0
      %v1398 = vadd.f32 0.0, %v1397
      %v1399 = vpop.f32.mrb[0].mxu0
      %1400 = vmatprep.mubr.bf16.mxu0 0
      %1401 = vmatmul.mubr.bf16.gmra.mrb[0].mxu0 %v1266
      %v1402 = vpop.f32.mrb[0].mxu0
      %v1403 = vadd.f32 0.0, %v1402
      %v1404 = vpop.f32.mrb[0].mxu0
      %v1405 = vpop.f32.mrb[0].mxu0
      %v1406 = vadd.f32 0.0, %v1405
      %v1407 = vpop.f32.mrb[0].mxu0
      %1408 = vmatprep.mubr.bf16.mxu0 0
      %1409 = vmatmul.mubr.bf16.gmra.mrb[0].mxu0 %v1270
      %v1410 = vpop.f32.mrb[0].mxu0
      %v1411 = vadd.f32 0.0, %v1410
      %v1412 = vpop.f32.mrb[0].mxu0
      %v1413 = vpop.f32.mrb[0].mxu0
      %v1414 = vadd.f32 0.0, %v1413
      %v1415 = vpop.f32.mrb[0].mxu0
      %1416 = vmatprep.mubr.bf16.mxu0 0
      %1417 = vmatmul.mubr.bf16.gmra.mrb[0].mxu0 %v1274
      %v1418 = vpop.f32.mrb[0].mxu0
      %v1419 = vadd.f32 0.0, %v1418
      %v1420 = vpop.f32.mrb[0].mxu0
      %v1421 = vpop.f32.mrb[0].mxu0
      %v1422 = vadd.f32 0.0, %v1421
      %v1423 = vpop.f32.mrb[0].mxu0
      %1424 = vmatprep.mubr.bf16.mxu0 0
      %1425 = vmatmul.mubr.bf16.gmra.mrb[0].mxu0 %v1278
      %v1426 = vpop.f32.mrb[0].mxu0
      %v1427 = vadd.f32 0.0, %v1426
      %v1428 = vpop.f32.mrb[0].mxu0
      %v1429 = vpop.f32.mrb[0].mxu0
      %v1430 = vadd.f32 0.0, %v1429
      %v1431 = vpop.f32.mrb[0].mxu0
      %1432 = vmatprep.mubr.bf16.mxu0 0
      %1433 = vmatmul.mubr.bf16.gmra.mrb[0].mxu0 %v1287
      %v1434 = vpop.f32.mrb[0].mxu0
      %v1435 = vadd.f32 0.0, %v1434
      %v1436 = vpop.f32.mrb[0].mxu0
      %v1437 = vpop.f32.mrb[0].mxu0
      %v1438 = vadd.f32 0.0, %v1437
      %v1439 = vpop.f32.mrb[0].mxu0
      %1440 = vdwg.mxu0
      %v1441 = vadd.f32 %v1209, %v1379
      %v1442 = vadd.f32 %v1210, %v1382
      %v1443 = vadd.f32 %v1211, %v1387
      %v1444 = vadd.f32 %v1212, %v1390
      %v1445 = vadd.f32 %v1213, %v1395
      %v1446 = vadd.f32 %v1214, %v1398
      %v1447 = vadd.f32 %v1215, %v1403
      %v1448 = vadd.f32 %v1216, %v1406
      %v1449 = vadd.f32 %v1217, %v1411
      %v1450 = vadd.f32 %v1218, %v1414
      %v1451 = vadd.f32 %v1219, %v1419
      %v1452 = vadd.f32 %v1220, %v1422
      %v1453 = vadd.f32 %v1221, %v1427
      %v1454 = vadd.f32 %v1222, %v1430
      %v1455 = vadd.f32 %v1223, %v1435
      %v1456 = vadd.f32 %v1224, %v1438
      %v1457 = vld [vmem:[#allocation2] sm:$0xc0]
      %v1458 = vld [vmem:[%s2 + $0x140] sm:$0xf]
      %v1459 = vld [vmem:[%s2 + $0x144] sm:$0xf]
      %v1460 = vld [vmem:[%s2 + $0x148] sm:$0xf]
      %v1461 = vld [vmem:[%s2 + $0x14c] sm:$0xf]
      %v1462 = vld [vmem:[%s2 + $0x150] sm:$0xf]
      %v1463 = vld [vmem:[%s2 + $0x154] sm:$0xf]
      %v1464 = vld [vmem:[%s2 + $0x158] sm:$0xf]
      %v1465 = vld [vmem:[%s2 + $0x15c] sm:$0xf]
      %v1466 = vld [vmem:[%s2 + $0x160] sm:$0xf]
      %v1467 = vld [vmem:[%s2 + $0x164] sm:$0xf]
      %v1468 = vld [vmem:[%s2 + $0x168] sm:$0xf]
      %v1469 = vld [vmem:[%s2 + $0x16c] sm:$0xf]
      %v1470 = vld [vmem:[%s2 + $0x170] sm:$0xf]
      %v1471 = vld [vmem:[%s2 + $0x174] sm:$0xf]
      %v1472 = vld [vmem:[%s2 + $0x178] sm:$0xf]
      %v1473 = vld [vmem:[%s2 + $0x17c] sm:$0xf]
      %vm1476 = vcmask 1041408
      %v1477 = vrot.slane %v1457, 6
      %v1478 = vrot.slane %v398, 6
      %v1479 = vsel %vm1476, %v1477, %v1478
      %v1480 = vrot.slane %v399, 6
      %v1481 = vsel %vm1476, %v1478, %v1480
      %v1482 = vrot.slane %v400, 6
      %v1483 = vsel %vm1476, %v1480, %v1482
      %v1484 = vrot.slane %v401, 6
      %v1485 = vsel %vm1476, %v1482, %v1484
      %v1486 = vrot.slane %v402, 6
      %v1487 = vsel %vm1476, %v1484, %v1486
      %v1488 = vrot.slane %v403, 6
      %v1489 = vsel %vm1476, %v1486, %v1488
      %v1490 = vrot.slane %v404, 6
      %v1491 = vsel %vm1476, %v1488, %v1490
      %v1492 = vrot.slane %v1225, 6
      %v1493 = vsel %vm1476, %v1490, %v1492
      %v1518 = vunpack.c.l.b16 %v1458
      %v1519 = vunpack.c.l.b16 %v1459
      %v1520 = vunpack.c.l.b16 %v1460
      %v1521 = vunpack.c.l.b16 %v1461
      %v1522 = vunpack.c.l.b16 %v1462
      %v1523 = vunpack.c.l.b16 %v1463
      %v1524 = vunpack.c.l.b16 %v1464
      %v1525 = vunpack.c.l.b16 %v1465
      %v1526 = vunpack.c.l.b16 %v1466
      %v1527 = vunpack.c.l.b16 %v1467
      %v1528 = vunpack.c.l.b16 %v1468
      %v1529 = vunpack.c.l.b16 %v1469
      %v1530 = vunpack.c.l.b16 %v1470
      %v1531 = vunpack.c.l.b16 %v1471
      %v1532 = vunpack.c.l.b16 %v1472
      %v1533 = vunpack.c.l.b16 %v1473
      %v1534 = vpack.c.b16 %v1519, %v1518
      %v1535 = vpack.c.b16 %v1521, %v1520
      %v1536 = vpack.c.b16 %v1523, %v1522
      %v1537 = vpack.c.b16 %v1525, %v1524
      %v1538 = vpack.c.b16 %v1527, %v1526
      %v1539 = vpack.c.b16 %v1529, %v1528
      %v1540 = vpack.c.b16 %v1531, %v1530
      %v1541 = vpack.c.b16 %v1533, %v1532
      %1550 = vmatprep.subr.bf16.mxu0 0
      %1551 = vmatpush1.bf16.msra.mxu0 %v1534
      %1552 = vmatprep.subr.bf16.mxu0 0
      %1553 = vmatpush1.bf16.msra.mxu0 %v1535
      %1554 = vmatprep.subr.bf16.mxu0 0
      %1555 = vmatpush1.bf16.msra.mxu0 %v1536
      %1556 = vmatprep.subr.bf16.mxu0 0
      %1557 = vmatpush1.bf16.msra.mxu0 %v1537
      %1558 = vmatprep.subr.bf16.mxu0 0
      %1559 = vmatpush1.bf16.msra.mxu0 %v1538
      %1560 = vmatprep.subr.bf16.mxu0 0
      %1561 = vmatpush1.bf16.msra.mxu0 %v1539
      %1562 = vmatprep.subr.bf16.mxu0 0
      %1563 = vmatpush1.bf16.msra.mxu0 %v1540
      %1564 = vmatprep.subr.bf16.mxu0 0
      %1565 = vmatpush1.bf16.msra.mxu0 %v1541
      %1566 = vmatprep.subr.bf16.mxu0 0
      %1567 = vmatpush1.bf16.msra.mxu0 0
      %1568 = vmatprep.subr.bf16.mxu0 0
      %1569 = vmatpush1.bf16.msra.mxu0 0
      %1570 = vmatprep.subr.bf16.mxu0 0
      %1571 = vmatpush1.bf16.msra.mxu0 0
      %1572 = vmatprep.subr.bf16.mxu0 0
      %1573 = vmatpush1.bf16.msra.mxu0 0
      %1574 = vmatprep.subr.bf16.mxu0 0
      %1575 = vmatpush1.bf16.msra.mxu0 0
      %1576 = vmatprep.subr.bf16.mxu0 0
      %1577 = vmatpush1.bf16.msra.mxu0 0
      %1578 = vmatprep.subr.bf16.mxu0 0
      %1579 = vmatpush1.bf16.msra.mxu0 0
      %1580 = vmatprep.subr.bf16.mxu0 0
      %1581 = vmatpush1.bf16.msra.mxu0 0
      %1582 = vmatprep.mubr.bf16.mxu0 0
      %1583 = vmatmul.mubr.bf16.gmra.mrb[0].mxu0 %v1479
      %v1584 = vpop.f32.mrb[0].mxu0
      %v1585 = vadd.f32 0.0, %v1584
      %v1586 = vpop.f32.mrb[0].mxu0
      %v1587 = vpop.f32.mrb[0].mxu0
      %v1588 = vadd.f32 0.0, %v1587
      %v1589 = vpop.f32.mrb[0].mxu0
      %1590 = vmatprep.mubr.bf16.mxu0 0
      %1591 = vmatmul.mubr.bf16.gmra.mrb[0].mxu0 %v1481
      %v1592 = vpop.f32.mrb[0].mxu0
      %v1593 = vadd.f32 0.0, %v1592
      %v1594 = vpop.f32.mrb[0].mxu0
      %v1595 = vpop.f32.mrb[0].mxu0
      %v1596 = vadd.f32 0.0, %v1595
      %v1597 = vpop.f32.mrb[0].mxu0
      %1598 = vmatprep.mubr.bf16.mxu0 0
      %1599 = vmatmul.mubr.bf16.gmra.mrb[0].mxu0 %v1483
      %v1600 = vpop.f32.mrb[0].mxu0
      %v1601 = vadd.f32 0.0, %v1600
      %v1602 = vpop.f32.mrb[0].mxu0
      %v1603 = vpop.f32.mrb[0].mxu0
      %v1604 = vadd.f32 0.0, %v1603
      %v1605 = vpop.f32.mrb[0].mxu0
      %1606 = vmatprep.mubr.bf16.mxu0 0
      %1607 = vmatmul.mubr.bf16.gmra.mrb[0].mxu0 %v1485
      %v1608 = vpop.f32.mrb[0].mxu0
      %v1609 = vadd.f32 0.0, %v1608
      %v1610 = vpop.f32.mrb[0].mxu0
      %v1611 = vpop.f32.mrb[0].mxu0
      %v1612 = vadd.f32 0.0, %v1611
      %v1613 = vpop.f32.mrb[0].mxu0
      %1614 = vmatprep.mubr.bf16.mxu0 0
      %1615 = vmatmul.mubr.bf16.gmra.mrb[0].mxu0 %v1487
      %v1616 = vpop.f32.mrb[0].mxu0
      %v1617 = vadd.f32 0.0, %v1616
      %v1618 = vpop.f32.mrb[0].mxu0
      %v1619 = vpop.f32.mrb[0].mxu0
      %v1620 = vadd.f32 0.0, %v1619
      %v1621 = vpop.f32.mrb[0].mxu0
      %1622 = vmatprep.mubr.bf16.mxu0 0
      %1623 = vmatmul.mubr.bf16.gmra.mrb[0].mxu0 %v1489
      %v1624 = vpop.f32.mrb[0].mxu0
      %v1625 = vadd.f32 0.0, %v1624
      %v1626 = vpop.f32.mrb[0].mxu0
      %v1627 = vpop.f32.mrb[0].mxu0
      %v1628 = vadd.f32 0.0, %v1627
      %v1629 = vpop.f32.mrb[0].mxu0
      %1630 = vmatprep.mubr.bf16.mxu0 0
      %1631 = vmatmul.mubr.bf16.gmra.mrb[0].mxu0 %v1491
      %v1632 = vpop.f32.mrb[0].mxu0
      %v1633 = vadd.f32 0.0, %v1632
      %v1634 = vpop.f32.mrb[0].mxu0
      %v1635 = vpop.f32.mrb[0].mxu0
      %v1636 = vadd.f32 0.0, %v1635
      %v1637 = vpop.f32.mrb[0].mxu0
      %1638 = vmatprep.mubr.bf16.mxu0 0
      %1639 = vmatmul.mubr.bf16.gmra.mrb[0].mxu0 %v1493
      %v1640 = vpop.f32.mrb[0].mxu0
      %v1641 = vadd.f32 0.0, %v1640
      %v1642 = vpop.f32.mrb[0].mxu0
      %v1643 = vpop.f32.mrb[0].mxu0
      %v1644 = vadd.f32 0.0, %v1643
      %v1645 = vpop.f32.mrb[0].mxu0
      %1646 = vdwg.mxu0
      %v1647 = vadd.f32 %v1441, %v1585
      %v1648 = vadd.f32 %v1442, %v1588
      %v1649 = vadd.f32 %v1443, %v1593
      %v1650 = vadd.f32 %v1444, %v1596
      %v1651 = vadd.f32 %v1445, %v1601
      %v1652 = vadd.f32 %v1446, %v1604
      %v1653 = vadd.f32 %v1447, %v1609
      %v1654 = vadd.f32 %v1448, %v1612
      %v1655 = vadd.f32 %v1449, %v1617
      %v1656 = vadd.f32 %v1450, %v1620
      %v1657 = vadd.f32 %v1451, %v1625
      %v1658 = vadd.f32 %v1452, %v1628
      %v1659 = vadd.f32 %v1453, %v1633
      %v1660 = vadd.f32 %v1454, %v1636
      %v1661 = vadd.f32 %v1455, %v1641
      %v1662 = vadd.f32 %v1456, %v1644
      %v1663 = vld [vmem:[#allocation2 + $0x8] sm:$0xfc]
      %v1664 = vld [vmem:[#allocation2 + $0x10] sm:$0xff]
      %v1665 = vld [vmem:[#allocation2 + $0x18] sm:$0xff]
      %v1666 = vld [vmem:[#allocation2 + $0x20] sm:$0xff]
      %v1667 = vld [vmem:[#allocation2 + $0x28] sm:$0xff]
      %v1668 = vld [vmem:[#allocation2 + $0x30] sm:$0xff]
      %v1669 = vld [vmem:[#allocation2 + $0x38] sm:$0xff]
      %v1670 = vld [vmem:[#allocation2 + $0x40] sm:$0xff]
      %v1671 = vld [vmem:[#allocation2 + $0x48] sm:$0x3]
      %v1672 = vld [vmem:[%s2 + $0x180] sm:$0xf]
      %v1673 = vld [vmem:[%s2 + $0x184] sm:$0xf]
      %v1674 = vld [vmem:[%s2 + $0x188] sm:$0xf]
      %v1675 = vld [vmem:[%s2 + $0x18c] sm:$0xf]
      %v1676 = vld [vmem:[%s2 + $0x190] sm:$0xf]
      %v1677 = vld [vmem:[%s2 + $0x194] sm:$0xf]
      %v1678 = vld [vmem:[%s2 + $0x198] sm:$0xf]
      %v1679 = vld [vmem:[%s2 + $0x19c] sm:$0xf]
      %v1680 = vld [vmem:[%s2 + $0x1a0] sm:$0xf]
      %v1681 = vld [vmem:[%s2 + $0x1a4] sm:$0xf]
      %v1682 = vld [vmem:[%s2 + $0x1a8] sm:$0xf]
      %v1683 = vld [vmem:[%s2 + $0x1ac] sm:$0xf]
      %v1684 = vld [vmem:[%s2 + $0x1b0] sm:$0xf]
      %v1685 = vld [vmem:[%s2 + $0x1b4] sm:$0xf]
      %v1686 = vld [vmem:[%s2 + $0x1b8] sm:$0xf]
      %v1687 = vld [vmem:[%s2 + $0x1bc] sm:$0xf]
      %vm1697 = vcmask 1045504
      %v1698 = vrot.slane %v1663, 2
      %v1699 = vrot.slane %v1664, 2
      %v1700 = vsel %vm1697, %v1698, %v1699
      %v1701 = vrot.slane %v1665, 2
      %v1702 = vsel %vm1697, %v1699, %v1701
      %v1703 = vrot.slane %v1666, 2
      %v1704 = vsel %vm1697, %v1701, %v1703
      %v1705 = vrot.slane %v1667, 2
      %v1706 = vsel %vm1697, %v1703, %v1705
      %v1707 = vrot.slane %v1668, 2
      %v1708 = vsel %vm1697, %v1705, %v1707
      %v1709 = vrot.slane %v1669, 2
      %v1710 = vsel %vm1697, %v1707, %v1709
      %v1711 = vrot.slane %v1670, 2
      %v1712 = vsel %vm1697, %v1709, %v1711
      %v1713 = vrot.slane %v1671, 2
      %v1714 = vsel %vm1697, %v1711, %v1713
      %v1739 = vunpack.c.l.b16 %v1672
      %v1740 = vunpack.c.l.b16 %v1673
      %v1741 = vunpack.c.l.b16 %v1674
      %v1742 = vunpack.c.l.b16 %v1675
      %v1743 = vunpack.c.l.b16 %v1676
      %v1744 = vunpack.c.l.b16 %v1677
      %v1745 = vunpack.c.l.b16 %v1678
      %v1746 = vunpack.c.l.b16 %v1679
      %v1747 = vunpack.c.l.b16 %v1680
      %v1748 = vunpack.c.l.b16 %v1681
      %v1749 = vunpack.c.l.b16 %v1682
      %v1750 = vunpack.c.l.b16 %v1683
      %v1751 = vunpack.c.l.b16 %v1684
      %v1752 = vunpack.c.l.b16 %v1685
      %v1753 = vunpack.c.l.b16 %v1686
      %v1754 = vunpack.c.l.b16 %v1687
      %v1755 = vpack.c.b16 %v1740, %v1739
      %v1756 = vpack.c.b16 %v1742, %v1741
      %v1757 = vpack.c.b16 %v1744, %v1743
      %v1758 = vpack.c.b16 %v1746, %v1745
      %v1759 = vpack.c.b16 %v1748, %v1747
      %v1760 = vpack.c.b16 %v1750, %v1749
      %v1761 = vpack.c.b16 %v1752, %v1751
      %v1762 = vpack.c.b16 %v1754, %v1753
      %1771 = vmatprep.subr.bf16.mxu0 0
      %1772 = vmatpush1.bf16.msra.mxu0 %v1755
      %1773 = vmatprep.subr.bf16.mxu0 0
      %1774 = vmatpush1.bf16.msra.mxu0 %v1756
      %1775 = vmatprep.subr.bf16.mxu0 0
      %1776 = vmatpush1.bf16.msra.mxu0 %v1757
      %1777 = vmatprep.subr.bf16.mxu0 0
      %1778 = vmatpush1.bf16.msra.mxu0 %v1758
      %1779 = vmatprep.subr.bf16.mxu0 0
      %1780 = vmatpush1.bf16.msra.mxu0 %v1759
      %1781 = vmatprep.subr.bf16.mxu0 0
      %1782 = vmatpush1.bf16.msra.mxu0 %v1760
      %1783 = vmatprep.subr.bf16.mxu0 0
      %1784 = vmatpush1.bf16.msra.mxu0 %v1761
      %1785 = vmatprep.subr.bf16.mxu0 0
      %1786 = vmatpush1.bf16.msra.mxu0 %v1762
      %1787 = vmatprep.subr.bf16.mxu0 0
      %1788 = vmatpush1.bf16.msra.mxu0 0
      %1789 = vmatprep.subr.bf16.mxu0 0
      %1790 = vmatpush1.bf16.msra.mxu0 0
      %1791 = vmatprep.subr.bf16.mxu0 0
      %1792 = vmatpush1.bf16.msra.mxu0 0
      %1793 = vmatprep.subr.bf16.mxu0 0
      %1794 = vmatpush1.bf16.msra.mxu0 0
      %1795 = vmatprep.subr.bf16.mxu0 0
      %1796 = vmatpush1.bf16.msra.mxu0 0
      %1797 = vmatprep.subr.bf16.mxu0 0
      %1798 = vmatpush1.bf16.msra.mxu0 0
      %1799 = vmatprep.subr.bf16.mxu0 0
      %1800 = vmatpush1.bf16.msra.mxu0 0
      %1801 = vmatprep.subr.bf16.mxu0 0
      %1802 = vmatpush1.bf16.msra.mxu0 0
      %1803 = vmatprep.mubr.bf16.mxu0 0
      %1804 = vmatmul.mubr.bf16.gmra.mrb[0].mxu0 %v1700
      %v1805 = vpop.f32.mrb[0].mxu0
      %v1806 = vadd.f32 0.0, %v1805
      %v1807 = vpop.f32.mrb[0].mxu0
      %v1808 = vpop.f32.mrb[0].mxu0
      %v1809 = vadd.f32 0.0, %v1808
      %v1810 = vpop.f32.mrb[0].mxu0
      %1811 = vmatprep.mubr.bf16.mxu0 0
      %1812 = vmatmul.mubr.bf16.gmra.mrb[0].mxu0 %v1702
      %v1813 = vpop.f32.mrb[0].mxu0
      %v1814 = vadd.f32 0.0, %v1813
      %v1815 = vpop.f32.mrb[0].mxu0
      %v1816 = vpop.f32.mrb[0].mxu0
      %v1817 = vadd.f32 0.0, %v1816
      %v1818 = vpop.f32.mrb[0].mxu0
      %1819 = vmatprep.mubr.bf16.mxu0 0
      %1820 = vmatmul.mubr.bf16.gmra.mrb[0].mxu0 %v1704
      %v1821 = vpop.f32.mrb[0].mxu0
      %v1822 = vadd.f32 0.0, %v1821
      %v1823 = vpop.f32.mrb[0].mxu0
      %v1824 = vpop.f32.mrb[0].mxu0
      %v1825 = vadd.f32 0.0, %v1824
      %v1826 = vpop.f32.mrb[0].mxu0
      %1827 = vmatprep.mubr.bf16.mxu0 0
      %1828 = vmatmul.mubr.bf16.gmra.mrb[0].mxu0 %v1706
      %v1829 = vpop.f32.mrb[0].mxu0
      %v1830 = vadd.f32 0.0, %v1829
      %v1831 = vpop.f32.mrb[0].mxu0
      %v1832 = vpop.f32.mrb[0].mxu0
      %v1833 = vadd.f32 0.0, %v1832
      %v1834 = vpop.f32.mrb[0].mxu0
      %1835 = vmatprep.mubr.bf16.mxu0 0
      %1836 = vmatmul.mubr.bf16.gmra.mrb[0].mxu0 %v1708
      %v1837 = vpop.f32.mrb[0].mxu0
      %v1838 = vadd.f32 0.0, %v1837
      %v1839 = vpop.f32.mrb[0].mxu0
      %v1840 = vpop.f32.mrb[0].mxu0
      %v1841 = vadd.f32 0.0, %v1840
      %v1842 = vpop.f32.mrb[0].mxu0
      %1843 = vmatprep.mubr.bf16.mxu0 0
      %1844 = vmatmul.mubr.bf16.gmra.mrb[0].mxu0 %v1710
      %v1845 = vpop.f32.mrb[0].mxu0
      %v1846 = vadd.f32 0.0, %v1845
      %v1847 = vpop.f32.mrb[0].mxu0
      %v1848 = vpop.f32.mrb[0].mxu0
      %v1849 = vadd.f32 0.0, %v1848
      %v1850 = vpop.f32.mrb[0].mxu0
      %1851 = vmatprep.mubr.bf16.mxu0 0
      %1852 = vmatmul.mubr.bf16.gmra.mrb[0].mxu0 %v1712
      %v1853 = vpop.f32.mrb[0].mxu0
      %v1854 = vadd.f32 0.0, %v1853
      %v1855 = vpop.f32.mrb[0].mxu0
      %v1856 = vpop.f32.mrb[0].mxu0
      %v1857 = vadd.f32 0.0, %v1856
      %v1858 = vpop.f32.mrb[0].mxu0
      %1859 = vmatprep.mubr.bf16.mxu0 0
      %1860 = vmatmul.mubr.bf16.gmra.mrb[0].mxu0 %v1714
      %v1861 = vpop.f32.mrb[0].mxu0
      %v1862 = vadd.f32 0.0, %v1861
      %v1863 = vpop.f32.mrb[0].mxu0
      %v1864 = vpop.f32.mrb[0].mxu0
      %v1865 = vadd.f32 0.0, %v1864
      %v1866 = vpop.f32.mrb[0].mxu0
      %1867 = vdwg.mxu0
      %v1868 = vadd.f32 %v1647, %v1806
      %v1869 = vadd.f32 %v1648, %v1809
      %v1870 = vadd.f32 %v1649, %v1814
      %v1871 = vadd.f32 %v1650, %v1817
      %v1872 = vadd.f32 %v1651, %v1822
      %v1873 = vadd.f32 %v1652, %v1825
      %v1874 = vadd.f32 %v1653, %v1830
      %v1875 = vadd.f32 %v1654, %v1833
      %v1876 = vadd.f32 %v1655, %v1838
      %v1877 = vadd.f32 %v1656, %v1841
      %v1878 = vadd.f32 %v1657, %v1846
      %v1879 = vadd.f32 %v1658, %v1849
      %v1880 = vadd.f32 %v1659, %v1854
      %v1881 = vadd.f32 %v1660, %v1857
      %v1882 = vadd.f32 %v1661, %v1862
      %v1883 = vadd.f32 %v1662, %v1865
      %v1884 = vld [vmem:[#allocation2 + $0x48] sm:$0x7]
      %v1885 = vld [vmem:[%s2 + $0x1c0] sm:$0xf]
      %v1886 = vld [vmem:[%s2 + $0x1c4] sm:$0xf]
      %v1887 = vld [vmem:[%s2 + $0x1c8] sm:$0xf]
      %v1888 = vld [vmem:[%s2 + $0x1cc] sm:$0xf]
      %v1889 = vld [vmem:[%s2 + $0x1d0] sm:$0xf]
      %v1890 = vld [vmem:[%s2 + $0x1d4] sm:$0xf]
      %v1891 = vld [vmem:[%s2 + $0x1d8] sm:$0xf]
      %v1892 = vld [vmem:[%s2 + $0x1dc] sm:$0xf]
      %v1893 = vld [vmem:[%s2 + $0x1e0] sm:$0xf]
      %v1894 = vld [vmem:[%s2 + $0x1e4] sm:$0xf]
      %v1895 = vld [vmem:[%s2 + $0x1e8] sm:$0xf]
      %v1896 = vld [vmem:[%s2 + $0x1ec] sm:$0xf]
      %v1897 = vld [vmem:[%s2 + $0x1f0] sm:$0xf]
      %v1898 = vld [vmem:[%s2 + $0x1f4] sm:$0xf]
      %v1899 = vld [vmem:[%s2 + $0x1f8] sm:$0xf]
      %v1900 = vld [vmem:[%s2 + $0x1fc] sm:$0xf]
      %vm1901 = vsmask.f32 5376
      %v1903 = vshrl.u32 %v1663, 16
      %v1905 = vrot.slane %v1903, 2
      %v1906 = vshll.u32 %v1663, 16
      %v1908 = vrot.slane %v1906, 3
      %v1909 = vor.u32 %v1905, %v1908
      %v1911 = vshrl.u32 %v1664, 16
      %v1913 = vrot.slane %v1911, 2
      %v1914 = vshll.u32 %v1664, 16
      %v1916 = vrot.slane %v1914, 3
      %v1917 = vor.u32 %v1913, %v1916
      %v1918 = vsel %vm1901, %v1909, %v1917
      %v1920 = vshrl.u32 %v1665, 16
      %v1922 = vrot.slane %v1920, 2
      %v1923 = vshll.u32 %v1665, 16
      %v1925 = vrot.slane %v1923, 3
      %v1926 = vor.u32 %v1922, %v1925
      %v1927 = vsel %vm1901, %v1917, %v1926
      %v1929 = vshrl.u32 %v1666, 16
      %v1931 = vrot.slane %v1929, 2
      %v1932 = vshll.u32 %v1666, 16
      %v1934 = vrot.slane %v1932, 3
      %v1935 = vor.u32 %v1931, %v1934
      %v1936 = vsel %vm1901, %v1926, %v1935
      %v1938 = vshrl.u32 %v1667, 16
      %v1940 = vrot.slane %v1938, 2
      %v1941 = vshll.u32 %v1667, 16
      %v1943 = vrot.slane %v1941, 3
      %v1944 = vor.u32 %v1940, %v1943
      %v1945 = vsel %vm1901, %v1935, %v1944
      %v1947 = vshrl.u32 %v1668, 16
      %v1949 = vrot.slane %v1947, 2
      %v1950 = vshll.u32 %v1668, 16
      %v1952 = vrot.slane %v1950, 3
      %v1953 = vor.u32 %v1949, %v1952
      %v1954 = vsel %vm1901, %v1944, %v1953
      %v1956 = vshrl.u32 %v1669, 16
      %v1958 = vrot.slane %v1956, 2
      %v1959 = vshll.u32 %v1669, 16
      %v1961 = vrot.slane %v1959, 3
      %v1962 = vor.u32 %v1958, %v1961
      %v1963 = vsel %vm1901, %v1953, %v1962
      %v1965 = vshrl.u32 %v1670, 16
      %v1967 = vrot.slane %v1965, 2
      %v1968 = vshll.u32 %v1670, 16
      %v1970 = vrot.slane %v1968, 3
      %v1971 = vor.u32 %v1967, %v1970
      %v1972 = vsel %vm1901, %v1962, %v1971
      %v1974 = vshrl.u32 %v1884, 16
      %v1976 = vrot.slane %v1974, 2
      %v1977 = vshll.u32 %v1884, 16
      %v1979 = vrot.slane %v1977, 3
      %v1980 = vor.u32 %v1976, %v1979
      %v1981 = vsel %vm1901, %v1971, %v1980
      %v2006 = vunpack.c.l.b16 %v1885
      %v2007 = vunpack.c.l.b16 %v1886
      %v2008 = vunpack.c.l.b16 %v1887
      %v2009 = vunpack.c.l.b16 %v1888
      %v2010 = vunpack.c.l.b16 %v1889
      %v2011 = vunpack.c.l.b16 %v1890
      %v2012 = vunpack.c.l.b16 %v1891
      %v2013 = vunpack.c.l.b16 %v1892
      %v2014 = vunpack.c.l.b16 %v1893
      %v2015 = vunpack.c.l.b16 %v1894
      %v2016 = vunpack.c.l.b16 %v1895
      %v2017 = vunpack.c.l.b16 %v1896
      %v2018 = vunpack.c.l.b16 %v1897
      %v2019 = vunpack.c.l.b16 %v1898
      %v2020 = vunpack.c.l.b16 %v1899
      %v2021 = vunpack.c.l.b16 %v1900
      %v2022 = vpack.c.b16 %v2007, %v2006
      %v2023 = vpack.c.b16 %v2009, %v2008
      %v2024 = vpack.c.b16 %v2011, %v2010
      %v2025 = vpack.c.b16 %v2013, %v2012
      %v2026 = vpack.c.b16 %v2015, %v2014
      %v2027 = vpack.c.b16 %v2017, %v2016
      %v2028 = vpack.c.b16 %v2019, %v2018
      %v2029 = vpack.c.b16 %v2021, %v2020
      %2038 = vmatprep.subr.bf16.mxu0 0
      %2039 = vmatpush1.bf16.msra.mxu0 %v2022
      %2040 = vmatprep.subr.bf16.mxu0 0
      %2041 = vmatpush1.bf16.msra.mxu0 %v2023
      %2042 = vmatprep.subr.bf16.mxu0 0
      %2043 = vmatpush1.bf16.msra.mxu0 %v2024
      %2044 = vmatprep.subr.bf16.mxu0 0
      %2045 = vmatpush1.bf16.msra.mxu0 %v2025
      %2046 = vmatprep.subr.bf16.mxu0 0
      %2047 = vmatpush1.bf16.msra.mxu0 %v2026
      %2048 = vmatprep.subr.bf16.mxu0 0
      %2049 = vmatpush1.bf16.msra.mxu0 %v2027
      %2050 = vmatprep.subr.bf16.mxu0 0
      %2051 = vmatpush1.bf16.msra.mxu0 %v2028
      %2052 = vmatprep.subr.bf16.mxu0 0
      %2053 = vmatpush1.bf16.msra.mxu0 %v2029
      %2054 = vmatprep.subr.bf16.mxu0 0
      %2055 = vmatpush1.bf16.msra.mxu0 0
      %2056 = vmatprep.subr.bf16.mxu0 0
      %2057 = vmatpush1.bf16.msra.mxu0 0
      %2058 = vmatprep.subr.bf16.mxu0 0
      %2059 = vmatpush1.bf16.msra.mxu0 0
      %2060 = vmatprep.subr.bf16.mxu0 0
      %2061 = vmatpush1.bf16.msra.mxu0 0
      %2062 = vmatprep.subr.bf16.mxu0 0
      %2063 = vmatpush1.bf16.msra.mxu0 0
      %2064 = vmatprep.subr.bf16.mxu0 0
      %2065 = vmatpush1.bf16.msra.mxu0 0
      %2066 = vmatprep.subr.bf16.mxu0 0
      %2067 = vmatpush1.bf16.msra.mxu0 0
      %2068 = vmatprep.subr.bf16.mxu0 0
      %2069 = vmatpush1.bf16.msra.mxu0 0
      %2070 = vmatprep.mubr.bf16.mxu0 0
      %2071 = vmatmul.mubr.bf16.gmra.mrb[0].mxu0 %v1918
      %v2072 = vpop.f32.mrb[0].mxu0
      %v2073 = vadd.f32 0.0, %v2072
      %v2074 = vpop.f32.mrb[0].mxu0
      %v2075 = vpop.f32.mrb[0].mxu0
      %v2076 = vadd.f32 0.0, %v2075
      %v2077 = vpop.f32.mrb[0].mxu0
      %2078 = vmatprep.mubr.bf16.mxu0 0
      %2079 = vmatmul.mubr.bf16.gmra.mrb[0].mxu0 %v1927
      %v2080 = vpop.f32.mrb[0].mxu0
      %v2081 = vadd.f32 0.0, %v2080
      %v2082 = vpop.f32.mrb[0].mxu0
      %v2083 = vpop.f32.mrb[0].mxu0
      %v2084 = vadd.f32 0.0, %v2083
      %v2085 = vpop.f32.mrb[0].mxu0
      %2086 = vmatprep.mubr.bf16.mxu0 0
      %2087 = vmatmul.mubr.bf16.gmra.mrb[0].mxu0 %v1936
      %v2088 = vpop.f32.mrb[0].mxu0
      %v2089 = vadd.f32 0.0, %v2088
      %v2090 = vpop.f32.mrb[0].mxu0
      %v2091 = vpop.f32.mrb[0].mxu0
      %v2092 = vadd.f32 0.0, %v2091
      %v2093 = vpop.f32.mrb[0].mxu0
      %2094 = vmatprep.mubr.bf16.mxu0 0
      %2095 = vmatmul.mubr.bf16.gmra.mrb[0].mxu0 %v1945
      %v2096 = vpop.f32.mrb[0].mxu0
      %v2097 = vadd.f32 0.0, %v2096
      %v2098 = vpop.f32.mrb[0].mxu0
      %v2099 = vpop.f32.mrb[0].mxu0
      %v2100 = vadd.f32 0.0, %v2099
      %v2101 = vpop.f32.mrb[0].mxu0
      %2102 = vmatprep.mubr.bf16.mxu0 0
      %2103 = vmatmul.mubr.bf16.gmra.mrb[0].mxu0 %v1954
      %v2104 = vpop.f32.mrb[0].mxu0
      %v2105 = vadd.f32 0.0, %v2104
      %v2106 = vpop.f32.mrb[0].mxu0
      %v2107 = vpop.f32.mrb[0].mxu0
      %v2108 = vadd.f32 0.0, %v2107
      %v2109 = vpop.f32.mrb[0].mxu0
      %2110 = vmatprep.mubr.bf16.mxu0 0
      %2111 = vmatmul.mubr.bf16.gmra.mrb[0].mxu0 %v1963
      %v2112 = vpop.f32.mrb[0].mxu0
      %v2113 = vadd.f32 0.0, %v2112
      %v2114 = vpop.f32.mrb[0].mxu0
      %v2115 = vpop.f32.mrb[0].mxu0
      %v2116 = vadd.f32 0.0, %v2115
      %v2117 = vpop.f32.mrb[0].mxu0
      %2118 = vmatprep.mubr.bf16.mxu0 0
      %2119 = vmatmul.mubr.bf16.gmra.mrb[0].mxu0 %v1972
      %v2120 = vpop.f32.mrb[0].mxu0
      %v2121 = vadd.f32 0.0, %v2120
      %v2122 = vpop.f32.mrb[0].mxu0
      %v2123 = vpop.f32.mrb[0].mxu0
      %v2124 = vadd.f32 0.0, %v2123
      %v2125 = vpop.f32.mrb[0].mxu0
      %2126 = vmatprep.mubr.bf16.mxu0 0
      %2127 = vmatmul.mubr.bf16.gmra.mrb[0].mxu0 %v1981
      %v2128 = vpop.f32.mrb[0].mxu0
      %v2129 = vadd.f32 0.0, %v2128
      %v2130 = vpop.f32.mrb[0].mxu0
      %v2131 = vpop.f32.mrb[0].mxu0
      %v2132 = vadd.f32 0.0, %v2131
      %v2133 = vpop.f32.mrb[0].mxu0
      %2134 = vdwg.mxu0
      %v2135 = vadd.f32 %v1868, %v2073
      %v2136 = vadd.f32 %v1869, %v2076
      %v2137 = vadd.f32 %v1870, %v2081
      %v2138 = vadd.f32 %v1871, %v2084
      %v2139 = vadd.f32 %v1872, %v2089
      %v2140 = vadd.f32 %v1873, %v2092
      %v2141 = vadd.f32 %v1874, %v2097
      %v2142 = vadd.f32 %v1875, %v2100
      %v2143 = vadd.f32 %v1876, %v2105
      %v2144 = vadd.f32 %v1877, %v2108
      %v2145 = vadd.f32 %v1878, %v2113
      %v2146 = vadd.f32 %v1879, %v2116
      %v2147 = vadd.f32 %v1880, %v2121
      %v2148 = vadd.f32 %v1881, %v2124
      %v2149 = vadd.f32 %v1882, %v2129
      %v2150 = vadd.f32 %v1883, %v2132
      %v2151 = vld [vmem:[#allocation2 + $0x8] sm:$0xf8]
      %v2152 = vld [vmem:[%s2 + $0x200] sm:$0xf]
      %v2153 = vld [vmem:[%s2 + $0x204] sm:$0xf]
      %v2154 = vld [vmem:[%s2 + $0x208] sm:$0xf]
      %v2155 = vld [vmem:[%s2 + $0x20c] sm:$0xf]
      %v2156 = vld [vmem:[%s2 + $0x210] sm:$0xf]
      %v2157 = vld [vmem:[%s2 + $0x214] sm:$0xf]
      %v2158 = vld [vmem:[%s2 + $0x218] sm:$0xf]
      %v2159 = vld [vmem:[%s2 + $0x21c] sm:$0xf]
      %v2160 = vld [vmem:[%s2 + $0x220] sm:$0xf]
      %v2161 = vld [vmem:[%s2 + $0x224] sm:$0xf]
      %v2162 = vld [vmem:[%s2 + $0x228] sm:$0xf]
      %v2163 = vld [vmem:[%s2 + $0x22c] sm:$0xf]
      %v2164 = vld [vmem:[%s2 + $0x230] sm:$0xf]
      %v2165 = vld [vmem:[%s2 + $0x234] sm:$0xf]
      %v2166 = vld [vmem:[%s2 + $0x238] sm:$0xf]
      %v2167 = vld [vmem:[%s2 + $0x23c] sm:$0xf]
      %vm2170 = vcmask 1044480
      %v2171 = vrot.slane %v2151, 3
      %v2172 = vrot.slane %v1664, 3
      %v2173 = vsel %vm2170, %v2171, %v2172
      %v2174 = vrot.slane %v1665, 3
      %v2175 = vsel %vm2170, %v2172, %v2174
      %v2176 = vrot.slane %v1666, 3
      %v2177 = vsel %vm2170, %v2174, %v2176
      %v2178 = vrot.slane %v1667, 3
      %v2179 = vsel %vm2170, %v2176, %v2178
      %v2180 = vrot.slane %v1668, 3
      %v2181 = vsel %vm2170, %v2178, %v2180
      %v2182 = vrot.slane %v1669, 3
      %v2183 = vsel %vm2170, %v2180, %v2182
      %v2184 = vrot.slane %v1670, 3
      %v2185 = vsel %vm2170, %v2182, %v2184
      %v2186 = vrot.slane %v1884, 3
      %v2187 = vsel %vm2170, %v2184, %v2186
      %v2212 = vunpack.c.l.b16 %v2152
      %v2213 = vunpack.c.l.b16 %v2153
      %v2214 = vunpack.c.l.b16 %v2154
      %v2215 = vunpack.c.l.b16 %v2155
      %v2216 = vunpack.c.l.b16 %v2156
      %v2217 = vunpack.c.l.b16 %v2157
      %v2218 = vunpack.c.l.b16 %v2158
      %v2219 = vunpack.c.l.b16 %v2159
      %v2220 = vunpack.c.l.b16 %v2160
      %v2221 = vunpack.c.l.b16 %v2161
      %v2222 = vunpack.c.l.b16 %v2162
      %v2223 = vunpack.c.l.b16 %v2163
      %v2224 = vunpack.c.l.b16 %v2164
      %v2225 = vunpack.c.l.b16 %v2165
      %v2226 = vunpack.c.l.b16 %v2166
      %v2227 = vunpack.c.l.b16 %v2167
      %v2228 = vpack.c.b16 %v2213, %v2212
      %v2229 = vpack.c.b16 %v2215, %v2214
      %v2230 = vpack.c.b16 %v2217, %v2216
      %v2231 = vpack.c.b16 %v2219, %v2218
      %v2232 = vpack.c.b16 %v2221, %v2220
      %v2233 = vpack.c.b16 %v2223, %v2222
      %v2234 = vpack.c.b16 %v2225, %v2224
      %v2235 = vpack.c.b16 %v2227, %v2226
      %2244 = vmatprep.subr.bf16.mxu0 0
      %2245 = vmatpush1.bf16.msra.mxu0 %v2228
      %2246 = vmatprep.subr.bf16.mxu0 0
      %2247 = vmatpush1.bf16.msra.mxu0 %v2229
      %2248 = vmatprep.subr.bf16.mxu0 0
      %2249 = vmatpush1.bf16.msra.mxu0 %v2230
      %2250 = vmatprep.subr.bf16.mxu0 0
      %2251 = vmatpush1.bf16.msra.mxu0 %v2231
      %2252 = vmatprep.subr.bf16.mxu0 0
      %2253 = vmatpush1.bf16.msra.mxu0 %v2232
      %2254 = vmatprep.subr.bf16.mxu0 0
      %2255 = vmatpush1.bf16.msra.mxu0 %v2233
      %2256 = vmatprep.subr.bf16.mxu0 0
      %2257 = vmatpush1.bf16.msra.mxu0 %v2234
      %2258 = vmatprep.subr.bf16.mxu0 0
      %2259 = vmatpush1.bf16.msra.mxu0 %v2235
      %2260 = vmatprep.subr.bf16.mxu0 0
      %2261 = vmatpush1.bf16.msra.mxu0 0
      %2262 = vmatprep.subr.bf16.mxu0 0
      %2263 = vmatpush1.bf16.msra.mxu0 0
      %2264 = vmatprep.subr.bf16.mxu0 0
      %2265 = vmatpush1.bf16.msra.mxu0 0
      %2266 = vmatprep.subr.bf16.mxu0 0
      %2267 = vmatpush1.bf16.msra.mxu0 0
      %2268 = vmatprep.subr.bf16.mxu0 0
      %2269 = vmatpush1.bf16.msra.mxu0 0
      %2270 = vmatprep.subr.bf16.mxu0 0
      %2271 = vmatpush1.bf16.msra.mxu0 0
      %2272 = vmatprep.subr.bf16.mxu0 0
      %2273 = vmatpush1.bf16.msra.mxu0 0
      %2274 = vmatprep.subr.bf16.mxu0 0
      %2275 = vmatpush1.bf16.msra.mxu0 0
      %2276 = vmatprep.mubr.bf16.mxu0 0
      %2277 = vmatmul.mubr.bf16.gmra.mrb[0].mxu0 %v2173
      %v2278 = vpop.f32.mrb[0].mxu0
      %v2279 = vadd.f32 0.0, %v2278
      %v2280 = vpop.f32.mrb[0].mxu0
      %v2281 = vpop.f32.mrb[0].mxu0
      %v2282 = vadd.f32 0.0, %v2281
      %v2283 = vpop.f32.mrb[0].mxu0
      %2284 = vmatprep.mubr.bf16.mxu0 0
      %2285 = vmatmul.mubr.bf16.gmra.mrb[0].mxu0 %v2175
      %v2286 = vpop.f32.mrb[0].mxu0
      %v2287 = vadd.f32 0.0, %v2286
      %v2288 = vpop.f32.mrb[0].mxu0
      %v2289 = vpop.f32.mrb[0].mxu0
      %v2290 = vadd.f32 0.0, %v2289
      %v2291 = vpop.f32.mrb[0].mxu0
      %2292 = vmatprep.mubr.bf16.mxu0 0
      %2293 = vmatmul.mubr.bf16.gmra.mrb[0].mxu0 %v2177
      %v2294 = vpop.f32.mrb[0].mxu0
      %v2295 = vadd.f32 0.0, %v2294
      %v2296 = vpop.f32.mrb[0].mxu0
      %v2297 = vpop.f32.mrb[0].mxu0
      %v2298 = vadd.f32 0.0, %v2297
      %v2299 = vpop.f32.mrb[0].mxu0
      %2300 = vmatprep.mubr.bf16.mxu0 0
      %2301 = vmatmul.mubr.bf16.gmra.mrb[0].mxu0 %v2179
      %v2302 = vpop.f32.mrb[0].mxu0
      %v2303 = vadd.f32 0.0, %v2302
      %v2304 = vpop.f32.mrb[0].mxu0
      %v2305 = vpop.f32.mrb[0].mxu0
      %v2306 = vadd.f32 0.0, %v2305
      %v2307 = vpop.f32.mrb[0].mxu0
      %2308 = vmatprep.mubr.bf16.mxu0 0
      %2309 = vmatmul.mubr.bf16.gmra.mrb[0].mxu0 %v2181
      %v2310 = vpop.f32.mrb[0].mxu0
      %v2311 = vadd.f32 0.0, %v2310
      %v2312 = vpop.f32.mrb[0].mxu0
      %v2313 = vpop.f32.mrb[0].mxu0
      %v2314 = vadd.f32 0.0, %v2313
      %v2315 = vpop.f32.mrb[0].mxu0
      %2316 = vmatprep.mubr.bf16.mxu0 0
      %2317 = vmatmul.mubr.bf16.gmra.mrb[0].mxu0 %v2183
      %v2318 = vpop.f32.mrb[0].mxu0
      %v2319 = vadd.f32 0.0, %v2318
      %v2320 = vpop.f32.mrb[0].mxu0
      %v2321 = vpop.f32.mrb[0].mxu0
      %v2322 = vadd.f32 0.0, %v2321
      %v2323 = vpop.f32.mrb[0].mxu0
      %2324 = vmatprep.mubr.bf16.mxu0 0
      %2325 = vmatmul.mubr.bf16.gmra.mrb[0].mxu0 %v2185
      %v2326 = vpop.f32.mrb[0].mxu0
      %v2327 = vadd.f32 0.0, %v2326
      %v2328 = vpop.f32.mrb[0].mxu0
      %v2329 = vpop.f32.mrb[0].mxu0
      %v2330 = vadd.f32 0.0, %v2329
      %v2331 = vpop.f32.mrb[0].mxu0
      %2332 = vmatprep.mubr.bf16.mxu0 0
      %2333 = vmatmul.mubr.bf16.gmra.mrb[0].mxu0 %v2187
      %v2334 = vpop.f32.mrb[0].mxu0
      %v2335 = vadd.f32 0.0, %v2334
      %v2336 = vpop.f32.mrb[0].mxu0
      %v2337 = vpop.f32.mrb[0].mxu0
      %v2338 = vadd.f32 0.0, %v2337
      %v2339 = vpop.f32.mrb[0].mxu0
      %2340 = vdwg.mxu0
      %v2341 = vadd.f32 %v2135, %v2279
      %v2342 = vadd.f32 %v2136, %v2282
      %v2343 = vadd.f32 %v2137, %v2287
      %v2344 = vadd.f32 %v2138, %v2290
      %v2345 = vadd.f32 %v2139, %v2295
      %v2346 = vadd.f32 %v2140, %v2298
      %v2347 = vadd.f32 %v2141, %v2303
      %v2348 = vadd.f32 %v2142, %v2306
      %v2349 = vadd.f32 %v2143, %v2311
      %v2350 = vadd.f32 %v2144, %v2314
      %v2351 = vadd.f32 %v2145, %v2319
      %v2352 = vadd.f32 %v2146, %v2322
      %v2353 = vadd.f32 %v2147, %v2327
      %v2354 = vadd.f32 %v2148, %v2330
      %v2355 = vadd.f32 %v2149, %v2335
      %v2356 = vadd.f32 %v2150, %v2338
      %v2357 = vld [vmem:[%s3] sm:$0x1]
      %v2359 = vlaneseq
      %v2360 = vshrl.u32 %v2359, 7
      %v2361 = vsub.s32 0, %v2360
      %v2362 = vrot.slane %v2357, %v2361
      %v2364 = vadd.f32 %v2341, %v2362
      %v2365 = vadd.f32 %v2342, %v2362
      %v2366 = vadd.f32 %v2343, %v2362
      %v2367 = vadd.f32 %v2344, %v2362
      %v2368 = vadd.f32 %v2345, %v2362
      %v2369 = vadd.f32 %v2346, %v2362
      %v2370 = vadd.f32 %v2347, %v2362
      %v2371 = vadd.f32 %v2348, %v2362
      %v2372 = vadd.f32 %v2349, %v2362
      %v2373 = vadd.f32 %v2350, %v2362
      %v2374 = vadd.f32 %v2351, %v2362
      %v2375 = vadd.f32 %v2352, %v2362
      %v2376 = vadd.f32 %v2353, %v2362
      %v2377 = vadd.f32 %v2354, %v2362
      %v2378 = vadd.f32 %v2355, %v2362
      %v2379 = vadd.f32 %v2356, %v2362
      %v2380 = vld [vmem:[%s298] sm:$0xff]
      %v2381 = vld [vmem:[%s298 + $0x8] sm:$0xff]
      %v2382 = vld [vmem:[%s298 + $0x10] sm:$0xff]
      %v2383 = vld [vmem:[%s298 + $0x18] sm:$0xff]
      %v2384 = vld [vmem:[%s298 + $0x20] sm:$0xff]
      %v2385 = vld [vmem:[%s298 + $0x28] sm:$0xff]
      %v2386 = vld [vmem:[%s298 + $0x30] sm:$0xff]
      %v2387 = vld [vmem:[%s298 + $0x38] sm:$0xff]
      %v2388 = vld [vmem:[%s298 + $0x40] sm:$0xff]
      %v2389 = vld [vmem:[%s298 + $0x48] sm:$0xff]
      %v2390 = vld [vmem:[%s298 + $0x50] sm:$0xff]
      %v2391 = vld [vmem:[%s298 + $0x58] sm:$0xff]
      %v2392 = vld [vmem:[%s298 + $0x60] sm:$0xff]
      %v2393 = vld [vmem:[%s298 + $0x68] sm:$0xff]
      %v2394 = vld [vmem:[%s298 + $0x70] sm:$0xff]
      %v2395 = vld [vmem:[%s298 + $0x78] sm:$0xff]
      %2397 = vset.pattern.permute.xlu0 0
      %2398 = vperm.xlu0 %2397, %v2380
      %v2399 = vpop.permute.xlu0 %2398
      %2402 = vset.pattern.permute.xlu0 0
      %2403 = vperm.xlu0 %2402, %v2381
      %v2404 = vpop.permute.xlu0 %2403
      %2407 = vset.pattern.permute.xlu0 0
      %2408 = vperm.xlu0 %2407, %v2382
      %v2409 = vpop.permute.xlu0 %2408
      %2412 = vset.pattern.permute.xlu0 0
      %2413 = vperm.xlu0 %2412, %v2383
      %v2414 = vpop.permute.xlu0 %2413
      %2417 = vset.pattern.permute.xlu0 0
      %2418 = vperm.xlu0 %2417, %v2384
      %v2419 = vpop.permute.xlu0 %2418
      %2422 = vset.pattern.permute.xlu0 0
      %2423 = vperm.xlu0 %2422, %v2385
      %v2424 = vpop.permute.xlu0 %2423
      %2427 = vset.pattern.permute.xlu0 0
      %2428 = vperm.xlu0 %2427, %v2386
      %v2429 = vpop.permute.xlu0 %2428
      %2432 = vset.pattern.permute.xlu0 0
      %2433 = vperm.xlu0 %2432, %v2387
      %v2434 = vpop.permute.xlu0 %2433
      %2437 = vset.pattern.permute.xlu0 0
      %2438 = vperm.xlu0 %2437, %v2388
      %v2439 = vpop.permute.xlu0 %2438
      %2442 = vset.pattern.permute.xlu0 0
      %2443 = vperm.xlu0 %2442, %v2389
      %v2444 = vpop.permute.xlu0 %2443
      %2447 = vset.pattern.permute.xlu0 0
      %2448 = vperm.xlu0 %2447, %v2390
      %v2449 = vpop.permute.xlu0 %2448
      %2452 = vset.pattern.permute.xlu0 0
      %2453 = vperm.xlu0 %2452, %v2391
      %v2454 = vpop.permute.xlu0 %2453
      %2457 = vset.pattern.permute.xlu0 0
      %2458 = vperm.xlu0 %2457, %v2392
      %v2459 = vpop.permute.xlu0 %2458
      %2462 = vset.pattern.permute.xlu0 0
      %2463 = vperm.xlu0 %2462, %v2393
      %v2464 = vpop.permute.xlu0 %2463
      %2467 = vset.pattern.permute.xlu0 0
      %2468 = vperm.xlu0 %2467, %v2394
      %v2469 = vpop.permute.xlu0 %2468
      %2472 = vset.pattern.permute.xlu0 0
      %2473 = vperm.xlu0 %2472, %v2395
      %v2474 = vpop.permute.xlu0 %2473
      %v2476 = vmul.f32 %v2364, %v2399
      %v2477 = vmul.f32 %v2365, %v2404
      %v2478 = vmul.f32 %v2366, %v2409
      %v2479 = vmul.f32 %v2367, %v2414
      %v2480 = vmul.f32 %v2368, %v2419
      %v2481 = vmul.f32 %v2369, %v2424
      %v2482 = vmul.f32 %v2370, %v2429
      %v2483 = vmul.f32 %v2371, %v2434
      %v2484 = vmul.f32 %v2372, %v2439
      %v2485 = vmul.f32 %v2373, %v2444
      %v2486 = vmul.f32 %v2374, %v2449
      %v2487 = vmul.f32 %v2375, %v2454
      %v2488 = vmul.f32 %v2376, %v2459
      %v2489 = vmul.f32 %v2377, %v2464
      %v2490 = vmul.f32 %v2378, %v2469
      %v2491 = vmul.f32 %v2379, %v2474
      %v2492 = vpack.c.bf16 %v2477, %v2476
      %v2493 = vpack.c.bf16 %v2479, %v2478
      %v2494 = vpack.c.bf16 %v2481, %v2480
      %v2495 = vpack.c.bf16 %v2483, %v2482
      %v2496 = vpack.c.bf16 %v2485, %v2484
      %v2497 = vpack.c.bf16 %v2487, %v2486
      %v2498 = vpack.c.bf16 %v2489, %v2488
      %v2499 = vpack.c.bf16 %v2491, %v2490
      %v2508 = vunpack.c.l.b16 %v2492
      %v2509 = vunpack.c.h.b16 %v2492
      %v2510 = vunpack.c.l.b16 %v2493
      %v2511 = vunpack.c.h.b16 %v2493
      %v2512 = vunpack.c.l.b16 %v2494
      %v2513 = vunpack.c.h.b16 %v2494
      %v2514 = vunpack.c.l.b16 %v2495
      %v2515 = vunpack.c.h.b16 %v2495
      %v2516 = vunpack.c.l.b16 %v2496
      %v2517 = vunpack.c.h.b16 %v2496
      %v2518 = vunpack.c.l.b16 %v2497
      %v2519 = vunpack.c.h.b16 %v2497
      %v2520 = vunpack.c.l.b16 %v2498
      %v2521 = vunpack.c.h.b16 %v2498
      %v2522 = vunpack.c.l.b16 %v2499
      %v2523 = vunpack.c.h.b16 %v2499
      %v2524 = vpack.c.b16 %v2508, %v2508
      %v2525 = vpack.c.b16 %v2509, %v2509
      %v2526 = vpack.c.b16 %v2510, %v2510
      %v2527 = vpack.c.b16 %v2511, %v2511
      %v2528 = vpack.c.b16 %v2512, %v2512
      %v2529 = vpack.c.b16 %v2513, %v2513
      %v2530 = vpack.c.b16 %v2514, %v2514
      %v2531 = vpack.c.b16 %v2515, %v2515
      %v2532 = vpack.c.b16 %v2516, %v2516
      %v2533 = vpack.c.b16 %v2517, %v2517
      %v2534 = vpack.c.b16 %v2518, %v2518
      %v2535 = vpack.c.b16 %v2519, %v2519
      %v2536 = vpack.c.b16 %v2520, %v2520
      %v2537 = vpack.c.b16 %v2521, %v2521
      %v2538 = vpack.c.b16 %v2522, %v2522
      %v2539 = vpack.c.b16 %v2523, %v2523
      %2556 = vst [vmem:[%s304] sm:$0xf] %v2524
      %2557 = vst [vmem:[%s304 + $0x4] sm:$0xf] %v2525
      %2558 = vst [vmem:[%s304 + $0x8] sm:$0xf] %v2526
      %2559 = vst [vmem:[%s304 + $0xc] sm:$0xf] %v2527
      %2560 = vst [vmem:[%s304 + $0x10] sm:$0xf] %v2528
      %2561 = vst [vmem:[%s304 + $0x14] sm:$0xf] %v2529
      %2562 = vst [vmem:[%s304 + $0x18] sm:$0xf] %v2530
      %2563 = vst [vmem:[%s304 + $0x1c] sm:$0xf] %v2531
      %2564 = vst [vmem:[%s304 + $0x20] sm:$0xf] %v2532
      %2565 = vst [vmem:[%s304 + $0x24] sm:$0xf] %v2533
      %2566 = vst [vmem:[%s304 + $0x28] sm:$0xf] %v2534
      %2567 = vst [vmem:[%s304 + $0x2c] sm:$0xf] %v2535
      %2568 = vst [vmem:[%s304 + $0x30] sm:$0xf] %v2536
      %2569 = vst [vmem:[%s304 + $0x34] sm:$0xf] %v2537
      %2570 = vst [vmem:[%s304 + $0x38] sm:$0xf] %v2538
      %2571 = vst [vmem:[%s304 + $0x3c] sm:$0xf] %v2539
      %s2572 = smul.u32 16, %s16
      %p2573 = scmp.lt.s32.totalorder %s2572, 31
      %s2574 = scalar_select %p2573, %s2572, 31
      %s2575 = smul.addr %s2574, 4
      %s2576 = scalar_lea.vmem %s5, %s2575
      // Predicated region
      $region41: #{resnet_basicblock_forward.4} parent=39 // pred_check
        %p2577 = pneg %p158
      $region42: #{resnet_basicblock_forward.4} parent=39 // pred_check_branch
        %2579 = sbr.rel (%p2577) target = $region44
      $region43: #{resnet_basicblock_forward.4} parent=39 // pred_region
        %s2580 = smul.u32 16, %s16
      $region44: #{resnet_basicblock_forward.4} parent=39 // pred_fallthru
        _
    $region40: #{resnet_basicblock_forward.4} parent=5 // pred_fallthru
      _
    %p2581 = scmp.le.s32.totalorder 2, %s11
    // Predicated region
    $region45: #{resnet_basicblock_forward.4} parent=5 // pred_check
      %p2582 = pneg %p2581
    $region46: #{resnet_basicblock_forward.4} parent=5 // pred_check_branch
      %2584 = sbr.rel (%p2582) target = $region48
    $region47: #{resnet_basicblock_forward.4} parent=5 // pred_region
      %s2585 = ssub.s32 %s11, 2
      // Predicated region
      $region49: #{resnet_basicblock_forward.4} parent=47 // pred_check
        %p2586 = pneg %p164
      $region50: #{resnet_basicblock_forward.4} parent=47 // pred_check_branch
        %2588 = sbr.rel (%p2586) target = $region52
      $region51: #{resnet_basicblock_forward.4} parent=47 // pred_region
        %s2589 = smul.u32 16, %s17
        %p2590 = scmp.lt.s32.totalorder %s2589, 31
        %s2591 = scalar_select %p2590, %s2589, 31
        %s2592 = smul.addr %s2591, 4
        %s2593 = scalar_lea.vmem %s5, %s2592
      $region52: #{resnet_basicblock_forward.4} parent=47 // pred_fallthru
        _
    $region48: #{resnet_basicblock_forward.4} parent=5 // pred_fallthru
      _
  $region6: #{resnet_basicblock_forward.4} parent=0 // loop_footer
    %s15 = sadd.s32 1, %s11
  $region7: #{resnet_basicblock_forward.4} parent=0 // loop_footer_branch
    %10 = sbr.rel target = $region3
  $region8: #{resnet_basicblock_forward.4} parent=0 // loop_exit
    _

</llo_original>
